<compile_context>
chip_gen: v5e
topology: v5e:2x2
jax: 0.10.0
libtpu: 0.0.40
codegen_flags: <defaults>
</compile_context>

<pallas_src>
import math
from collections import namedtuple

import jax
import jax.numpy as jnp
from jax import lax
from jax.experimental import pallas as pl
from jax.experimental.pallas import tpu as pltpu


# ----------------------------------------------------------------------------
# Shared LayerNorm (pure jnp: used both inside Pallas kernels and in XLA).
# ----------------------------------------------------------------------------
def layer_norm(x, g, b, eps=1e-12):
    mu = jnp.mean(x, axis=-1, keepdims=True)
    var = jnp.mean((x - mu) ** 2, axis=-1, keepdims=True)
    return (x - mu) * lax.rsqrt(var + eps) * g + b


# ----------------------------------------------------------------------------
# Fused encoder: ONE pallas_call, grid over layers, activation carried in the
# resident output block.
# ----------------------------------------------------------------------------
def _make_encoder_kernel(B, S, nh, hd):
    scale = 1.0 / math.sqrt(hd)

    def kernel(x0_ref, mask_ref, wq_ref, wk_ref, wv_ref, bq_ref, bk_ref, bv_ref,
               wo_ref, bo_ref, ln1g_ref, ln1b_ref, w1_ref, b1_ref, w2_ref, b2_ref,
               ln2g_ref, ln2b_ref, o_ref):
        l = pl.program_id(0)

        # Load the embeddings into the carry on the first layer.  o_ref's block
        # index ignores the layer axis, so it stays resident in VMEM and acts
        # as the running hidden state across grid steps (no scratch needed).
        @pl.when(l == 0)
        def _():
            o_ref[...] = x0_ref[...]

        x = o_ref[...]                                            # (B*S, H) f32

        # ---- multi-head self-attention ------------------------------------
        # Per-head weight slices come from ref leading dims; per-batch slices
        # are sublane-aligned 2-D slices -> no lane slicing / 4-D transposes.
        attn = jnp.zeros_like(x)
        for h in range(nh):
            q = jnp.dot(x, wq_ref[0, h], preferred_element_type=jnp.float32) + bq_ref[0, h]
            k = jnp.dot(x, wk_ref[0, h], preferred_element_type=jnp.float32) + bk_ref[0, h]
            v = jnp.dot(x, wv_ref[0, h], preferred_element_type=jnp.float32) + bv_ref[0, h]
            ctx_rows = []
            for b in range(B):
                qb = q[b * S:(b + 1) * S, :]                      # (S, hd)
                kb = k[b * S:(b + 1) * S, :]
                vb = v[b * S:(b + 1) * S, :]
                s = lax.dot_general(qb, kb, (((1,), (1,)), ((), ())),
                                    preferred_element_type=jnp.float32) * scale
                s = s + mask_ref[b]                               # (S,S) + (1,S)
                s = s - jnp.max(s, axis=-1, keepdims=True)
                p = jnp.exp(s)
                p = p / jnp.sum(p, axis=-1, keepdims=True)
                ctx_rows.append(jnp.dot(p, vb, preferred_element_type=jnp.float32))
            ctx = jnp.concatenate(ctx_rows, axis=0)               # (B*S, hd)
            # Per-head output projection summed in place == ctx_all @ Wo.
            attn = attn + jnp.dot(ctx, wo_ref[0, h], preferred_element_type=jnp.float32)
        attn = attn + bo_ref[0]

        x = layer_norm(x + attn, ln1g_ref[0], ln1b_ref[0])

        # ---- FFN with fused GELU -------------------------------------------
        hmid = jnp.dot(x, w1_ref[0], preferred_element_type=jnp.float32) + b1_ref[0]
        hmid = jax.nn.gelu(hmid, approximate=True)
        ffn = jnp.dot(hmid, w2_ref[0], preferred_element_type=jnp.float32) + b2_ref[0]

        o_ref[...] = layer_norm(x + ffn, ln2g_ref[0], ln2b_ref[0])

    return kernel


def _layer_spec(arr):
    """BlockSpec selecting layer `l` along the leading axis (full-extent tail)."""
    tail = tuple(arr.shape[1:])
    if arr.ndim == 3:
        return pl.BlockSpec((1,) + tail, lambda l: (l, 0, 0))
    assert arr.ndim == 4
    return pl.BlockSpec((1,) + tail, lambda l: (l, 0, 0, 0))


def bert_encode(p, input_ids, attention_mask, token_type_ids):
    """Returns last_hidden_state flattened to (B*S, H)."""
    B, S = input_ids.shape
    H = p["word_emb"].shape[1]
    nh = p["wq"].shape[1]
    hd = H // nh
    num_layers = p["wq"].shape[0]

    # Embeddings (gathers) + embedding LayerNorm stay in XLA.
    x = (p["word_emb"][input_ids]
         + p["pos_emb"][:S][None, :, :]
         + p["type_emb"][token_type_ids])
    x = layer_norm(x, p["emb_ln_g"], p["emb_ln_b"]).reshape(B * S, H).astype(jnp.float32)
    mask_bias = ((1.0 - attention_mask.astype(jnp.float32)) * -1e9).reshape(B, 1, S)

    weights = [p["wq"], p["wk"], p["wv"], p["bq"], p["bk"], p["bv"],
               p["wo"], p["bo"], p["ln1_g"], p["ln1_b"],
               p["w1"], p["b1"], p["w2"], p["b2"], p["ln2_g"], p["ln2_b"]]

    in_specs = ([pl.BlockSpec((B * S, H), lambda l: (0, 0)),
                 pl.BlockSpec((B, 1, S), lambda l: (0, 0, 0))]
                + [_layer_spec(w) for w in weights])

    last_hidden = pl.pallas_call(
        _make_encoder_kernel(B, S, nh, hd),
        grid=(num_layers,),
        in_specs=in_specs,
        out_specs=pl.BlockSpec((B * S, H), lambda l: (0, 0)),
        out_shape=jax.ShapeDtypeStruct((B * S, H), jnp.float32),
        compiler_params=pltpu.CompilerParams(
            dimension_semantics=("arbitrary",),   # layers are sequential
        ),
    )(x, mask_bias, *weights)
    return last_hidden


# ----------------------------------------------------------------------------
# Fused heads: pooler(tanh) + gate + refer + span logits in ONE pallas_call.
# features = concat(pooled, states, informs) is realized as a sum of three
# matmuls over the pre-split fused weight (no in-kernel concat).
# ----------------------------------------------------------------------------
def _heads_kernel(cls_ref, lh_ref, st_ref, inf_ref, wp_ref, bp_ref,
                  grwp_ref, grws_ref, grwi_ref, grb_ref, spw_ref, spb_ref,
                  gr_ref, sp_ref):
    pooled = jnp.tanh(
        jnp.dot(cls_ref[...], wp_ref[...], preferred_element_type=jnp.float32) + bp_ref[...])
    gr_ref[...] = (jnp.dot(pooled, grwp_ref[...], preferred_element_type=jnp.float32)
                   + jnp.dot(st_ref[...], grws_ref[...], preferred_element_type=jnp.float32)
                   + jnp.dot(inf_ref[...], grwi_ref[...], preferred_element_type=jnp.float32)
                   + grb_ref[...])
    sp_ref[...] = (jnp.dot(lh_ref[...], spw_ref[...], preferred_element_type=jnp.float32)
                   + spb_ref[...])


# ----------------------------------------------------------------------------
# Fused cross-entropy: all requested loss groups in ONE pallas_call.
# Rows are grouped [gate | span_start | span_end | ref], each group has the
# same row count (B * num_slots); class dim is padded to a common width with
# -1e30.  Targets < 0 are ignored; mean over valid rows (0/0 -> NaN matches
# torch mean semantics when every target is ignored).
# ----------------------------------------------------------------------------
def _make_ce_kernel(num_groups, rows_per_group):
    G, R = num_groups, rows_per_group

    def kernel(logits_ref, tgt_ref, out_ref):
        logits = logits_ref[...]                                   # (G*R, C) f32
        t = tgt_ref[...]                                           # (G*R, 1) i32
        GR, C = logits.shape
        cls_idx = lax.broadcasted_iota(jnp.int32, (GR, C), 1)
        m = jnp.max(logits, axis=-1, keepdims=True)
        lse = jnp.log(jnp.sum(jnp.exp(logits - m), axis=-1, keepdims=True)) + m
        tgt_logit = jnp.sum(jnp.where(cls_idx == t, logits, 0.0), axis=-1, keepdims=True)
        valid = (t >= 0).astype(jnp.float32)
        per_row = (lse - tgt_logit) * valid                        # (G*R, 1)

        row = lax.broadcasted_iota(jnp.int32, (GR, G), 0)
        col = lax.broadcasted_iota(jnp.int32, (GR, G), 1)
        sel = jnp.logical_and(row >= col * R, row < (col + 1) * R).astype(jnp.float32)
        tot = jnp.sum(per_row * sel, axis=0, keepdims=True)        # (1, G)
        cnt = jnp.sum(valid * sel, axis=0, keepdims=True)          # (1, G)
        out_ref[...] = tot / cnt

    return kernel


# ----------------------------------------------------------------------------
# Parameter construction (stand-in for BertModel.from_pretrained + the heads).
# All fused / stacked layouts are built ONCE here, so the forward pass emits
# no per-call cast / pad / reshape-of-weights HLOs.
# ----------------------------------------------------------------------------
def init_bert(key, vocab_size, max_pos, type_vocab, hidden, num_layers, num_heads, intermediate):
    std = 0.02
    nh, hd = num_heads, hidden // num_heads
    ks = jax.random.split(key, 10)

    def nrm(k, shape):
        return jax.random.normal(k, shape, jnp.float32) * std

    return {
        "word_emb": nrm(ks[0], (vocab_size, hidden)),
        "pos_emb": nrm(ks[1], (max_pos, hidden)),
        "type_emb": nrm(ks[2], (type_vocab, hidden)),
        "emb_ln_g": jnp.ones((hidden,), jnp.float32),
        "emb_ln_b": jnp.zeros((hidden,), jnp.float32),
        # Per-layer weights stacked along a leading layer axis (grid axis).
        "wq": nrm(ks[3], (num_layers, nh, hidden, hd)),
        "wk": nrm(ks[4], (num_layers, nh, hidden, hd)),
        "wv": nrm(ks[5], (num_layers, nh, hidden, hd)),
        "bq": jnp.zeros((num_layers, nh, 1, hd), jnp.float32),
        "bk": jnp.zeros((num_layers, nh, 1, hd), jnp.float32),
        "bv": jnp.zeros((num_layers, nh, 1, hd), jnp.float32),
        "wo": nrm(ks[6], (num_layers, nh, hd, hidden)),
        "bo": jnp.zeros((num_layers, 1, hidden), jnp.float32),
        "ln1_g": jnp.ones((num_layers, 1, hidden), jnp.float32),
        "ln1_b": jnp.zeros((num_layers, 1, hidden), jnp.float32),
        "w1": nrm(ks[7], (num_layers, hidden, intermediate)),
        "b1": jnp.zeros((num_layers, 1, intermediate), jnp.float32),
        "w2": nrm(ks[8], (num_layers, intermediate, hidden)),
        "b2": jnp.zeros((num_layers, 1, hidden), jnp.float32),
        "ln2_g": jnp.ones((num_layers, 1, hidden), jnp.float32),
        "ln2_b": jnp.zeros((num_layers, 1, hidden), jnp.float32),
        # Pooler.
        "wp": nrm(ks[9], (hidden, hidden)),
        "bp": jnp.zeros((1, hidden), jnp.float32),
    }


def init_trippy_heads(key, hidden, num_slots, num_labels):
    std = 0.02
    feat = hidden + 2 * num_slots
    ks = jax.random.split(key, 3)
    # PyTorch nn.Linear convention: weight (out, in).
    gate_w = jax.random.normal(ks[0], (num_slots, num_labels, feat), jnp.float32) * std
    gate_b = jnp.zeros((num_slots, num_labels), jnp.float32)
    span_w = jax.random.normal(ks[1], (num_slots, 2, hidden), jnp.float32) * std
    span_b = jnp.zeros((num_slots, 2), jnp.float32)
    refer_w = jax.random.normal(ks[2], (num_slots, num_slots, feat), jnp.float32) * std
    refer_b = jnp.zeros((num_slots, num_slots), jnp.float32)

    # Lane-stacked fused layouts (equivalent to torch.stack(dim=1) of per-slot
    # Linear outputs), split along the feature axis so the kernel needs no
    # in-kernel concat of [pooled | states | informs].
    gr_w = jnp.concatenate(
        [gate_w.reshape(num_slots * num_labels, feat),
         refer_w.reshape(num_slots * num_slots, feat)], axis=0).T   # (feat, NS*L + NS*NS)
    return {
        "gr_w_pool": gr_w[:hidden],                                 # (H, NGR)
        "gr_w_state": gr_w[hidden:hidden + num_slots],              # (NS, NGR)
        "gr_w_inform": gr_w[hidden + num_slots:],                   # (NS, NGR)
        "gr_b": jnp.concatenate([gate_b.reshape(-1), refer_b.reshape(-1)]).reshape(1, -1),
        "sp_w": span_w.reshape(num_slots * 2, hidden).T,            # (H, NS*2)
        "sp_b": span_b.reshape(1, num_slots * 2),
    }


# ----------------------------------------------------------------------------
# TrippyModel forward.
# ----------------------------------------------------------------------------
trippy_model_ret_t = namedtuple(
    "trippy_model_ret",
    ["gate_logits", "span_logits", "ref_logits", "gate_loss", "span_loss", "refer_loss"],
)


def trippy_forward(params, input_ids, attention_mask, token_type_ids, states, informs, **kwargs):
    B, S = input_ids.shape
    bert = params["bert"]
    heads = params["heads"]
    H = bert["word_emb"].shape[1]
    NS = heads["sp_w"].shape[1] // 2
    NGR = heads["gr_b"].shape[1]
    L = (NGR - NS * NS) // NS

    # 1) Encoder: one pallas_call.
    last_hidden_flat = bert_encode(bert, input_ids, attention_mask, token_type_ids)  # (B*S, H)
    cls = last_hidden_flat.reshape(B, S, H)[:, 0, :]                                  # (B, H)

    # 2) Pooler + gate/refer/span heads: one pallas_call.
    gr, sp = pl.pallas_call(
        _heads_kernel,
        out_shape=(jax.ShapeDtypeStruct((B, NGR), jnp.float32),
                   jax.ShapeDtypeStruct((B * S, 2 * NS), jnp.float32)),
    )(cls, last_hidden_flat, states.astype(jnp.float32), informs.astype(jnp.float32),
      bert["wp"], bert["bp"],
      heads["gr_w_pool"], heads["gr_w_state"], heads["gr_w_inform"], heads["gr_b"],
      heads["sp_w"], heads["sp_b"])

    gate_logits = gr[:, :NS * L].reshape(B, NS, L)                  # == torch.stack(dim=1)
    ref_logits = gr[:, NS * L:].reshape(B, NS, NS)
    span_logits = sp.reshape(B, S, NS, 2).transpose(0, 2, 1, 3)     # (B, NS, S, 2)
    span_start_logits = span_logits[:, :, :, 0]
    span_end_logits = span_logits[:, :, :, 1]

    # 3) Losses: every requested CE group in one pallas_call.
    groups = []   # (name, logits_2d, targets_1d, num_classes)
    if "gates" in kwargs:
        groups.append(("gate", gate_logits.reshape(-1, L), kwargs["gates"].reshape(-1), L))
    if "span_start" in kwargs and "span_end" in kwargs:
        groups.append(("span_start", span_start_logits.reshape(-1, S),
                       kwargs["span_start"].reshape(-1), S))
        groups.append(("span_end", span_end_logits.reshape(-1, S),
                       kwargs["span_end"].reshape(-1), S))
    if "ref_slot" in kwargs:
        groups.append(("ref", ref_logits.reshape(-1, NS), kwargs["ref_slot"].reshape(-1), NS))

    gate_loss = span_loss = ref_loss = None
    if groups:
        G = len(groups)
        R = groups[0][1].shape[0]            # every group has B * NS rows
        C = max(g[3] for g in groups)
        logits = jnp.concatenate(
            [jnp.pad(g[1].astype(jnp.float32), ((0, 0), (0, C - g[3])),
                     constant_values=-1e30) for g in groups], axis=0)           # (G*R, C)
        tgts = jnp.concatenate(
            [g[2].reshape(-1).astype(jnp.int32) for g in groups]).reshape(G * R, 1)
        means = pl.pallas_call(
            _make_ce_kernel(G, R),
            out_shape=jax.ShapeDtypeStruct((1, G), jnp.float32),
        )(logits, tgts)
        by_name = {g[0]: means[0, i] for i, g in enumerate(groups)}
        gate_loss = by_name.get("gate")
        if "span_start" in by_name:
            span_loss = by_name["span_start"] + by_name["span_end"]
        ref_loss = by_name.get("ref")

    return trippy_model_ret_t(gate_logits, span_logits, ref_logits,
                              gate_loss, span_loss, ref_loss)


# ----------------------------------------------------------------------------
if __name__ == "__main__":
    B, S = 2, 8
    HIDDEN, NUM_HEADS, NUM_LAYERS, INTER = 32, 4, 2, 64
    VOCAB, MAX_POS, TYPE_VOCAB = 50, 32, 2
    NUM_SLOTS, NUM_LABELS = 4, 6

    root = jax.random.PRNGKey(0)
    (k_bert, k_heads, k_ids, k_types, k_states, k_informs,
     k_g, k_ss, k_se, k_rs) = jax.random.split(root, 10)

    params = {
        "bert": init_bert(k_bert, VOCAB, MAX_POS, TYPE_VOCAB, HIDDEN,
                          NUM_LAYERS, NUM_HEADS, INTER),
        "heads": init_trippy_heads(k_heads, HIDDEN, NUM_SLOTS, NUM_LABELS),
    }

    input_ids = jax.random.randint(k_ids, (B, S), 0, VOCAB, dtype=jnp.int32)
    attention_mask = jnp.ones((B, S), jnp.int32).at[1, S - 1].set(0)
    token_type_ids = jax.random.randint(k_types, (B, S), 0, TYPE_VOCAB, dtype=jnp.int32)
    states = jax.random.normal(k_states, (B, NUM_SLOTS), jnp.float32)
    informs = jax.random.normal(k_informs, (B, NUM_SLOTS), jnp.float32)

    gates = jax.random.randint(k_g, (B, NUM_SLOTS), 0, NUM_LABELS, dtype=jnp.int32)
    span_start = jax.random.randint(k_ss, (B, NUM_SLOTS), 0, S, dtype=jnp.int32).at[0, 1].set(-1)
    span_end = jax.random.randint(k_se, (B, NUM_SLOTS), 0, S, dtype=jnp.int32).at[0, 1].set(-1)
    ref_slot = jax.random.randint(k_rs, (B, NUM_SLOTS), 0, NUM_SLOTS, dtype=jnp.int32).at[1, 2].set(-1)

    fwd = jax.jit(trippy_forward)
    ret = fwd(params, input_ids, attention_mask, token_type_ids, states, informs,
              gates=gates, span_start=span_start, span_end=span_end, ref_slot=ref_slot)

    for v in ret:
        if v is not None:
            jax.block_until_ready(v)

    assert ret.gate_logits.shape == (B, NUM_SLOTS, NUM_LABELS)
    assert ret.span_logits.shape == (B, NUM_SLOTS, S, 2)
    assert ret.ref_logits.shape == (B, NUM_SLOTS, NUM_SLOTS)
    assert ret.gate_loss.shape == () and ret.span_loss.shape == () and ret.refer_loss.shape == ()
    assert all(bool(jnp.isfinite(v).all()) for v in ret)

    print("KERNEL_OK")
</pallas_src>

<mosaic_0001>
module attributes {stable_mosaic.version = 11 : i64} {
  func.func @_heads_kernel(%arg0: memref<2x32xf32, #tpu.memory_space<vmem>>, %arg1: memref<16x32xf32, #tpu.memory_space<vmem>>, %arg2: memref<2x4xf32, #tpu.memory_space<vmem>>, %arg3: memref<2x4xf32, #tpu.memory_space<vmem>>, %arg4: memref<32x32xf32, #tpu.memory_space<vmem>>, %arg5: memref<1x32xf32, #tpu.memory_space<vmem>>, %arg6: memref<32x40xf32, #tpu.memory_space<vmem>>, %arg7: memref<4x40xf32, #tpu.memory_space<vmem>>, %arg8: memref<4x40xf32, #tpu.memory_space<vmem>>, %arg9: memref<1x40xf32, #tpu.memory_space<vmem>>, %arg10: memref<32x8xf32, #tpu.memory_space<vmem>>, %arg11: memref<1x8xf32, #tpu.memory_space<vmem>>, %arg12: memref<2x40xf32, #tpu.memory_space<vmem>>, %arg13: memref<16x8xf32, #tpu.memory_space<vmem>>) attributes {dimension_semantics = [], scalar_prefetch = 0 : i64, scratch_operands = 0 : i64, tpu.core_type = #tpu.core_type<tc>} {
    %c0 = arith.constant 0 : index
    %c0_0 = arith.constant 0 : index
    %0 = vector.load %arg0[%c0, %c0_0] : memref<2x32xf32, #tpu.memory_space<vmem>>, vector<2x32xf32>
    %c0_1 = arith.constant 0 : index
    %c0_2 = arith.constant 0 : index
    %1 = vector.load %arg4[%c0_1, %c0_2] : memref<32x32xf32, #tpu.memory_space<vmem>>, vector<32x32xf32>
    %cst = arith.constant dense<0.000000e+00> : vector<2x32xf32>
    %2 = tpu.matmul %0, %1, %cst {dimension_numbers = #tpu.dot_dimension_numbers<[1], [0], [0], [1], [0, 0, 1, 1], [], []>} : vector<2x32xf32>, vector<32x32xf32>, vector<2x32xf32> -> vector<2x32xf32>
    %c0_3 = arith.constant 0 : index
    %c0_4 = arith.constant 0 : index
    %3 = vector.load %arg5[%c0_3, %c0_4] : memref<1x32xf32, #tpu.memory_space<vmem>>, vector<1x32xf32>
    %4 = vector.broadcast %3 : vector<1x32xf32> to vector<2x32xf32>
    %5 = arith.addf %2, %4 : vector<2x32xf32>
    %6 = math.tanh %5 : vector<2x32xf32>
    %c0_5 = arith.constant 0 : index
    %c0_6 = arith.constant 0 : index
    %7 = vector.load %arg6[%c0_5, %c0_6] : memref<32x40xf32, #tpu.memory_space<vmem>>, vector<32x40xf32>
    %cst_7 = arith.constant dense<0.000000e+00> : vector<2x40xf32>
    %8 = tpu.matmul %6, %7, %cst_7 {dimension_numbers = #tpu.dot_dimension_numbers<[1], [0], [0], [1], [0, 0, 1, 1], [], []>} : vector<2x32xf32>, vector<32x40xf32>, vector<2x40xf32> -> vector<2x40xf32>
    %c0_8 = arith.constant 0 : index
    %c0_9 = arith.constant 0 : index
    %9 = vector.load %arg2[%c0_8, %c0_9] : memref<2x4xf32, #tpu.memory_space<vmem>>, vector<2x4xf32>
    %c0_10 = arith.constant 0 : index
    %c0_11 = arith.constant 0 : index
    %10 = vector.load %arg7[%c0_10, %c0_11] : memref<4x40xf32, #tpu.memory_space<vmem>>, vector<4x40xf32>
    %cst_12 = arith.constant dense<0.000000e+00> : vector<2x40xf32>
    %11 = tpu.matmul %9, %10, %cst_12 {dimension_numbers = #tpu.dot_dimension_numbers<[1], [0], [0], [1], [0, 0, 1, 1], [], []>} : vector<2x4xf32>, vector<4x40xf32>, vector<2x40xf32> -> vector<2x40xf32>
    %12 = arith.addf %8, %11 : vector<2x40xf32>
    %c0_13 = arith.constant 0 : index
    %c0_14 = arith.constant 0 : index
    %13 = vector.load %arg3[%c0_13, %c0_14] : memref<2x4xf32, #tpu.memory_space<vmem>>, vector<2x4xf32>
    %c0_15 = arith.constant 0 : index
    %c0_16 = arith.constant 0 : index
    %14 = vector.load %arg8[%c0_15, %c0_16] : memref<4x40xf32, #tpu.memory_space<vmem>>, vector<4x40xf32>
    %cst_17 = arith.constant dense<0.000000e+00> : vector<2x40xf32>
    %15 = tpu.matmul %13, %14, %cst_17 {dimension_numbers = #tpu.dot_dimension_numbers<[1], [0], [0], [1], [0, 0, 1, 1], [], []>} : vector<2x4xf32>, vector<4x40xf32>, vector<2x40xf32> -> vector<2x40xf32>
    %16 = arith.addf %12, %15 : vector<2x40xf32>
    %c0_18 = arith.constant 0 : index
    %c0_19 = arith.constant 0 : index
    %17 = vector.load %arg9[%c0_18, %c0_19] : memref<1x40xf32, #tpu.memory_space<vmem>>, vector<1x40xf32>
    %18 = vector.broadcast %17 : vector<1x40xf32> to vector<2x40xf32>
    %19 = arith.addf %16, %18 : vector<2x40xf32>
    %c0_20 = arith.constant 0 : index
    %c0_21 = arith.constant 0 : index
    %20 = vector.load %arg12[%c0_20, %c0_21] : memref<2x40xf32, #tpu.memory_space<vmem>>, vector<2x40xf32>
    tpu.vector_store %arg12[%c0_20, %c0_21], %19 {strides = array<i32>} : memref<2x40xf32, #tpu.memory_space<vmem>>, vector<2x40xf32>,
    %c0_22 = arith.constant 0 : index
    %c0_23 = arith.constant 0 : index
    %21 = vector.load %arg1[%c0_22, %c0_23] : memref<16x32xf32, #tpu.memory_space<vmem>>, vector<16x32xf32>
    %c0_24 = arith.constant 0 : index
    %c0_25 = arith.constant 0 : index
    %22 = vector.load %arg10[%c0_24, %c0_25] : memref<32x8xf32, #tpu.memory_space<vmem>>, vector<32x8xf32>
    %cst_26 = arith.constant dense<0.000000e+00> : vector<16x8xf32>
    %23 = tpu.matmul %21, %22, %cst_26 {dimension_numbers = #tpu.dot_dimension_numbers<[1], [0], [0], [1], [0, 0, 1, 1], [], []>} : vector<16x32xf32>, vector<32x8xf32>, vector<16x8xf32> -> vector<16x8xf32>
    %c0_27 = arith.constant 0 : index
    %c0_28 = arith.constant 0 : index
    %24 = vector.load %arg11[%c0_27, %c0_28] : memref<1x8xf32, #tpu.memory_space<vmem>>, vector<1x8xf32>
    %25 = vector.broadcast %24 : vector<1x8xf32> to vector<16x8xf32>
    %26 = arith.addf %23, %25 : vector<16x8xf32>
    %c0_29 = arith.constant 0 : index
    %c0_30 = arith.constant 0 : index
    %27 = vector.load %arg13[%c0_29, %c0_30] : memref<16x8xf32, #tpu.memory_space<vmem>>, vector<16x8xf32>
    tpu.vector_store %arg13[%c0_29, %c0_30], %26 {strides = array<i32>} : memref<16x8xf32, #tpu.memory_space<vmem>>, vector<16x8xf32>,
    return
  }
}

module attributes {stable_mosaic.version = 11 : i64} {
  func.func @kernel(%arg0: i32, %arg1: memref<16x32xf32, #tpu.memory_space<vmem>>, %arg2: memref<2x1x8xf32, #tpu.memory_space<vmem>>, %arg3: memref<1x4x32x8xf32, #tpu.memory_space<vmem>>, %arg4: memref<1x4x32x8xf32, #tpu.memory_space<vmem>>, %arg5: memref<1x4x32x8xf32, #tpu.memory_space<vmem>>, %arg6: memref<1x4x1x8xf32, #tpu.memory_space<vmem>>, %arg7: memref<1x4x1x8xf32, #tpu.memory_space<vmem>>, %arg8: memref<1x4x1x8xf32, #tpu.memory_space<vmem>>, %arg9: memref<1x4x8x32xf32, #tpu.memory_space<vmem>>, %arg10: memref<1x1x32xf32, #tpu.memory_space<vmem>>, %arg11: memref<1x1x32xf32, #tpu.memory_space<vmem>>, %arg12: memref<1x1x32xf32, #tpu.memory_space<vmem>>, %arg13: memref<1x32x64xf32, #tpu.memory_space<vmem>>, %arg14: memref<1x1x64xf32, #tpu.memory_space<vmem>>, %arg15: memref<1x64x32xf32, #tpu.memory_space<vmem>>, %arg16: memref<1x1x32xf32, #tpu.memory_space<vmem>>, %arg17: memref<1x1x32xf32, #tpu.memory_space<vmem>>, %arg18: memref<1x1x32xf32, #tpu.memory_space<vmem>>, %arg19: memref<16x32xf32, #tpu.memory_space<vmem>>) attributes {dimension_semantics = [#tpu.dimension_semantics<arbitrary>], iteration_bounds = array<i64: 2>, scalar_prefetch = 0 : i64, scratch_operands = 0 : i64, tpu.core_type = #tpu.core_type<tc>, window_params = [{pipeline_mode = #tpu.pipeline_mode<synchronous>, transform_indices = @transform_0, window_bounds = array<i64: 16, 32>}, {pipeline_mode = #tpu.pipeline_mode<synchronous>, transform_indices = @transform_1, window_bounds = array<i64: 2, 1, 8>}, {transform_indices = @transform_2, window_bounds = array<i64: 1, 4, 32, 8>}, {transform_indices = @transform_3, window_bounds = array<i64: 1, 4, 32, 8>}, {transform_indices = @transform_4, window_bounds = array<i64: 1, 4, 32, 8>}, {transform_indices = @transform_5, window_bounds = array<i64: 1, 4, 1, 8>}, {transform_indices = @transform_6, window_bounds = array<i64: 1, 4, 1, 8>}, {transform_indices = @transform_7, window_bounds = array<i64: 1, 4, 1, 8>}, {transform_indices = @transform_8, window_bounds = array<i64: 1, 4, 8, 32>}, {transform_indices = @transform_9, window_bounds = array<i64: 1, 1, 32>}, {transform_indices = @transform_10, window_bounds = array<i64: 1, 1, 32>}, {transform_indices = @transform_11, window_bounds = array<i64: 1, 1, 32>}, {transform_indices = @transform_12, window_bounds = array<i64: 1, 32, 64>}, {transform_indices = @transform_13, window_bounds = array<i64: 1, 1, 64>}, {transform_indices = @transform_14, window_bounds = array<i64: 1, 64, 32>}, {transform_indices = @transform_15, window_bounds = array<i64: 1, 1, 32>}, {transform_indices = @transform_16, window_bounds = array<i64: 1, 1, 32>}, {transform_indices = @transform_17, window_bounds = array<i64: 1, 1, 32>}, {pipeline_mode = #tpu.pipeline_mode<synchronous>, transform_indices = @transform_18, window_bounds = array<i64: 16, 32>}]} {
    %c0_i32 = arith.constant 0 : i32
    %0 = arith.cmpi eq, %arg0, %c0_i32 : i32
    %1 = arith.extui %0 : i1 to i32
    %c0_i32_0 = arith.constant 0 : i32
    %2 = arith.cmpi ne, %1, %c0_i32_0 : i32
    scf.if %2 {
      %c0_236 = arith.constant 0 : index
      %c0_237 = arith.constant 0 : index
      %355 = vector.load %arg1[%c0_236, %c0_237] : memref<16x32xf32, #tpu.memory_space<vmem>>, vector<16x32xf32>
      %c0_238 = arith.constant 0 : index
      %c0_239 = arith.constant 0 : index
      %356 = vector.load %arg19[%c0_238, %c0_239] : memref<16x32xf32, #tpu.memory_space<vmem>>, vector<16x32xf32>
      tpu.vector_store %arg19[%c0_238, %c0_239], %355 {strides = array<i32>} : memref<16x32xf32, #tpu.memory_space<vmem>>, vector<16x32xf32>,
    } else {
    }
    %c0 = arith.constant 0 : index
    %c0_1 = arith.constant 0 : index
    %3 = vector.load %arg19[%c0, %c0_1] : memref<16x32xf32, #tpu.memory_space<vmem>>, vector<16x32xf32>
    %cst = arith.constant 0.000000e+00 : f32
    %4 = vector.broadcast %cst : f32 to vector<16x32xf32>
    %c0_2 = arith.constant 0 : index
    %c0_3 = arith.constant 0 : index
    %c0_4 = arith.constant 0 : index
    %c0_5 = arith.constant 0 : index
    %5 = vector.load %arg3[%c0_2, %c0_3, %c0_4, %c0_5] : memref<1x4x32x8xf32, #tpu.memory_space<vmem>>, vector<1x1x32x8xf32>
    %6 = vector.shape_cast %5 : vector<1x1x32x8xf32> to vector<32x8xf32>
    %cst_6 = arith.constant dense<0.000000e+00> : vector<16x8xf32>
    %7 = tpu.matmul %3, %6, %cst_6 {dimension_numbers = #tpu.dot_dimension_numbers<[1], [0], [0], [1], [0, 0, 1, 1], [], []>} : vector<16x32xf32>, vector<32x8xf32>, vector<16x8xf32> -> vector<16x8xf32>
    %c0_7 = arith.constant 0 : index
    %c0_8 = arith.constant 0 : index
    %c0_9 = arith.constant 0 : index
    %c0_10 = arith.constant 0 : index
    %8 = vector.load %arg6[%c0_7, %c0_8, %c0_9, %c0_10] : memref<1x4x1x8xf32, #tpu.memory_space<vmem>>, vector<1x1x1x8xf32>
    %9 = vector.shape_cast %8 : vector<1x1x1x8xf32> to vector<1x8xf32>
    %10 = vector.broadcast %9 : vector<1x8xf32> to vector<16x8xf32>
    %11 = arith.addf %7, %10 : vector<16x8xf32>
    %c0_11 = arith.constant 0 : index
    %c0_12 = arith.constant 0 : index
    %c0_13 = arith.constant 0 : index
    %c0_14 = arith.constant 0 : index
    %12 = vector.load %arg4[%c0_11, %c0_12, %c0_13, %c0_14] : memref<1x4x32x8xf32, #tpu.memory_space<vmem>>, vector<1x1x32x8xf32>
    %13 = vector.shape_cast %12 : vector<1x1x32x8xf32> to vector<32x8xf32>
    %cst_15 = arith.constant dense<0.000000e+00> : vector<16x8xf32>
    %14 = tpu.matmul %3, %13, %cst_15 {dimension_numbers = #tpu.dot_dimension_numbers<[1], [0], [0], [1], [0, 0, 1, 1], [], []>} : vector<16x32xf32>, vector<32x8xf32>, vector<16x8xf32> -> vector<16x8xf32>
    %c0_16 = arith.constant 0 : index
    %c0_17 = arith.constant 0 : index
    %c0_18 = arith.constant 0 : index
    %c0_19 = arith.constant 0 : index
    %15 = vector.load %arg7[%c0_16, %c0_17, %c0_18, %c0_19] : memref<1x4x1x8xf32, #tpu.memory_space<vmem>>, vector<1x1x1x8xf32>
    %16 = vector.shape_cast %15 : vector<1x1x1x8xf32> to vector<1x8xf32>
    %17 = vector.broadcast %16 : vector<1x8xf32> to vector<16x8xf32>
    %18 = arith.addf %14, %17 : vector<16x8xf32>
    %c0_20 = arith.constant 0 : index
    %c0_21 = arith.constant 0 : index
    %c0_22 = arith.constant 0 : index
    %c0_23 = arith.constant 0 : index
    %19 = vector.load %arg5[%c0_20, %c0_21, %c0_22, %c0_23] : memref<1x4x32x8xf32, #tpu.memory_space<vmem>>, vector<1x1x32x8xf32>
    %20 = vector.shape_cast %19 : vector<1x1x32x8xf32> to vector<32x8xf32>
    %cst_24 = arith.constant dense<0.000000e+00> : vector<16x8xf32>
    %21 = tpu.matmul %3, %20, %cst_24 {dimension_numbers = #tpu.dot_dimension_numbers<[1], [0], [0], [1], [0, 0, 1, 1], [], []>} : vector<16x32xf32>, vector<32x8xf32>, vector<16x8xf32> -> vector<16x8xf32>
    %c0_25 = arith.constant 0 : index
    %c0_26 = arith.constant 0 : index
    %c0_27 = arith.constant 0 : index
    %c0_28 = arith.constant 0 : index
    %22 = vector.load %arg8[%c0_25, %c0_26, %c0_27, %c0_28] : memref<1x4x1x8xf32, #tpu.memory_space<vmem>>, vector<1x1x1x8xf32>
    %23 = vector.shape_cast %22 : vector<1x1x1x8xf32> to vector<1x8xf32>
    %24 = vector.broadcast %23 : vector<1x8xf32> to vector<16x8xf32>
    %25 = arith.addf %21, %24 : vector<16x8xf32>
    %26 = vector.extract_strided_slice %11 {offsets = [0, 0], sizes = [8, 8], strides = [1, 1]} : vector<16x8xf32> to vector<8x8xf32>
    %27 = vector.extract_strided_slice %18 {offsets = [0, 0], sizes = [8, 8], strides = [1, 1]} : vector<16x8xf32> to vector<8x8xf32>
    %28 = vector.extract_strided_slice %25 {offsets = [0, 0], sizes = [8, 8], strides = [1, 1]} : vector<16x8xf32> to vector<8x8xf32>
    %cst_29 = arith.constant dense<0.000000e+00> : vector<8x8xf32>
    %29 = tpu.matmul %26, %27, %cst_29 {dimension_numbers = #tpu.dot_dimension_numbers<[1], [1], [0], [0], [0, 0, 1, 0], [], []>} : vector<8x8xf32>, vector<8x8xf32>, vector<8x8xf32> -> vector<8x8xf32>
    %cst_30 = arith.constant 0.353553385 : f32
    %30 = vector.broadcast %cst_30 : f32 to vector<8x8xf32>
    %31 = arith.mulf %29, %30 : vector<8x8xf32>
    %c0_31 = arith.constant 0 : index
    %c0_32 = arith.constant 0 : index
    %c0_33 = arith.constant 0 : index
    %32 = vector.load %arg2[%c0_31, %c0_32, %c0_33] : memref<2x1x8xf32, #tpu.memory_space<vmem>>, vector<1x1x8xf32>
    %33 = vector.shape_cast %32 : vector<1x1x8xf32> to vector<1x8xf32>
    %34 = vector.broadcast %33 : vector<1x8xf32> to vector<8x8xf32>
    %35 = arith.addf %31, %34 : vector<8x8xf32>
    %cst_34 = arith.constant dense<0xFF800000> : vector<8xf32>
    %36 = vector.multi_reduction <maximumf>, %35, %cst_34 [1] : vector<8x8xf32> to vector<8xf32>
    %37 = vector.shape_cast %36 : vector<8xf32> to vector<8x1xf32>
    %38 = vector.broadcast %37 : vector<8x1xf32> to vector<8x8xf32>
    %39 = arith.subf %35, %38 : vector<8x8xf32>
    %40 = math.exp %39 : vector<8x8xf32>
    %cst_35 = arith.constant dense<0.000000e+00> : vector<8xf32>
    %41 = vector.multi_reduction <add>, %40, %cst_35 [1] : vector<8x8xf32> to vector<8xf32>
    %42 = vector.shape_cast %41 : vector<8xf32> to vector<8x1xf32>
    %43 = vector.broadcast %42 : vector<8x1xf32> to vector<8x8xf32>
    %44 = arith.divf %40, %43 : vector<8x8xf32>
    %cst_36 = arith.constant dense<0.000000e+00> : vector<8x8xf32>
    %45 = tpu.matmul %44, %28, %cst_36 {dimension_numbers = #tpu.dot_dimension_numbers<[1], [0], [0], [1], [0, 0, 1, 1], [], []>} : vector<8x8xf32>, vector<8x8xf32>, vector<8x8xf32> -> vector<8x8xf32>
    %46 = vector.extract_strided_slice %11 {offsets = [8, 0], sizes = [8, 8], strides = [1, 1]} : vector<16x8xf32> to vector<8x8xf32>
    %47 = vector.extract_strided_slice %18 {offsets = [8, 0], sizes = [8, 8], strides = [1, 1]} : vector<16x8xf32> to vector<8x8xf32>
    %48 = vector.extract_strided_slice %25 {offsets = [8, 0], sizes = [8, 8], strides = [1, 1]} : vector<16x8xf32> to vector<8x8xf32>
    %cst_37 = arith.constant dense<0.000000e+00> : vector<8x8xf32>
    %49 = tpu.matmul %46, %47, %cst_37 {dimension_numbers = #tpu.dot_dimension_numbers<[1], [1], [0], [0], [0, 0, 1, 0], [], []>} : vector<8x8xf32>, vector<8x8xf32>, vector<8x8xf32> -> vector<8x8xf32>
    %cst_38 = arith.constant 0.353553385 : f32
    %50 = vector.broadcast %cst_38 : f32 to vector<8x8xf32>
    %51 = arith.mulf %49, %50 : vector<8x8xf32>
    %c1 = arith.constant 1 : index
    %c0_39 = arith.constant 0 : index
    %c0_40 = arith.constant 0 : index
    %52 = vector.load %arg2[%c1, %c0_39, %c0_40] : memref<2x1x8xf32, #tpu.memory_space<vmem>>, vector<1x1x8xf32>
    %53 = vector.shape_cast %52 : vector<1x1x8xf32> to vector<1x8xf32>
    %54 = vector.broadcast %53 : vector<1x8xf32> to vector<8x8xf32>
    %55 = arith.addf %51, %54 : vector<8x8xf32>
    %cst_41 = arith.constant dense<0xFF800000> : vector<8xf32>
    %56 = vector.multi_reduction <maximumf>, %55, %cst_41 [1] : vector<8x8xf32> to vector<8xf32>
    %57 = vector.shape_cast %56 : vector<8xf32> to vector<8x1xf32>
    %58 = vector.broadcast %57 : vector<8x1xf32> to vector<8x8xf32>
    %59 = arith.subf %55, %58 : vector<8x8xf32>
    %60 = math.exp %59 : vector<8x8xf32>
    %cst_42 = arith.constant dense<0.000000e+00> : vector<8xf32>
    %61 = vector.multi_reduction <add>, %60, %cst_42 [1] : vector<8x8xf32> to vector<8xf32>
    %62 = vector.shape_cast %61 : vector<8xf32> to vector<8x1xf32>
    %63 = vector.broadcast %62 : vector<8x1xf32> to vector<8x8xf32>
    %64 = arith.divf %60, %63 : vector<8x8xf32>
    %cst_43 = arith.constant dense<0.000000e+00> : vector<8x8xf32>
    %65 = tpu.matmul %64, %48, %cst_43 {dimension_numbers = #tpu.dot_dimension_numbers<[1], [0], [0], [1], [0, 0, 1, 1], [], []>} : vector<8x8xf32>, vector<8x8xf32>, vector<8x8xf32> -> vector<8x8xf32>
    %66 = tpu.concatenate %45, %65 in 0 : vector<8x8xf32>, vector<8x8xf32> -> vector<16x8xf32>
    %c0_44 = arith.constant 0 : index
    %c0_45 = arith.constant 0 : index
    %c0_46 = arith.constant 0 : index
    %c0_47 = arith.constant 0 : index
    %67 = vector.load %arg9[%c0_44, %c0_45, %c0_46, %c0_47] : memref<1x4x8x32xf32, #tpu.memory_space<vmem>>, vector<1x1x8x32xf32>
    %68 = vector.shape_cast %67 : vector<1x1x8x32xf32> to vector<8x32xf32>
    %cst_48 = arith.constant dense<0.000000e+00> : vector<16x32xf32>
    %69 = tpu.matmul %66, %68, %cst_48 {dimension_numbers = #tpu.dot_dimension_numbers<[1], [0], [0], [1], [0, 0, 1, 1], [], []>} : vector<16x8xf32>, vector<8x32xf32>, vector<16x32xf32> -> vector<16x32xf32>
    %70 = arith.addf %4, %69 : vector<16x32xf32>
    %c0_49 = arith.constant 0 : index
    %c1_50 = arith.constant 1 : index
    %c0_51 = arith.constant 0 : index
    %c0_52 = arith.constant 0 : index
    %71 = vector.load %arg3[%c0_49, %c1_50, %c0_51, %c0_52] : memref<1x4x32x8xf32, #tpu.memory_space<vmem>>, vector<1x1x32x8xf32>
    %72 = vector.shape_cast %71 : vector<1x1x32x8xf32> to vector<32x8xf32>
    %cst_53 = arith.constant dense<0.000000e+00> : vector<16x8xf32>
    %73 = tpu.matmul %3, %72, %cst_53 {dimension_numbers = #tpu.dot_dimension_numbers<[1], [0], [0], [1], [0, 0, 1, 1], [], []>} : vector<16x32xf32>, vector<32x8xf32>, vector<16x8xf32> -> vector<16x8xf32>
    %c0_54 = arith.constant 0 : index
    %c1_55 = arith.constant 1 : index
    %c0_56 = arith.constant 0 : index
    %c0_57 = arith.constant 0 : index
    %74 = vector.load %arg6[%c0_54, %c1_55, %c0_56, %c0_57] : memref<1x4x1x8xf32, #tpu.memory_space<vmem>>, vector<1x1x1x8xf32>
    %75 = vector.shape_cast %74 : vector<1x1x1x8xf32> to vector<1x8xf32>
    %76 = vector.broadcast %75 : vector<1x8xf32> to vector<16x8xf32>
    %77 = arith.addf %73, %76 : vector<16x8xf32>
    %c0_58 = arith.constant 0 : index
    %c1_59 = arith.constant 1 : index
    %c0_60 = arith.constant 0 : index
    %c0_61 = arith.constant 0 : index
    %78 = vector.load %arg4[%c0_58, %c1_59, %c0_60, %c0_61] : memref<1x4x32x8xf32, #tpu.memory_space<vmem>>, vector<1x1x32x8xf32>
    %79 = vector.shape_cast %78 : vector<1x1x32x8xf32> to vector<32x8xf32>
    %cst_62 = arith.constant dense<0.000000e+00> : vector<16x8xf32>
    %80 = tpu.matmul %3, %79, %cst_62 {dimension_numbers = #tpu.dot_dimension_numbers<[1], [0], [0], [1], [0, 0, 1, 1], [], []>} : vector<16x32xf32>, vector<32x8xf32>, vector<16x8xf32> -> vector<16x8xf32>
    %c0_63 = arith.constant 0 : index
    %c1_64 = arith.constant 1 : index
    %c0_65 = arith.constant 0 : index
    %c0_66 = arith.constant 0 : index
    %81 = vector.load %arg7[%c0_63, %c1_64, %c0_65, %c0_66] : memref<1x4x1x8xf32, #tpu.memory_space<vmem>>, vector<1x1x1x8xf32>
    %82 = vector.shape_cast %81 : vector<1x1x1x8xf32> to vector<1x8xf32>
    %83 = vector.broadcast %82 : vector<1x8xf32> to vector<16x8xf32>
    %84 = arith.addf %80, %83 : vector<16x8xf32>
    %c0_67 = arith.constant 0 : index
    %c1_68 = arith.constant 1 : index
    %c0_69 = arith.constant 0 : index
    %c0_70 = arith.constant 0 : index
    %85 = vector.load %arg5[%c0_67, %c1_68, %c0_69, %c0_70] : memref<1x4x32x8xf32, #tpu.memory_space<vmem>>, vector<1x1x32x8xf32>
    %86 = vector.shape_cast %85 : vector<1x1x32x8xf32> to vector<32x8xf32>
    %cst_71 = arith.constant dense<0.000000e+00> : vector<16x8xf32>
    %87 = tpu.matmul %3, %86, %cst_71 {dimension_numbers = #tpu.dot_dimension_numbers<[1], [0], [0], [1], [0, 0, 1, 1], [], []>} : vector<16x32xf32>, vector<32x8xf32>, vector<16x8xf32> -> vector<16x8xf32>
    %c0_72 = arith.constant 0 : index
    %c1_73 = arith.constant 1 : index
    %c0_74 = arith.constant 0 : index
    %c0_75 = arith.constant 0 : index
    %88 = vector.load %arg8[%c0_72, %c1_73, %c0_74, %c0_75] : memref<1x4x1x8xf32, #tpu.memory_space<vmem>>, vector<1x1x1x8xf32>
    %89 = vector.shape_cast %88 : vector<1x1x1x8xf32> to vector<1x8xf32>
    %90 = vector.broadcast %89 : vector<1x8xf32> to vector<16x8xf32>
    %91 = arith.addf %87, %90 : vector<16x8xf32>
    %92 = vector.extract_strided_slice %77 {offsets = [0, 0], sizes = [8, 8], strides = [1, 1]} : vector<16x8xf32> to vector<8x8xf32>
    %93 = vector.extract_strided_slice %84 {offsets = [0, 0], sizes = [8, 8], strides = [1, 1]} : vector<16x8xf32> to vector<8x8xf32>
    %94 = vector.extract_strided_slice %91 {offsets = [0, 0], sizes = [8, 8], strides = [1, 1]} : vector<16x8xf32> to vector<8x8xf32>
    %cst_76 = arith.constant dense<0.000000e+00> : vector<8x8xf32>
    %95 = tpu.matmul %92, %93, %cst_76 {dimension_numbers = #tpu.dot_dimension_numbers<[1], [1], [0], [0], [0, 0, 1, 0], [], []>} : vector<8x8xf32>, vector<8x8xf32>, vector<8x8xf32> -> vector<8x8xf32>
    %cst_77 = arith.constant 0.353553385 : f32
    %96 = vector.broadcast %cst_77 : f32 to vector<8x8xf32>
    %97 = arith.mulf %95, %96 : vector<8x8xf32>
    %c0_78 = arith.constant 0 : index
    %c0_79 = arith.constant 0 : index
    %c0_80 = arith.constant 0 : index
    %98 = vector.load %arg2[%c0_78, %c0_79, %c0_80] : memref<2x1x8xf32, #tpu.memory_space<vmem>>, vector<1x1x8xf32>
    %99 = vector.shape_cast %98 : vector<1x1x8xf32> to vector<1x8xf32>
    %100 = vector.broadcast %99 : vector<1x8xf32> to vector<8x8xf32>
    %101 = arith.addf %97, %100 : vector<8x8xf32>
    %cst_81 = arith.constant dense<0xFF800000> : vector<8xf32>
    %102 = vector.multi_reduction <maximumf>, %101, %cst_81 [1] : vector<8x8xf32> to vector<8xf32>
    %103 = vector.shape_cast %102 : vector<8xf32> to vector<8x1xf32>
    %104 = vector.broadcast %103 : vector<8x1xf32> to vector<8x8xf32>
    %105 = arith.subf %101, %104 : vector<8x8xf32>
    %106 = math.exp %105 : vector<8x8xf32>
    %cst_82 = arith.constant dense<0.000000e+00> : vector<8xf32>
    %107 = vector.multi_reduction <add>, %106, %cst_82 [1] : vector<8x8xf32> to vector<8xf32>
    %108 = vector.shape_cast %107 : vector<8xf32> to vector<8x1xf32>
    %109 = vector.broadcast %108 : vector<8x1xf32> to vector<8x8xf32>
    %110 = arith.divf %106, %109 : vector<8x8xf32>
    %cst_83 = arith.constant dense<0.000000e+00> : vector<8x8xf32>
    %111 = tpu.matmul %110, %94, %cst_83 {dimension_numbers = #tpu.dot_dimension_numbers<[1], [0], [0], [1], [0, 0, 1, 1], [], []>} : vector<8x8xf32>, vector<8x8xf32>, vector<8x8xf32> -> vector<8x8xf32>
    %112 = vector.extract_strided_slice %77 {offsets = [8, 0], sizes = [8, 8], strides = [1, 1]} : vector<16x8xf32> to vector<8x8xf32>
    %113 = vector.extract_strided_slice %84 {offsets = [8, 0], sizes = [8, 8], strides = [1, 1]} : vector<16x8xf32> to vector<8x8xf32>
    %114 = vector.extract_strided_slice %91 {offsets = [8, 0], sizes = [8, 8], strides = [1, 1]} : vector<16x8xf32> to vector<8x8xf32>
    %cst_84 = arith.constant dense<0.000000e+00> : vector<8x8xf32>
    %115 = tpu.matmul %112, %113, %cst_84 {dimension_numbers = #tpu.dot_dimension_numbers<[1], [1], [0], [0], [0, 0, 1, 0], [], []>} : vector<8x8xf32>, vector<8x8xf32>, vector<8x8xf32> -> vector<8x8xf32>
    %cst_85 = arith.constant 0.353553385 : f32
    %116 = vector.broadcast %cst_85 : f32 to vector<8x8xf32>
    %117 = arith.mulf %115, %116 : vector<8x8xf32>
    %c1_86 = arith.constant 1 : index
    %c0_87 = arith.constant 0 : index
    %c0_88 = arith.constant 0 : index
    %118 = vector.load %arg2[%c1_86, %c0_87, %c0_88] : memref<2x1x8xf32, #tpu.memory_space<vmem>>, vector<1x1x8xf32>
    %119 = vector.shape_cast %118 : vector<1x1x8xf32> to vector<1x8xf32>
    %120 = vector.broadcast %119 : vector<1x8xf32> to vector<8x8xf32>
    %121 = arith.addf %117, %120 : vector<8x8xf32>
    %cst_89 = arith.constant dense<0xFF800000> : vector<8xf32>
    %122 = vector.multi_reduction <maximumf>, %121, %cst_89 [1] : vector<8x8xf32> to vector<8xf32>
    %123 = vector.shape_cast %122 : vector<8xf32> to vector<8x1xf32>
    %124 = vector.broadcast %123 : vector<8x1xf32> to vector<8x8xf32>
    %125 = arith.subf %121, %124 : vector<8x8xf32>
    %126 = math.exp %125 : vector<8x8xf32>
    %cst_90 = arith.constant dense<0.000000e+00> : vector<8xf32>
    %127 = vector.multi_reduction <add>, %126, %cst_90 [1] : vector<8x8xf32> to vector<8xf32>
    %128 = vector.shape_cast %127 : vector<8xf32> to vector<8x1xf32>
    %129 = vector.broadcast %128 : vector<8x1xf32> to vector<8x8xf32>
    %130 = arith.divf %126, %129 : vector<8x8xf32>
    %cst_91 = arith.constant dense<0.000000e+00> : vector<8x8xf32>
    %131 = tpu.matmul %130, %114, %cst_91 {dimension_numbers = #tpu.dot_dimension_numbers<[1], [0], [0], [1], [0, 0, 1, 1], [], []>} : vector<8x8xf32>, vector<8x8xf32>, vector<8x8xf32> -> vector<8x8xf32>
    %132 = tpu.concatenate %111, %131 in 0 : vector<8x8xf32>, vector<8x8xf32> -> vector<16x8xf32>
    %c0_92 = arith.constant 0 : index
    %c1_93 = arith.constant 1 : index
    %c0_94 = arith.constant 0 : index
    %c0_95 = arith.constant 0 : index
    %133 = vector.load %arg9[%c0_92, %c1_93, %c0_94, %c0_95] : memref<1x4x8x32xf32, #tpu.memory_space<vmem>>, vector<1x1x8x32xf32>
    %134 = vector.shape_cast %133 : vector<1x1x8x32xf32> to vector<8x32xf32>
    %cst_96 = arith.constant dense<0.000000e+00> : vector<16x32xf32>
    %135 = tpu.matmul %132, %134, %cst_96 {dimension_numbers = #tpu.dot_dimension_numbers<[1], [0], [0], [1], [0, 0, 1, 1], [], []>} : vector<16x8xf32>, vector<8x32xf32>, vector<16x32xf32> -> vector<16x32xf32>
    %136 = arith.addf %70, %135 : vector<16x32xf32>
    %c0_97 = arith.constant 0 : index
    %c2 = arith.constant 2 : index
    %c0_98 = arith.constant 0 : index
    %c0_99 = arith.constant 0 : index
    %137 = vector.load %arg3[%c0_97, %c2, %c0_98, %c0_99] : memref<1x4x32x8xf32, #tpu.memory_space<vmem>>, vector<1x1x32x8xf32>
    %138 = vector.shape_cast %137 : vector<1x1x32x8xf32> to vector<32x8xf32>
    %cst_100 = arith.constant dense<0.000000e+00> : vector<16x8xf32>
    %139 = tpu.matmul %3, %138, %cst_100 {dimension_numbers = #tpu.dot_dimension_numbers<[1], [0], [0], [1], [0, 0, 1, 1], [], []>} : vector<16x32xf32>, vector<32x8xf32>, vector<16x8xf32> -> vector<16x8xf32>
    %c0_101 = arith.constant 0 : index
    %c2_102 = arith.constant 2 : index
    %c0_103 = arith.constant 0 : index
    %c0_104 = arith.constant 0 : index
    %140 = vector.load %arg6[%c0_101, %c2_102, %c0_103, %c0_104] : memref<1x4x1x8xf32, #tpu.memory_space<vmem>>, vector<1x1x1x8xf32>
    %141 = vector.shape_cast %140 : vector<1x1x1x8xf32> to vector<1x8xf32>
    %142 = vector.broadcast %141 : vector<1x8xf32> to vector<16x8xf32>
    %143 = arith.addf %139, %142 : vector<16x8xf32>
    %c0_105 = arith.constant 0 : index
    %c2_106 = arith.constant 2 : index
    %c0_107 = arith.constant 0 : index
    %c0_108 = arith.constant 0 : index
    %144 = vector.load %arg4[%c0_105, %c2_106, %c0_107, %c0_108] : memref<1x4x32x8xf32, #tpu.memory_space<vmem>>, vector<1x1x32x8xf32>
    %145 = vector.shape_cast %144 : vector<1x1x32x8xf32> to vector<32x8xf32>
    %cst_109 = arith.constant dense<0.000000e+00> : vector<16x8xf32>
    %146 = tpu.matmul %3, %145, %cst_109 {dimension_numbers = #tpu.dot_dimension_numbers<[1], [0], [0], [1], [0, 0, 1, 1], [], []>} : vector<16x32xf32>, vector<32x8xf32>, vector<16x8xf32> -> vector<16x8xf32>
    %c0_110 = arith.constant 0 : index
    %c2_111 = arith.constant 2 : index
    %c0_112 = arith.constant 0 : index
    %c0_113 = arith.constant 0 : index
    %147 = vector.load %arg7[%c0_110, %c2_111, %c0_112, %c0_113] : memref<1x4x1x8xf32, #tpu.memory_space<vmem>>, vector<1x1x1x8xf32>
    %148 = vector.shape_cast %147 : vector<1x1x1x8xf32> to vector<1x8xf32>
    %149 = vector.broadcast %148 : vector<1x8xf32> to vector<16x8xf32>
    %150 = arith.addf %146, %149 : vector<16x8xf32>
    %c0_114 = arith.constant 0 : index
    %c2_115 = arith.constant 2 : index
    %c0_116 = arith.constant 0 : index
    %c0_117 = arith.constant 0 : index
    %151 = vector.load %arg5[%c0_114, %c2_115, %c0_116, %c0_117] : memref<1x4x32x8xf32, #tpu.memory_space<vmem>>, vector<1x1x32x8xf32>
    %152 = vector.shape_cast %151 : vector<1x1x32x8xf32> to vector<32x8xf32>
    %cst_118 = arith.constant dense<0.000000e+00> : vector<16x8xf32>
    %153 = tpu.matmul %3, %152, %cst_118 {dimension_numbers = #tpu.dot_dimension_numbers<[1], [0], [0], [1], [0, 0, 1, 1], [], []>} : vector<16x32xf32>, vector<32x8xf32>, vector<16x8xf32> -> vector<16x8xf32>
    %c0_119 = arith.constant 0 : index
    %c2_120 = arith.constant 2 : index
    %c0_121 = arith.constant 0 : index
    %c0_122 = arith.constant 0 : index
    %154 = vector.load %arg8[%c0_119, %c2_120, %c0_121, %c0_122] : memref<1x4x1x8xf32, #tpu.memory_space<vmem>>, vector<1x1x1x8xf32>
    %155 = vector.shape_cast %154 : vector<1x1x1x8xf32> to vector<1x8xf32>
    %156 = vector.broadcast %155 : vector<1x8xf32> to vector<16x8xf32>
    %157 = arith.addf %153, %156 : vector<16x8xf32>
    %158 = vector.extract_strided_slice %143 {offsets = [0, 0], sizes = [8, 8], strides = [1, 1]} : vector<16x8xf32> to vector<8x8xf32>
    %159 = vector.extract_strided_slice %150 {offsets = [0, 0], sizes = [8, 8], strides = [1, 1]} : vector<16x8xf32> to vector<8x8xf32>
    %160 = vector.extract_strided_slice %157 {offsets = [0, 0], sizes = [8, 8], strides = [1, 1]} : vector<16x8xf32> to vector<8x8xf32>
    %cst_123 = arith.constant dense<0.000000e+00> : vector<8x8xf32>
    %161 = tpu.matmul %158, %159, %cst_123 {dimension_numbers = #tpu.dot_dimension_numbers<[1], [1], [0], [0], [0, 0, 1, 0], [], []>} : vector<8x8xf32>, vector<8x8xf32>, vector<8x8xf32> -> vector<8x8xf32>
    %cst_124 = arith.constant 0.353553385 : f32
    %162 = vector.broadcast %cst_124 : f32 to vector<8x8xf32>
    %163 = arith.mulf %161, %162 : vector<8x8xf32>
    %c0_125 = arith.constant 0 : index
    %c0_126 = arith.constant 0 : index
    %c0_127 = arith.constant 0 : index
    %164 = vector.load %arg2[%c0_125, %c0_126, %c0_127] : memref<2x1x8xf32, #tpu.memory_space<vmem>>, vector<1x1x8xf32>
    %165 = vector.shape_cast %164 : vector<1x1x8xf32> to vector<1x8xf32>
    %166 = vector.broadcast %165 : vector<1x8xf32> to vector<8x8xf32>
    %167 = arith.addf %163, %166 : vector<8x8xf32>
    %cst_128 = arith.constant dense<0xFF800000> : vector<8xf32>
    %168 = vector.multi_reduction <maximumf>, %167, %cst_128 [1] : vector<8x8xf32> to vector<8xf32>
    %169 = vector.shape_cast %168 : vector<8xf32> to vector<8x1xf32>
    %170 = vector.broadcast %169 : vector<8x1xf32> to vector<8x8xf32>
    %171 = arith.subf %167, %170 : vector<8x8xf32>
    %172 = math.exp %171 : vector<8x8xf32>
    %cst_129 = arith.constant dense<0.000000e+00> : vector<8xf32>
    %173 = vector.multi_reduction <add>, %172, %cst_129 [1] : vector<8x8xf32> to vector<8xf32>
    %174 = vector.shape_cast %173 : vector<8xf32> to vector<8x1xf32>
    %175 = vector.broadcast %174 : vector<8x1xf32> to vector<8x8xf32>
    %176 = arith.divf %172, %175 : vector<8x8xf32>
    %cst_130 = arith.constant dense<0.000000e+00> : vector<8x8xf32>
    %177 = tpu.matmul %176, %160, %cst_130 {dimension_numbers = #tpu.dot_dimension_numbers<[1], [0], [0], [1], [0, 0, 1, 1], [], []>} : vector<8x8xf32>, vector<8x8xf32>, vector<8x8xf32> -> vector<8x8xf32>
    %178 = vector.extract_strided_slice %143 {offsets = [8, 0], sizes = [8, 8], strides = [1, 1]} : vector<16x8xf32> to vector<8x8xf32>
    %179 = vector.extract_strided_slice %150 {offsets = [8, 0], sizes = [8, 8], strides = [1, 1]} : vector<16x8xf32> to vector<8x8xf32>
    %180 = vector.extract_strided_slice %157 {offsets = [8, 0], sizes = [8, 8], strides = [1, 1]} : vector<16x8xf32> to vector<8x8xf32>
    %cst_131 = arith.constant dense<0.000000e+00> : vector<8x8xf32>
    %181 = tpu.matmul %178, %179, %cst_131 {dimension_numbers = #tpu.dot_dimension_numbers<[1], [1], [0], [0], [0, 0, 1, 0], [], []>} : vector<8x8xf32>, vector<8x8xf32>, vector<8x8xf32> -> vector<8x8xf32>
    %cst_132 = arith.constant 0.353553385 : f32
    %182 = vector.broadcast %cst_132 : f32 to vector<8x8xf32>
    %183 = arith.mulf %181, %182 : vector<8x8xf32>
    %c1_133 = arith.constant 1 : index
    %c0_134 = arith.constant 0 : index
    %c0_135 = arith.constant 0 : index
    %184 = vector.load %arg2[%c1_133, %c0_134, %c0_135] : memref<2x1x8xf32, #tpu.memory_space<vmem>>, vector<1x1x8xf32>
    %185 = vector.shape_cast %184 : vector<1x1x8xf32> to vector<1x8xf32>
    %186 = vector.broadcast %185 : vector<1x8xf32> to vector<8x8xf32>
    %187 = arith.addf %183, %186 : vector<8x8xf32>
    %cst_136 = arith.constant dense<0xFF800000> : vector<8xf32>
    %188 = vector.multi_reduction <maximumf>, %187, %cst_136 [1] : vector<8x8xf32> to vector<8xf32>
    %189 = vector.shape_cast %188 : vector<8xf32> to vector<8x1xf32>
    %190 = vector.broadcast %189 : vector<8x1xf32> to vector<8x8xf32>
    %191 = arith.subf %187, %190 : vector<8x8xf32>
    %192 = math.exp %191 : vector<8x8xf32>
    %cst_137 = arith.constant dense<0.000000e+00> : vector<8xf32>
    %193 = vector.multi_reduction <add>, %192, %cst_137 [1] : vector<8x8xf32> to vector<8xf32>
    %194 = vector.shape_cast %193 : vector<8xf32> to vector<8x1xf32>
    %195 = vector.broadcast %194 : vector<8x1xf32> to vector<8x8xf32>
    %196 = arith.divf %192, %195 : vector<8x8xf32>
    %cst_138 = arith.constant dense<0.000000e+00> : vector<8x8xf32>
    %197 = tpu.matmul %196, %180, %cst_138 {dimension_numbers = #tpu.dot_dimension_numbers<[1], [0], [0], [1], [0, 0, 1, 1], [], []>} : vector<8x8xf32>, vector<8x8xf32>, vector<8x8xf32> -> vector<8x8xf32>
    %198 = tpu.concatenate %177, %197 in 0 : vector<8x8xf32>, vector<8x8xf32> -> vector<16x8xf32>
    %c0_139 = arith.constant 0 : index
    %c2_140 = arith.constant 2 : index
    %c0_141 = arith.constant 0 : index
    %c0_142 = arith.constant 0 : index
    %199 = vector.load %arg9[%c0_139, %c2_140, %c0_141, %c0_142] : memref<1x4x8x32xf32, #tpu.memory_space<vmem>>, vector<1x1x8x32xf32>
    %200 = vector.shape_cast %199 : vector<1x1x8x32xf32> to vector<8x32xf32>
    %cst_143 = arith.constant dense<0.000000e+00> : vector<16x32xf32>
    %201 = tpu.matmul %198, %200, %cst_143 {dimension_numbers = #tpu.dot_dimension_numbers<[1], [0], [0], [1], [0, 0, 1, 1], [], []>} : vector<16x8xf32>, vector<8x32xf32>, vector<16x32xf32> -> vector<16x32xf32>
    %202 = arith.addf %136, %201 : vector<16x32xf32>
    %c0_144 = arith.constant 0 : index
    %c3 = arith.constant 3 : index
    %c0_145 = arith.constant 0 : index
    %c0_146 = arith.constant 0 : index
    %203 = vector.load %arg3[%c0_144, %c3, %c0_145, %c0_146] : memref<1x4x32x8xf32, #tpu.memory_space<vmem>>, vector<1x1x32x8xf32>
    %204 = vector.shape_cast %203 : vector<1x1x32x8xf32> to vector<32x8xf32>
    %cst_147 = arith.constant dense<0.000000e+00> : vector<16x8xf32>
    %205 = tpu.matmul %3, %204, %cst_147 {dimension_numbers = #tpu.dot_dimension_numbers<[1], [0], [0], [1], [0, 0, 1, 1], [], []>} : vector<16x32xf32>, vector<32x8xf32>, vector<16x8xf32> -> vector<16x8xf32>
    %c0_148 = arith.constant 0 : index
    %c3_149 = arith.constant 3 : index
    %c0_150 = arith.constant 0 : index
    %c0_151 = arith.constant 0 : index
    %206 = vector.load %arg6[%c0_148, %c3_149, %c0_150, %c0_151] : memref<1x4x1x8xf32, #tpu.memory_space<vmem>>, vector<1x1x1x8xf32>
    %207 = vector.shape_cast %206 : vector<1x1x1x8xf32> to vector<1x8xf32>
    %208 = vector.broadcast %207 : vector<1x8xf32> to vector<16x8xf32>
    %209 = arith.addf %205, %208 : vector<16x8xf32>
    %c0_152 = arith.constant 0 : index
    %c3_153 = arith.constant 3 : index
    %c0_154 = arith.constant 0 : index
    %c0_155 = arith.constant 0 : index
    %210 = vector.load %arg4[%c0_152, %c3_153, %c0_154, %c0_155] : memref<1x4x32x8xf32, #tpu.memory_space<vmem>>, vector<1x1x32x8xf32>
    %211 = vector.shape_cast %210 : vector<1x1x32x8xf32> to vector<32x8xf32>
    %cst_156 = arith.constant dense<0.000000e+00> : vector<16x8xf32>
    %212 = tpu.matmul %3, %211, %cst_156 {dimension_numbers = #tpu.dot_dimension_numbers<[1], [0], [0], [1], [0, 0, 1, 1], [], []>} : vector<16x32xf32>, vector<32x8xf32>, vector<16x8xf32> -> vector<16x8xf32>
    %c0_157 = arith.constant 0 : index
    %c3_158 = arith.constant 3 : index
    %c0_159 = arith.constant 0 : index
    %c0_160 = arith.constant 0 : index
    %213 = vector.load %arg7[%c0_157, %c3_158, %c0_159, %c0_160] : memref<1x4x1x8xf32, #tpu.memory_space<vmem>>, vector<1x1x1x8xf32>
    %214 = vector.shape_cast %213 : vector<1x1x1x8xf32> to vector<1x8xf32>
    %215 = vector.broadcast %214 : vector<1x8xf32> to vector<16x8xf32>
    %216 = arith.addf %212, %215 : vector<16x8xf32>
    %c0_161 = arith.constant 0 : index
    %c3_162 = arith.constant 3 : index
    %c0_163 = arith.constant 0 : index
    %c0_164 = arith.constant 0 : index
    %217 = vector.load %arg5[%c0_161, %c3_162, %c0_163, %c0_164] : memref<1x4x32x8xf32, #tpu.memory_space<vmem>>, vector<1x1x32x8xf32>
    %218 = vector.shape_cast %217 : vector<1x1x32x8xf32> to vector<32x8xf32>
    %cst_165 = arith.constant dense<0.000000e+00> : vector<16x8xf32>
    %219 = tpu.matmul %3, %218, %cst_165 {dimension_numbers = #tpu.dot_dimension_numbers<[1], [0], [0], [1], [0, 0, 1, 1], [], []>} : vector<16x32xf32>, vector<32x8xf32>, vector<16x8xf32> -> vector<16x8xf32>
    %c0_166 = arith.constant 0 : index
    %c3_167 = arith.constant 3 : index
    %c0_168 = arith.constant 0 : index
    %c0_169 = arith.constant 0 : index
    %220 = vector.load %arg8[%c0_166, %c3_167, %c0_168, %c0_169] : memref<1x4x1x8xf32, #tpu.memory_space<vmem>>, vector<1x1x1x8xf32>
    %221 = vector.shape_cast %220 : vector<1x1x1x8xf32> to vector<1x8xf32>
    %222 = vector.broadcast %221 : vector<1x8xf32> to vector<16x8xf32>
    %223 = arith.addf %219, %222 : vector<16x8xf32>
    %224 = vector.extract_strided_slice %209 {offsets = [0, 0], sizes = [8, 8], strides = [1, 1]} : vector<16x8xf32> to vector<8x8xf32>
    %225 = vector.extract_strided_slice %216 {offsets = [0, 0], sizes = [8, 8], strides = [1, 1]} : vector<16x8xf32> to vector<8x8xf32>
    %226 = vector.extract_strided_slice %223 {offsets = [0, 0], sizes = [8, 8], strides = [1, 1]} : vector<16x8xf32> to vector<8x8xf32>
    %cst_170 = arith.constant dense<0.000000e+00> : vector<8x8xf32>
    %227 = tpu.matmul %224, %225, %cst_170 {dimension_numbers = #tpu.dot_dimension_numbers<[1], [1], [0], [0], [0, 0, 1, 0], [], []>} : vector<8x8xf32>, vector<8x8xf32>, vector<8x8xf32> -> vector<8x8xf32>
    %cst_171 = arith.constant 0.353553385 : f32
    %228 = vector.broadcast %cst_171 : f32 to vector<8x8xf32>
    %229 = arith.mulf %227, %228 : vector<8x8xf32>
    %c0_172 = arith.constant 0 : index
    %c0_173 = arith.constant 0 : index
    %c0_174 = arith.constant 0 : index
    %230 = vector.load %arg2[%c0_172, %c0_173, %c0_174] : memref<2x1x8xf32, #tpu.memory_space<vmem>>, vector<1x1x8xf32>
    %231 = vector.shape_cast %230 : vector<1x1x8xf32> to vector<1x8xf32>
    %232 = vector.broadcast %231 : vector<1x8xf32> to vector<8x8xf32>
    %233 = arith.addf %229, %232 : vector<8x8xf32>
    %cst_175 = arith.constant dense<0xFF800000> : vector<8xf32>
    %234 = vector.multi_reduction <maximumf>, %233, %cst_175 [1] : vector<8x8xf32> to vector<8xf32>
    %235 = vector.shape_cast %234 : vector<8xf32> to vector<8x1xf32>
    %236 = vector.broadcast %235 : vector<8x1xf32> to vector<8x8xf32>
    %237 = arith.subf %233, %236 : vector<8x8xf32>
    %238 = math.exp %237 : vector<8x8xf32>
    %cst_176 = arith.constant dense<0.000000e+00> : vector<8xf32>
    %239 = vector.multi_reduction <add>, %238, %cst_176 [1] : vector<8x8xf32> to vector<8xf32>
    %240 = vector.shape_cast %239 : vector<8xf32> to vector<8x1xf32>
    %241 = vector.broadcast %240 : vector<8x1xf32> to vector<8x8xf32>
    %242 = arith.divf %238, %241 : vector<8x8xf32>
    %cst_177 = arith.constant dense<0.000000e+00> : vector<8x8xf32>
    %243 = tpu.matmul %242, %226, %cst_177 {dimension_numbers = #tpu.dot_dimension_numbers<[1], [0], [0], [1], [0, 0, 1, 1], [], []>} : vector<8x8xf32>, vector<8x8xf32>, vector<8x8xf32> -> vector<8x8xf32>
    %244 = vector.extract_strided_slice %209 {offsets = [8, 0], sizes = [8, 8], strides = [1, 1]} : vector<16x8xf32> to vector<8x8xf32>
    %245 = vector.extract_strided_slice %216 {offsets = [8, 0], sizes = [8, 8], strides = [1, 1]} : vector<16x8xf32> to vector<8x8xf32>
    %246 = vector.extract_strided_slice %223 {offsets = [8, 0], sizes = [8, 8], strides = [1, 1]} : vector<16x8xf32> to vector<8x8xf32>
    %cst_178 = arith.constant dense<0.000000e+00> : vector<8x8xf32>
    %247 = tpu.matmul %244, %245, %cst_178 {dimension_numbers = #tpu.dot_dimension_numbers<[1], [1], [0], [0], [0, 0, 1, 0], [], []>} : vector<8x8xf32>, vector<8x8xf32>, vector<8x8xf32> -> vector<8x8xf32>
    %cst_179 = arith.constant 0.353553385 : f32
    %248 = vector.broadcast %cst_179 : f32 to vector<8x8xf32>
    %249 = arith.mulf %247, %248 : vector<8x8xf32>
    %c1_180 = arith.constant 1 : index
    %c0_181 = arith.constant 0 : index
    %c0_182 = arith.constant 0 : index
    %250 = vector.load %arg2[%c1_180, %c0_181, %c0_182] : memref<2x1x8xf32, #tpu.memory_space<vmem>>, vector<1x1x8xf32>
    %251 = vector.shape_cast %250 : vector<1x1x8xf32> to vector<1x8xf32>
    %252 = vector.broadcast %251 : vector<1x8xf32> to vector<8x8xf32>
    %253 = arith.addf %249, %252 : vector<8x8xf32>
    %cst_183 = arith.constant dense<0xFF800000> : vector<8xf32>
    %254 = vector.multi_reduction <maximumf>, %253, %cst_183 [1] : vector<8x8xf32> to vector<8xf32>
    %255 = vector.shape_cast %254 : vector<8xf32> to vector<8x1xf32>
    %256 = vector.broadcast %255 : vector<8x1xf32> to vector<8x8xf32>
    %257 = arith.subf %253, %256 : vector<8x8xf32>
    %258 = math.exp %257 : vector<8x8xf32>
    %cst_184 = arith.constant dense<0.000000e+00> : vector<8xf32>
    %259 = vector.multi_reduction <add>, %258, %cst_184 [1] : vector<8x8xf32> to vector<8xf32>
    %260 = vector.shape_cast %259 : vector<8xf32> to vector<8x1xf32>
    %261 = vector.broadcast %260 : vector<8x1xf32> to vector<8x8xf32>
    %262 = arith.divf %258, %261 : vector<8x8xf32>
    %cst_185 = arith.constant dense<0.000000e+00> : vector<8x8xf32>
    %263 = tpu.matmul %262, %246, %cst_185 {dimension_numbers = #tpu.dot_dimension_numbers<[1], [0], [0], [1], [0, 0, 1, 1], [], []>} : vector<8x8xf32>, vector<8x8xf32>, vector<8x8xf32> -> vector<8x8xf32>
    %264 = tpu.concatenate %243, %263 in 0 : vector<8x8xf32>, vector<8x8xf32> -> vector<16x8xf32>
    %c0_186 = arith.constant 0 : index
    %c3_187 = arith.constant 3 : index
    %c0_188 = arith.constant 0 : index
    %c0_189 = arith.constant 0 : index
    %265 = vector.load %arg9[%c0_186, %c3_187, %c0_188, %c0_189] : memref<1x4x8x32xf32, #tpu.memory_space<vmem>>, vector<1x1x8x32xf32>
    %266 = vector.shape_cast %265 : vector<1x1x8x32xf32> to vector<8x32xf32>
    %cst_190 = arith.constant dense<0.000000e+00> : vector<16x32xf32>
    %267 = tpu.matmul %264, %266, %cst_190 {dimension_numbers = #tpu.dot_dimension_numbers<[1], [0], [0], [1], [0, 0, 1, 1], [], []>} : vector<16x8xf32>, vector<8x32xf32>, vector<16x32xf32> -> vector<16x32xf32>
    %268 = arith.addf %202, %267 : vector<16x32xf32>
    %c0_191 = arith.constant 0 : index
    %c0_192 = arith.constant 0 : index
    %c0_193 = arith.constant 0 : index
    %269 = vector.load %arg10[%c0_191, %c0_192, %c0_193] : memref<1x1x32xf32, #tpu.memory_space<vmem>>, vector<1x1x32xf32>
    %270 = vector.shape_cast %269 : vector<1x1x32xf32> to vector<1x32xf32>
    %271 = vector.broadcast %270 : vector<1x32xf32> to vector<16x32xf32>
    %272 = arith.addf %268, %271 : vector<16x32xf32>
    %273 = arith.addf %3, %272 : vector<16x32xf32>
    %c0_194 = arith.constant 0 : index
    %c0_195 = arith.constant 0 : index
    %c0_196 = arith.constant 0 : index
    %274 = vector.load %arg11[%c0_194, %c0_195, %c0_196] : memref<1x1x32xf32, #tpu.memory_space<vmem>>, vector<1x1x32xf32>
    %275 = vector.shape_cast %274 : vector<1x1x32xf32> to vector<1x32xf32>
    %c0_197 = arith.constant 0 : index
    %c0_198 = arith.constant 0 : index
    %c0_199 = arith.constant 0 : index
    %276 = vector.load %arg12[%c0_197, %c0_198, %c0_199] : memref<1x1x32xf32, #tpu.memory_space<vmem>>, vector<1x1x32xf32>
    %277 = vector.shape_cast %276 : vector<1x1x32xf32> to vector<1x32xf32>
    %cst_200 = arith.constant dense<0.000000e+00> : vector<16xf32>
    %278 = vector.multi_reduction <add>, %273, %cst_200 [1] : vector<16x32xf32> to vector<16xf32>
    %279 = vector.shape_cast %278 : vector<16xf32> to vector<16x1xf32>
    %cst_201 = arith.constant 3.200000e+01 : f32
    %280 = vector.broadcast %cst_201 : f32 to vector<16x1xf32>
    %281 = arith.divf %279, %280 : vector<16x1xf32>
    %282 = vector.broadcast %281 : vector<16x1xf32> to vector<16x32xf32>
    %283 = arith.subf %273, %282 : vector<16x32xf32>
    %284 = arith.mulf %283, %283 : vector<16x32xf32>
    %cst_202 = arith.constant dense<0.000000e+00> : vector<16xf32>
    %285 = vector.multi_reduction <add>, %284, %cst_202 [1] : vector<16x32xf32> to vector<16xf32>
    %286 = vector.shape_cast %285 : vector<16xf32> to vector<16x1xf32>
    %cst_203 = arith.constant 3.200000e+01 : f32
    %287 = vector.broadcast %cst_203 : f32 to vector<16x1xf32>
    %288 = arith.divf %286, %287 : vector<16x1xf32>
    %289 = vector.broadcast %281 : vector<16x1xf32> to vector<16x32xf32>
    %290 = arith.subf %273, %289 : vector<16x32xf32>
    %cst_204 = arith.constant 9.99999996E-13 : f32
    %291 = vector.broadcast %cst_204 : f32 to vector<16x1xf32>
    %292 = arith.addf %288, %291 : vector<16x1xf32>
    %293 = math.rsqrt %292 : vector<16x1xf32>
    %294 = vector.broadcast %293 : vector<16x1xf32> to vector<16x32xf32>
    %295 = arith.mulf %290, %294 : vector<16x32xf32>
    %296 = vector.broadcast %275 : vector<1x32xf32> to vector<16x32xf32>
    %297 = arith.mulf %295, %296 : vector<16x32xf32>
    %298 = vector.broadcast %277 : vector<1x32xf32> to vector<16x32xf32>
    %299 = arith.addf %297, %298 : vector<16x32xf32>
    %c0_205 = arith.constant 0 : index
    %c0_206 = arith.constant 0 : index
    %c0_207 = arith.constant 0 : index
    %300 = vector.load %arg13[%c0_205, %c0_206, %c0_207] : memref<1x32x64xf32, #tpu.memory_space<vmem>>, vector<1x32x64xf32>
    %301 = vector.shape_cast %300 : vector<1x32x64xf32> to vector<32x64xf32>
    %cst_208 = arith.constant dense<0.000000e+00> : vector<16x64xf32>
    %302 = tpu.matmul %299, %301, %cst_208 {dimension_numbers = #tpu.dot_dimension_numbers<[1], [0], [0], [1], [0, 0, 1, 1], [], []>} : vector<16x32xf32>, vector<32x64xf32>, vector<16x64xf32> -> vector<16x64xf32>
    %c0_209 = arith.constant 0 : index
    %c0_210 = arith.constant 0 : index
    %c0_211 = arith.constant 0 : index
    %303 = vector.load %arg14[%c0_209, %c0_210, %c0_211] : memref<1x1x64xf32, #tpu.memory_space<vmem>>, vector<1x1x64xf32>
    %304 = vector.shape_cast %303 : vector<1x1x64xf32> to vector<1x64xf32>
    %305 = vector.broadcast %304 : vector<1x64xf32> to vector<16x64xf32>
    %306 = arith.addf %302, %305 : vector<16x64xf32>
    %307 = arith.mulf %306, %306 : vector<16x64xf32>
    %308 = arith.mulf %306, %307 : vector<16x64xf32>
    %cst_212 = arith.constant 4.471500e-02 : f32
    %309 = vector.broadcast %cst_212 : f32 to vector<16x64xf32>
    %310 = arith.mulf %309, %308 : vector<16x64xf32>
    %311 = arith.addf %306, %310 : vector<16x64xf32>
    %cst_213 = arith.constant 0.797884583 : f32
    %312 = vector.broadcast %cst_213 : f32 to vector<16x64xf32>
    %313 = arith.mulf %312, %311 : vector<16x64xf32>
    %314 = math.tanh %313 : vector<16x64xf32>
    %cst_214 = arith.constant 1.000000e+00 : f32
    %315 = vector.broadcast %cst_214 : f32 to vector<16x64xf32>
    %316 = arith.addf %315, %314 : vector<16x64xf32>
    %cst_215 = arith.constant 5.000000e-01 : f32
    %317 = vector.broadcast %cst_215 : f32 to vector<16x64xf32>
    %318 = arith.mulf %317, %316 : vector<16x64xf32>
    %319 = arith.mulf %306, %318 : vector<16x64xf32>
    %c0_216 = arith.constant 0 : index
    %c0_217 = arith.constant 0 : index
    %c0_218 = arith.constant 0 : index
    %320 = vector.load %arg15[%c0_216, %c0_217, %c0_218] : memref<1x64x32xf32, #tpu.memory_space<vmem>>, vector<1x64x32xf32>
    %321 = vector.shape_cast %320 : vector<1x64x32xf32> to vector<64x32xf32>
    %cst_219 = arith.constant dense<0.000000e+00> : vector<16x32xf32>
    %322 = tpu.matmul %319, %321, %cst_219 {dimension_numbers = #tpu.dot_dimension_numbers<[1], [0], [0], [1], [0, 0, 1, 1], [], []>} : vector<16x64xf32>, vector<64x32xf32>, vector<16x32xf32> -> vector<16x32xf32>
    %c0_220 = arith.constant 0 : index
    %c0_221 = arith.constant 0 : index
    %c0_222 = arith.constant 0 : index
    %323 = vector.load %arg16[%c0_220, %c0_221, %c0_222] : memref<1x1x32xf32, #tpu.memory_space<vmem>>, vector<1x1x32xf32>
    %324 = vector.shape_cast %323 : vector<1x1x32xf32> to vector<1x32xf32>
    %325 = vector.broadcast %324 : vector<1x32xf32> to vector<16x32xf32>
    %326 = arith.addf %322, %325 : vector<16x32xf32>
    %327 = arith.addf %299, %326 : vector<16x32xf32>
    %c0_223 = arith.constant 0 : index
    %c0_224 = arith.constant 0 : index
    %c0_225 = arith.constant 0 : index
    %328 = vector.load %arg17[%c0_223, %c0_224, %c0_225] : memref<1x1x32xf32, #tpu.memory_space<vmem>>, vector<1x1x32xf32>
    %329 = vector.shape_cast %328 : vector<1x1x32xf32> to vector<1x32xf32>
    %c0_226 = arith.constant 0 : index
    %c0_227 = arith.constant 0 : index
    %c0_228 = arith.constant 0 : index
    %330 = vector.load %arg18[%c0_226, %c0_227, %c0_228] : memref<1x1x32xf32, #tpu.memory_space<vmem>>, vector<1x1x32xf32>
    %331 = vector.shape_cast %330 : vector<1x1x32xf32> to vector<1x32xf32>
    %cst_229 = arith.constant dense<0.000000e+00> : vector<16xf32>
    %332 = vector.multi_reduction <add>, %327, %cst_229 [1] : vector<16x32xf32> to vector<16xf32>
    %333 = vector.shape_cast %332 : vector<16xf32> to vector<16x1xf32>
    %cst_230 = arith.constant 3.200000e+01 : f32
    %334 = vector.broadcast %cst_230 : f32 to vector<16x1xf32>
    %335 = arith.divf %333, %334 : vector<16x1xf32>
    %336 = vector.broadcast %335 : vector<16x1xf32> to vector<16x32xf32>
    %337 = arith.subf %327, %336 : vector<16x32xf32>
    %338 = arith.mulf %337, %337 : vector<16x32xf32>
    %cst_231 = arith.constant dense<0.000000e+00> : vector<16xf32>
    %339 = vector.multi_reduction <add>, %338, %cst_231 [1] : vector<16x32xf32> to vector<16xf32>
    %340 = vector.shape_cast %339 : vector<16xf32> to vector<16x1xf32>
    %cst_232 = arith.constant 3.200000e+01 : f32
    %341 = vector.broadcast %cst_232 : f32 to vector<16x1xf32>
    %342 = arith.divf %340, %341 : vector<16x1xf32>
    %343 = vector.broadcast %335 : vector<16x1xf32> to vector<16x32xf32>
    %344 = arith.subf %327, %343 : vector<16x32xf32>
    %cst_233 = arith.constant 9.99999996E-13 : f32
    %345 = vector.broadcast %cst_233 : f32 to vector<16x1xf32>
    %346 = arith.addf %342, %345 : vector<16x1xf32>
    %347 = math.rsqrt %346 : vector<16x1xf32>
    %348 = vector.broadcast %347 : vector<16x1xf32> to vector<16x32xf32>
    %349 = arith.mulf %344, %348 : vector<16x32xf32>
    %350 = vector.broadcast %329 : vector<1x32xf32> to vector<16x32xf32>
    %351 = arith.mulf %349, %350 : vector<16x32xf32>
    %352 = vector.broadcast %331 : vector<1x32xf32> to vector<16x32xf32>
    %353 = arith.addf %351, %352 : vector<16x32xf32>
    %c0_234 = arith.constant 0 : index
    %c0_235 = arith.constant 0 : index
    %354 = vector.load %arg19[%c0_234, %c0_235] : memref<16x32xf32, #tpu.memory_space<vmem>>, vector<16x32xf32>
    tpu.vector_store %arg19[%c0_234, %c0_235], %353 {strides = array<i32>} : memref<16x32xf32, #tpu.memory_space<vmem>>, vector<16x32xf32>,
    return
  }
  func.func @transform_0(%arg0: i32) -> (i32, i32) {
    %c0_i32 = arith.constant 0 : i32
    %c0_i32_0 = arith.constant 0 : i32
    %c0_i32_1 = arith.constant 0 : i32
    return %c0_i32, %c0_i32_0 : i32, i32
  }
  func.func @transform_1(%arg0: i32) -> (i32, i32, i32) {
    %c0_i32 = arith.constant 0 : i32
    %c0_i32_0 = arith.constant 0 : i32
    %c0_i32_1 = arith.constant 0 : i32
    %c0_i32_2 = arith.constant 0 : i32
    return %c0_i32, %c0_i32_0, %c0_i32_1 : i32, i32, i32
  }
  func.func @transform_2(%arg0: i32) -> (i32, i32, i32, i32) {
    %c0_i32 = arith.constant 0 : i32
    %c0_i32_0 = arith.constant 0 : i32
    %c0_i32_1 = arith.constant 0 : i32
    %c0_i32_2 = arith.constant 0 : i32
    return %arg0, %c0_i32, %c0_i32_0, %c0_i32_1 : i32, i32, i32, i32
  }
  func.func @transform_3(%arg0: i32) -> (i32, i32, i32, i32) {
    %c0_i32 = arith.constant 0 : i32
    %c0_i32_0 = arith.constant 0 : i32
    %c0_i32_1 = arith.constant 0 : i32
    %c0_i32_2 = arith.constant 0 : i32
    return %arg0, %c0_i32, %c0_i32_0, %c0_i32_1 : i32, i32, i32, i32
  }
  func.func @transform_4(%arg0: i32) -> (i32, i32, i32, i32) {
    %c0_i32 = arith.constant 0 : i32
    %c0_i32_0 = arith.constant 0 : i32
    %c0_i32_1 = arith.constant 0 : i32
    %c0_i32_2 = arith.constant 0 : i32
    return %arg0, %c0_i32, %c0_i32_0, %c0_i32_1 : i32, i32, i32, i32
  }
  func.func @transform_5(%arg0: i32) -> (i32, i32, i32, i32) {
    %c0_i32 = arith.constant 0 : i32
    %c0_i32_0 = arith.constant 0 : i32
    %c0_i32_1 = arith.constant 0 : i32
    %c0_i32_2 = arith.constant 0 : i32
    return %arg0, %c0_i32, %c0_i32_0, %c0_i32_1 : i32, i32, i32, i32
  }
  func.func @transform_6(%arg0: i32) -> (i32, i32, i32, i32) {
    %c0_i32 = arith.constant 0 : i32
    %c0_i32_0 = arith.constant 0 : i32
    %c0_i32_1 = arith.constant 0 : i32
    %c0_i32_2 = arith.constant 0 : i32
    return %arg0, %c0_i32, %c0_i32_0, %c0_i32_1 : i32, i32, i32, i32
  }
  func.func @transform_7(%arg0: i32) -> (i32, i32, i32, i32) {
    %c0_i32 = arith.constant 0 : i32
    %c0_i32_0 = arith.constant 0 : i32
    %c0_i32_1 = arith.constant 0 : i32
    %c0_i32_2 = arith.constant 0 : i32
    return %arg0, %c0_i32, %c0_i32_0, %c0_i32_1 : i32, i32, i32, i32
  }
  func.func @transform_8(%arg0: i32) -> (i32, i32, i32, i32) {
    %c0_i32 = arith.constant 0 : i32
    %c0_i32_0 = arith.constant 0 : i32
    %c0_i32_1 = arith.constant 0 : i32
    %c0_i32_2 = arith.constant 0 : i32
    return %arg0, %c0_i32, %c0_i32_0, %c0_i32_1 : i32, i32, i32, i32
  }
  func.func @transform_9(%arg0: i32) -> (i32, i32, i32) {
    %c0_i32 = arith.constant 0 : i32
    %c0_i32_0 = arith.constant 0 : i32
    %c0_i32_1 = arith.constant 0 : i32
    return %arg0, %c0_i32, %c0_i32_0 : i32, i32, i32
  }
  func.func @transform_10(%arg0: i32) -> (i32, i32, i32) {
    %c0_i32 = arith.constant 0 : i32
    %c0_i32_0 = arith.constant 0 : i32
    %c0_i32_1 = arith.constant 0 : i32
    return %arg0, %c0_i32, %c0_i32_0 : i32, i32, i32
  }
  func.func @transform_11(%arg0: i32) -> (i32, i32, i32) {
    %c0_i32 = arith.constant 0 : i32
    %c0_i32_0 = arith.constant 0 : i32
    %c0_i32_1 = arith.constant 0 : i32
    return %arg0, %c0_i32, %c0_i32_0 : i32, i32, i32
  }
  func.func @transform_12(%arg0: i32) -> (i32, i32, i32) {
    %c0_i32 = arith.constant 0 : i32
    %c0_i32_0 = arith.constant 0 : i32
    %c0_i32_1 = arith.constant 0 : i32
    return %arg0, %c0_i32, %c0_i32_0 : i32, i32, i32
  }
  func.func @transform_13(%arg0: i32) -> (i32, i32, i32) {
    %c0_i32 = arith.constant 0 : i32
    %c0_i32_0 = arith.constant 0 : i32
    %c0_i32_1 = arith.constant 0 : i32
    return %arg0, %c0_i32, %c0_i32_0 : i32, i32, i32
  }
  func.func @transform_14(%arg0: i32) -> (i32, i32, i32) {
    %c0_i32 = arith.constant 0 : i32
    %c0_i32_0 = arith.constant 0 : i32
    %c0_i32_1 = arith.constant 0 : i32
    return %arg0, %c0_i32, %c0_i32_0 : i32, i32, i32
  }
  func.func @transform_15(%arg0: i32) -> (i32, i32, i32) {
    %c0_i32 = arith.constant 0 : i32
    %c0_i32_0 = arith.constant 0 : i32
    %c0_i32_1 = arith.constant 0 : i32
    return %arg0, %c0_i32, %c0_i32_0 : i32, i32, i32
  }
  func.func @transform_16(%arg0: i32) -> (i32, i32, i32) {
    %c0_i32 = arith.constant 0 : i32
    %c0_i32_0 = arith.constant 0 : i32
    %c0_i32_1 = arith.constant 0 : i32
    return %arg0, %c0_i32, %c0_i32_0 : i32, i32, i32
  }
  func.func @transform_17(%arg0: i32) -> (i32, i32, i32) {
    %c0_i32 = arith.constant 0 : i32
    %c0_i32_0 = arith.constant 0 : i32
    %c0_i32_1 = arith.constant 0 : i32
    return %arg0, %c0_i32, %c0_i32_0 : i32, i32, i32
  }
  func.func @transform_18(%arg0: i32) -> (i32, i32) {
    %c0_i32 = arith.constant 0 : i32
    %c0_i32_0 = arith.constant 0 : i32
    %c0_i32_1 = arith.constant 0 : i32
    return %c0_i32, %c0_i32_0 : i32, i32
  }
}

module attributes {stable_mosaic.version = 11 : i64} {
  func.func @kernel(%arg0: memref<32x8xf32, #tpu.memory_space<vmem>>, %arg1: memref<32x1xi32, #tpu.memory_space<vmem>>, %arg2: memref<1x4xf32, #tpu.memory_space<vmem>>) attributes {dimension_semantics = [], scalar_prefetch = 0 : i64, scratch_operands = 0 : i64, tpu.core_type = #tpu.core_type<tc>} {
    %c0 = arith.constant 0 : index
    %c0_0 = arith.constant 0 : index
    %0 = vector.load %arg0[%c0, %c0_0] : memref<32x8xf32, #tpu.memory_space<vmem>>, vector<32x8xf32>
    %c0_1 = arith.constant 0 : index
    %c0_2 = arith.constant 0 : index
    %1 = vector.load %arg1[%c0_1, %c0_2] : memref<32x1xi32, #tpu.memory_space<vmem>>, vector<32x1xi32>
    %2 = tpu.iota {dimensions = array<i32: 1>} : vector<32x8xi32>
    %cst = arith.constant dense<0xFF800000> : vector<32xf32>
    %3 = vector.multi_reduction <maximumf>, %0, %cst [1] : vector<32x8xf32> to vector<32xf32>
    %4 = vector.shape_cast %3 : vector<32xf32> to vector<32x1xf32>
    %5 = vector.broadcast %4 : vector<32x1xf32> to vector<32x8xf32>
    %6 = arith.subf %0, %5 : vector<32x8xf32>
    %7 = math.exp %6 : vector<32x8xf32>
    %cst_3 = arith.constant dense<0.000000e+00> : vector<32xf32>
    %8 = vector.multi_reduction <add>, %7, %cst_3 [1] : vector<32x8xf32> to vector<32xf32>
    %9 = vector.shape_cast %8 : vector<32xf32> to vector<32x1xf32>
    %10 = math.log %9 : vector<32x1xf32>
    %11 = arith.addf %10, %4 : vector<32x1xf32>
    %12 = vector.broadcast %1 : vector<32x1xi32> to vector<32x8xi32>
    %13 = arith.cmpi eq, %2, %12 : vector<32x8xi32>
    %cst_4 = arith.constant 0.000000e+00 : f32
    %14 = vector.broadcast %cst_4 : f32 to vector<32x8xf32>
    %15 = arith.select %13, %0, %14 : vector<32x8xi1>, vector<32x8xf32>
    %cst_5 = arith.constant dense<0.000000e+00> : vector<32xf32>
    %16 = vector.multi_reduction <add>, %15, %cst_5 [1] : vector<32x8xf32> to vector<32xf32>
    %17 = vector.shape_cast %16 : vector<32xf32> to vector<32x1xf32>
    %c0_i32 = arith.constant 0 : i32
    %18 = vector.broadcast %c0_i32 : i32 to vector<32x1xi32>
    %19 = arith.cmpi sge, %1, %18 : vector<32x1xi32>
    %20 = arith.extui %19 : vector<32x1xi1> to vector<32x1xi32>
    %21 = arith.sitofp %20 : vector<32x1xi32> to vector<32x1xf32>
    %22 = arith.subf %11, %17 : vector<32x1xf32>
    %23 = arith.mulf %22, %21 : vector<32x1xf32>
    %24 = tpu.iota {dimensions = array<i32: 0>} : vector<32x4xi32>
    %25 = tpu.iota {dimensions = array<i32: 1>} : vector<32x4xi32>
    %c8_i32 = arith.constant 8 : i32
    %26 = vector.broadcast %c8_i32 : i32 to vector<32x4xi32>
    %27 = arith.muli %25, %26 : vector<32x4xi32>
    %28 = arith.cmpi sge, %24, %27 : vector<32x4xi32>
    %c1_i32 = arith.constant 1 : i32
    %29 = vector.broadcast %c1_i32 : i32 to vector<32x4xi32>
    %30 = arith.addi %25, %29 : vector<32x4xi32>
    %c8_i32_6 = arith.constant 8 : i32
    %31 = vector.broadcast %c8_i32_6 : i32 to vector<32x4xi32>
    %32 = arith.muli %30, %31 : vector<32x4xi32>
    %33 = arith.cmpi slt, %24, %32 : vector<32x4xi32>
    %34 = arith.andi %28, %33 : vector<32x4xi1>
    %35 = arith.extui %34 : vector<32x4xi1> to vector<32x4xi32>
    %36 = arith.sitofp %35 : vector<32x4xi32> to vector<32x4xf32>
    %37 = vector.broadcast %23 : vector<32x1xf32> to vector<32x4xf32>
    %38 = arith.mulf %37, %36 : vector<32x4xf32>
    %cst_7 = arith.constant dense<0.000000e+00> : vector<4xf32>
    %39 = vector.multi_reduction <add>, %38, %cst_7 [0] : vector<32x4xf32> to vector<4xf32>
    %40 = vector.shape_cast %39 : vector<4xf32> to vector<1x4xf32>
    %41 = vector.broadcast %21 : vector<32x1xf32> to vector<32x4xf32>
    %42 = arith.mulf %41, %36 : vector<32x4xf32>
    %cst_8 = arith.constant dense<0.000000e+00> : vector<4xf32>
    %43 = vector.multi_reduction <add>, %42, %cst_8 [0] : vector<32x4xf32> to vector<4xf32>
    %44 = vector.shape_cast %43 : vector<4xf32> to vector<1x4xf32>
    %45 = arith.divf %40, %44 : vector<1x4xf32>
    %c0_9 = arith.constant 0 : index
    %c0_10 = arith.constant 0 : index
    %46 = vector.load %arg2[%c0_9, %c0_10] : memref<1x4xf32, #tpu.memory_space<vmem>>, vector<1x4xf32>
    tpu.vector_store %arg2[%c0_9, %c0_10], %45 {strides = array<i32>} : memref<1x4xf32, #tpu.memory_space<vmem>>, vector<1x4xf32>,
    return
  }
}

</mosaic_0001>

<llo_original>
// kernel: trippy_forward.4
$region0: #{trippy_forward.4}
  #allocation0 [shape = 'u32[]', space=smem, size = 0x4, offset = 0x4, fixed_abs, tag = 'smem constant byte address 0x4 - core index']
  #allocation1 [shape = 'u32[72,128]{1,0:T(1,128)}', space=vmem, size = 0x9000, scoped, tag = 'internal scratch']
  %s0 = inlined_call_operand.vmem [shape: f32[2,32], index: 0, kind: input, shape index: {}]
  %s1 = inlined_call_operand.vmem [shape: f32[16,32], index: 1, kind: input, shape index: {}]
  %s2 = inlined_call_operand.vmem [shape: f32[2,4], index: 2, kind: input, shape index: {}]
  %s3 = inlined_call_operand.vmem [shape: f32[2,4], index: 3, kind: input, shape index: {}]
  %s4 = inlined_call_operand.vmem [shape: f32[32,32], index: 4, kind: input, shape index: {}]
  %s5 = inlined_call_operand.vmem [shape: f32[1,32], index: 5, kind: input, shape index: {}]
  %s6 = inlined_call_operand.vmem [shape: f32[32,40], index: 6, kind: input, shape index: {}]
  %s7 = inlined_call_operand.vmem [shape: f32[4,40], index: 7, kind: input, shape index: {}]
  %s8 = inlined_call_operand.vmem [shape: f32[4,40], index: 8, kind: input, shape index: {}]
  %s9 = inlined_call_operand.vmem [shape: f32[1,40], index: 9, kind: input, shape index: {}]
  %s10 = inlined_call_operand.vmem [shape: f32[32,8], index: 10, kind: input, shape index: {}]
  %s11 = inlined_call_operand.vmem [shape: f32[1,8], index: 11, kind: input, shape index: {}]
  %s12 = inlined_call_operand.vmem [shape: f32[2,40], index: 12, kind: output, shape index: {0}]
  %s13 = inlined_call_operand.vmem [shape: f32[16,8], index: 13, kind: output, shape index: {1}]
  %14 = xla_tuple %s12, %s13
  %s15 = sld [smem:[#allocation0]]
  $region66: #{trippy_forward.4} parent=0
    _
  %s17 = ssub.s32 1, %s15
  %s18 = scalar_select 0, %s17, %s15
  // Predicated region
  $region2: #{trippy_forward.4} parent=0 // pred_check
    _
  $region3: #{trippy_forward.4} parent=0 // pred_check_branch
    %20 = sbr.rel (0) target = $region5
  $region4: #{trippy_forward.4} parent=0 // pred_region
    _
  $region5: #{trippy_forward.4} parent=0 // pred_fallthru
    _
  // Predicated region
  $region6: #{trippy_forward.4} parent=0 // pred_check
    _
  $region7: #{trippy_forward.4} parent=0 // pred_check_branch
    %22 = sbr.rel (0) target = $region9
  $region8: #{trippy_forward.4} parent=0 // pred_region
    _
  $region9: #{trippy_forward.4} parent=0 // pred_fallthru
    _
  // Predicated region
  $region10: #{trippy_forward.4} parent=0 // pred_check
    _
  $region11: #{trippy_forward.4} parent=0 // pred_check_branch
    %24 = sbr.rel (0) target = $region13
  $region12: #{trippy_forward.4} parent=0 // pred_region
    _
  $region13: #{trippy_forward.4} parent=0 // pred_fallthru
    _
  // Predicated region
  $region14: #{trippy_forward.4} parent=0 // pred_check
    _
  $region15: #{trippy_forward.4} parent=0 // pred_check_branch
    %26 = sbr.rel (0) target = $region17
  $region16: #{trippy_forward.4} parent=0 // pred_region
    _
  $region17: #{trippy_forward.4} parent=0 // pred_fallthru
    _
  // Predicated region
  $region18: #{trippy_forward.4} parent=0 // pred_check
    _
  $region19: #{trippy_forward.4} parent=0 // pred_check_branch
    %28 = sbr.rel (0) target = $region21
  $region20: #{trippy_forward.4} parent=0 // pred_region
    _
  $region21: #{trippy_forward.4} parent=0 // pred_fallthru
    _
  // Predicated region
  $region22: #{trippy_forward.4} parent=0 // pred_check
    _
  $region23: #{trippy_forward.4} parent=0 // pred_check_branch
    %30 = sbr.rel (0) target = $region25
  $region24: #{trippy_forward.4} parent=0 // pred_region
    _
  $region25: #{trippy_forward.4} parent=0 // pred_fallthru
    _
  // Predicated region
  $region26: #{trippy_forward.4} parent=0 // pred_check
    _
  $region27: #{trippy_forward.4} parent=0 // pred_check_branch
    %32 = sbr.rel (0) target = $region29
  $region28: #{trippy_forward.4} parent=0 // pred_region
    _
  $region29: #{trippy_forward.4} parent=0 // pred_fallthru
    _
  // Predicated region
  $region30: #{trippy_forward.4} parent=0 // pred_check
    _
  $region31: #{trippy_forward.4} parent=0 // pred_check_branch
    %34 = sbr.rel (0) target = $region33
  $region32: #{trippy_forward.4} parent=0 // pred_region
    _
  $region33: #{trippy_forward.4} parent=0 // pred_fallthru
    _
  // Predicated region
  $region34: #{trippy_forward.4} parent=0 // pred_check
    _
  $region35: #{trippy_forward.4} parent=0 // pred_check_branch
    %36 = sbr.rel (0) target = $region37
  $region36: #{trippy_forward.4} parent=0 // pred_region
    _
  $region37: #{trippy_forward.4} parent=0 // pred_fallthru
    _
  // Predicated region
  $region38: #{trippy_forward.4} parent=0 // pred_check
    _
  $region39: #{trippy_forward.4} parent=0 // pred_check_branch
    %38 = sbr.rel (0) target = $region41
  $region40: #{trippy_forward.4} parent=0 // pred_region
    _
  $region41: #{trippy_forward.4} parent=0 // pred_fallthru
    _
  // Predicated region
  $region42: #{trippy_forward.4} parent=0 // pred_check
    _
  $region43: #{trippy_forward.4} parent=0 // pred_check_branch
    %40 = sbr.rel (0) target = $region45
  $region44: #{trippy_forward.4} parent=0 // pred_region
    _
  $region45: #{trippy_forward.4} parent=0 // pred_fallthru
    _
  // Predicated region
  $region46: #{trippy_forward.4} parent=0 // pred_check
    _
  $region47: #{trippy_forward.4} parent=0 // pred_check_branch
    %42 = sbr.rel (0) target = $region49
  $region48: #{trippy_forward.4} parent=0 // pred_region
    _
  $region49: #{trippy_forward.4} parent=0 // pred_fallthru
    _
  %v43 = vld [vmem:[%s0] sm:$0x3]
  %v44 = vld [vmem:[%s4] sm:$0xff]
  %v45 = vld [vmem:[%s4 + $0x8] sm:$0xff]
  %v46 = vld [vmem:[%s4 + $0x10] sm:$0xff]
  %v47 = vld [vmem:[%s4 + $0x18] sm:$0xff]
  %v48 = vld [vmem:[%s5] sm:$0x1]
  %v50 = vperm.slane %v48, 0
  %vm52 = vcmask 261120
  %v54 = vsel %vm52, %v43, 0
  %56 = vmatpush.msra.mxu0 0.0
  %57 = vmatpush.msra.mxu0 0.0
  %58 = vmatpush.msra.mxu0 0.0
  %59 = vmatpush.msra.mxu0 0.0
  %60 = vmatpush.msra.mxu0 0.0
  %61 = vmatpush.msra.mxu0 0.0
  %62 = vmatpush.msra.mxu0 0.0
  %63 = vmatpush.msra.mxu0 0.0
  %64 = vmatpush.msra.mxu0 0.0
  %65 = vmatpush.msra.mxu0 0.0
  %66 = vmatpush.msra.mxu0 0.0
  %67 = vmatpush.msra.mxu0 0.0
  %68 = vmatpush.msra.mxu0 %v47
  %69 = vmatpush.msra.mxu0 %v46
  %70 = vmatpush.msra.mxu0 %v45
  %71 = vmatpush.msra.mxu0 %v44
  %72 = vmatmul.f32.gmra.mxu0 %v54
  %v73 = vpop.f32.mrf.mxu0
  %v74 = vadd.f32 %v50, %v73
  %75 = vdwg.mxu0
  %v76 = vtanh.pop %v74
  %v77 = vld [vmem:[%s6] sm:$0xff]
  %v78 = vld [vmem:[%s6 + $0x8] sm:$0xff]
  %v79 = vld [vmem:[%s6 + $0x10] sm:$0xff]
  %v80 = vld [vmem:[%s6 + $0x18] sm:$0xff]
  %v81 = vld [vmem:[%s2] sm:$0x3]
  %v82 = vld [vmem:[%s7] sm:$0xf]
  %vm83 = vcmask 31744
  %v85 = vsel %vm83, %v81, 0
  %vm87 = vcmask 1043456
  %v89 = vsel %vm87, %v82, 0
  %91 = vmatpush.msra.mxu0 0.0
  %92 = vmatpush.msra.mxu0 0.0
  %93 = vmatpush.msra.mxu0 0.0
  %94 = vmatpush.msra.mxu0 0.0
  %95 = vmatpush.msra.mxu0 0.0
  %96 = vmatpush.msra.mxu0 0.0
  %97 = vmatpush.msra.mxu0 0.0
  %98 = vmatpush.msra.mxu0 0.0
  %99 = vmatpush.msra.mxu0 0.0
  %100 = vmatpush.msra.mxu0 0.0
  %101 = vmatpush.msra.mxu0 0.0
  %102 = vmatpush.msra.mxu0 0.0
  %103 = vmatpush.msra.mxu0 0.0
  %104 = vmatpush.msra.mxu0 0.0
  %105 = vmatpush.msra.mxu0 0.0
  %106 = vmatpush.msra.mxu0 %v89
  %107 = vmatmul.f32.gmra.mxu0 %v85
  %v108 = vpop.f32.mrf.mxu0
  %v109 = vadd.f32 0.0, %v108
  %110 = vdwg.mxu0
  %v112 = vsel %vm52, %v76, 0
  %114 = vmatpush.msra.mxu0 0.0
  %115 = vmatpush.msra.mxu0 0.0
  %116 = vmatpush.msra.mxu0 0.0
  %117 = vmatpush.msra.mxu0 0.0
  %118 = vmatpush.msra.mxu0 0.0
  %119 = vmatpush.msra.mxu0 0.0
  %120 = vmatpush.msra.mxu0 0.0
  %121 = vmatpush.msra.mxu0 0.0
  %122 = vmatpush.msra.mxu0 0.0
  %123 = vmatpush.msra.mxu0 0.0
  %124 = vmatpush.msra.mxu0 0.0
  %125 = vmatpush.msra.mxu0 0.0
  %126 = vmatpush.msra.mxu0 %v80
  %127 = vmatpush.msra.mxu0 %v79
  %128 = vmatpush.msra.mxu0 %v78
  %129 = vmatpush.msra.mxu0 %v77
  %130 = vmatmul.f32.gmra.mxu0 %v112
  %v131 = vpop.f32.mrf.mxu0
  %v132 = vadd.f32 %v109, %v131
  %133 = vdwg.mxu0
  %v134 = vld [vmem:[%s3] sm:$0x3]
  %v135 = vld [vmem:[%s8] sm:$0xf]
  %v137 = vsel %vm83, %v134, 0
  %v140 = vsel %vm87, %v135, 0
  %142 = vmatpush.msra.mxu0 0.0
  %143 = vmatpush.msra.mxu0 0.0
  %144 = vmatpush.msra.mxu0 0.0
  %145 = vmatpush.msra.mxu0 0.0
  %146 = vmatpush.msra.mxu0 0.0
  %147 = vmatpush.msra.mxu0 0.0
  %148 = vmatpush.msra.mxu0 0.0
  %149 = vmatpush.msra.mxu0 0.0
  %150 = vmatpush.msra.mxu0 0.0
  %151 = vmatpush.msra.mxu0 0.0
  %152 = vmatpush.msra.mxu0 0.0
  %153 = vmatpush.msra.mxu0 0.0
  %154 = vmatpush.msra.mxu0 0.0
  %155 = vmatpush.msra.mxu0 0.0
  %156 = vmatpush.msra.mxu0 0.0
  %157 = vmatpush.msra.mxu0 %v140
  %158 = vmatmul.f32.gmra.mxu0 %v137
  %v159 = vpop.f32.mrf.mxu0
  %v160 = vadd.f32 0.0, %v159
  %161 = vdwg.mxu0
  %v162 = vadd.f32 %v132, %v160
  %v163 = vld [vmem:[%s9] sm:$0x1]
  %v165 = vperm.slane %v163, 0
  %v167 = vadd.f32 %v162, %v165
  %vm168 = vcmask 320512
  %169 = vst.msk [vmem:[%s12] sm:$0x3] %vm168, %v167
  %v170 = vld [vmem:[%s1] sm:$0xff]
  %v171 = vld [vmem:[%s1 + $0x8] sm:$0xff]
  %v172 = vld [vmem:[%s10] sm:$0xff]
  %v173 = vld [vmem:[%s10 + $0x8] sm:$0xff]
  %v174 = vld [vmem:[%s10 + $0x10] sm:$0xff]
  %v175 = vld [vmem:[%s10 + $0x18] sm:$0xff]
  %v176 = vld [vmem:[%s11] sm:$0x1]
  %v178 = vperm.slane %v176, 0
  %v181 = vsel %vm52, %v170, 0
  %v184 = vsel %vm52, %v171, 0
  %186 = vmatpush.msra.mxu0 0.0
  %187 = vmatpush.msra.mxu0 0.0
  %188 = vmatpush.msra.mxu0 0.0
  %189 = vmatpush.msra.mxu0 0.0
  %190 = vmatpush.msra.mxu0 0.0
  %191 = vmatpush.msra.mxu0 0.0
  %192 = vmatpush.msra.mxu0 0.0
  %193 = vmatpush.msra.mxu0 0.0
  %194 = vmatpush.msra.mxu0 0.0
  %195 = vmatpush.msra.mxu0 0.0
  %196 = vmatpush.msra.mxu0 0.0
  %197 = vmatpush.msra.mxu0 0.0
  %198 = vmatpush.msra.mxu0 %v175
  %199 = vmatpush.msra.mxu0 %v174
  %200 = vmatpush.msra.mxu0 %v173
  %201 = vmatpush.msra.mxu0 %v172
  %202 = vmatmul.f32.gmra.mxu0 %v181
  %v203 = vpop.f32.mrf.mxu0
  %v204 = vadd.f32 %v178, %v203
  %205 = vmatmul.f32.gmra.mxu0 %v184
  %v206 = vpop.f32.mrf.mxu0
  %v207 = vadd.f32 %v178, %v206
  %208 = vdwg.mxu0
  %vm209 = vcmask 64512
  %210 = vst.msk [vmem:[%s13] sm:$0xff] %vm209, %v204
  %211 = vst.msk [vmem:[%s13 + $0x8] sm:$0xff] %vm209, %v207
  // Predicated region
  $region50: #{trippy_forward.4} parent=0 // pred_check
    _
  $region51: #{trippy_forward.4} parent=0 // pred_check_branch
    %213 = sbr.rel (0) target = $region53
  $region52: #{trippy_forward.4} parent=0 // pred_region
    _
  $region53: #{trippy_forward.4} parent=0 // pred_fallthru
    _
  // Predicated region
  $region54: #{trippy_forward.4} parent=0 // pred_check
    _
  $region55: #{trippy_forward.4} parent=0 // pred_check_branch
    %215 = sbr.rel (0) target = $region57
  $region56: #{trippy_forward.4} parent=0 // pred_region
    _
  $region57: #{trippy_forward.4} parent=0 // pred_fallthru
    _
  // Predicated region
  $region58: #{trippy_forward.4} parent=0 // pred_check
    _
  $region59: #{trippy_forward.4} parent=0 // pred_check_branch
    %217 = sbr.rel (0) target = $region61
  $region60: #{trippy_forward.4} parent=0 // pred_region
    _
  $region61: #{trippy_forward.4} parent=0 // pred_fallthru
    _
  // Predicated region
  $region62: #{trippy_forward.4} parent=0 // pred_check
    _
  $region63: #{trippy_forward.4} parent=0 // pred_check_branch
    %219 = sbr.rel (0) target = $region65
  $region64: #{trippy_forward.4} parent=0 // pred_region
    _
  $region65: #{trippy_forward.4} parent=0 // pred_fallthru
    _

// kernel: trippy_forward.5
$region0: #{trippy_forward.5}
  #allocation0 [shape = 'u32[]', space=smem, size = 0x4, offset = 0x4, fixed_abs, tag = 'smem constant byte address 0x4 - core index']
  #allocation1 [shape = 'u32[72,128]{1,0:T(1,128)}', space=vmem, size = 0x9000, scoped, tag = 'internal scratch']
  %s0 = inlined_call_operand.vmem [shape: f32[32,8], index: 0, kind: input, shape index: {}]
  %s1 = inlined_call_operand.vmem [shape: s32[32,1], index: 1, kind: input, shape index: {}]
  %s2 = inlined_call_operand.vmem [shape: f32[1,4], index: 2, kind: output, shape index: {}]
  %s3 = sld [smem:[#allocation0]]
  $region18: #{trippy_forward.5} parent=0
    _
  %s5 = ssub.s32 1, %s3
  %s6 = scalar_select 0, %s5, %s3
  // Predicated region
  $region2: #{trippy_forward.5} parent=0 // pred_check
    _
  $region3: #{trippy_forward.5} parent=0 // pred_check_branch
    %8 = sbr.rel (0) target = $region5
  $region4: #{trippy_forward.5} parent=0 // pred_region
    _
  $region5: #{trippy_forward.5} parent=0 // pred_fallthru
    _
  // Predicated region
  $region6: #{trippy_forward.5} parent=0 // pred_check
    _
  $region7: #{trippy_forward.5} parent=0 // pred_check_branch
    %10 = sbr.rel (0) target = $region9
  $region8: #{trippy_forward.5} parent=0 // pred_region
    _
  $region9: #{trippy_forward.5} parent=0 // pred_fallthru
    _
  %v11 = vld [vmem:[%s0] sm:$0xff]
  %v12 = vld [vmem:[%s0 + $0x8] sm:$0xff]
  %v13 = vld [vmem:[%s0 + $0x10] sm:$0xff]
  %v14 = vld [vmem:[%s0 + $0x18] sm:$0xff]
  %v15 = vld [vmem:[%s1] sm:$0xff]
  %v16 = vld [vmem:[%s1 + $0x8] sm:$0xff]
  %v17 = vld [vmem:[%s1 + $0x10] sm:$0xff]
  %v18 = vld [vmem:[%s1 + $0x18] sm:$0xff]
  %v19 = vlaneseq
  %v20 = vand.u32 %v19, 127
  %vm21 = vcmask 64512
  %v22 = vsel %vm21, %v11, -inf
  %23 = vmax.xlane.f32.xlu0 %v22
  %v24 = vpop.xlane.xlu0 %23
  %v25 = vsel %vm21, %v12, -inf
  %26 = vmax.xlane.f32.xlu0 %v25
  %v27 = vpop.xlane.xlu0 %26
  %v28 = vsel %vm21, %v13, -inf
  %29 = vmax.xlane.f32.xlu0 %v28
  %v30 = vpop.xlane.xlu0 %29
  %v31 = vsel %vm21, %v14, -inf
  %32 = vmax.xlane.f32.xlu0 %v31
  %v33 = vpop.xlane.xlu0 %32
  %v34 = vsub.f32 %v11, %v24
  %v35 = vsub.f32 %v12, %v27
  %v36 = vsub.f32 %v13, %v30
  %v37 = vsub.f32 %v14, %v33
  %v38 = vmul.f32 %v34, 1.442695
  %v39 = vpow.pop %v38
  %v40 = vmul.f32 %v35, 1.442695
  %v41 = vpow.pop %v40
  %v42 = vmul.f32 %v36, 1.442695
  %v43 = vpow.pop %v42
  %v44 = vmul.f32 %v37, 1.442695
  %v45 = vpow.pop %v44
  %v46 = vsel %vm21, %v39, 0.0
  %47 = vadd.xlane.f32.xlu0 %v46
  %v48 = vpop.xlane.xlu0 %47
  %v49 = vsel %vm21, %v41, 0.0
  %50 = vadd.xlane.f32.xlu0 %v49
  %v51 = vpop.xlane.xlu0 %50
  %v52 = vsel %vm21, %v43, 0.0
  %53 = vadd.xlane.f32.xlu0 %v52
  %v54 = vpop.xlane.xlu0 %53
  %v55 = vsel %vm21, %v45, 0.0
  %56 = vadd.xlane.f32.xlu0 %v55
  %v57 = vpop.xlane.xlu0 %56
  %v58 = vlog2.pop %v48
  %v59 = vmul.f32 %v58, 0.6931472
  %v60 = vlog2.pop %v51
  %v61 = vmul.f32 %v60, 0.6931472
  %v62 = vlog2.pop %v54
  %v63 = vmul.f32 %v62, 0.6931472
  %v64 = vlog2.pop %v57
  %v65 = vmul.f32 %v64, 0.6931472
  %v66 = vadd.f32 %v59, %v24
  %v67 = vadd.f32 %v61, %v27
  %v68 = vadd.f32 %v63, %v30
  %v69 = vadd.f32 %v65, %v33
  %70 = vset.pattern.permute.xlu0 0
  %71 = vperm.xlu0 %70, %v15
  %v72 = vpop.permute.xlu0 %71
  %73 = vset.pattern.permute.xlu0 0
  %74 = vperm.xlu0 %73, %v16
  %v75 = vpop.permute.xlu0 %74
  %76 = vset.pattern.permute.xlu0 0
  %77 = vperm.xlu0 %76, %v17
  %v78 = vpop.permute.xlu0 %77
  %79 = vset.pattern.permute.xlu0 0
  %80 = vperm.xlu0 %79, %v18
  %v81 = vpop.permute.xlu0 %80
  %vm82 = vcmp.eq.s32.totalorder %v20, %v72
  %vm83 = vcmp.eq.s32.totalorder %v20, %v75
  %vm84 = vcmp.eq.s32.totalorder %v20, %v78
  %vm85 = vcmp.eq.s32.totalorder %v20, %v81
  %v86 = vsel %vm82, %v11, 0.0
  %v87 = vsel %vm83, %v12, 0.0
  %v88 = vsel %vm84, %v13, 0.0
  %v89 = vsel %vm85, %v14, 0.0
  %v90 = vsel %vm21, %v86, 0.0
  %91 = vadd.xlane.f32.xlu0 %v90
  %v92 = vpop.xlane.xlu0 %91
  %v93 = vsel %vm21, %v87, 0.0
  %94 = vadd.xlane.f32.xlu0 %v93
  %v95 = vpop.xlane.xlu0 %94
  %v96 = vsel %vm21, %v88, 0.0
  %97 = vadd.xlane.f32.xlu0 %v96
  %v98 = vpop.xlane.xlu0 %97
  %v99 = vsel %vm21, %v89, 0.0
  %100 = vadd.xlane.f32.xlu0 %v99
  %v101 = vpop.xlane.xlu0 %100
  %vm102 = vcmp.ge.s32.totalorder %v15, 0
  %vm103 = vcmp.ge.s32.totalorder %v16, 0
  %vm104 = vcmp.ge.s32.totalorder %v17, 0
  %vm105 = vcmp.ge.s32.totalorder %v18, 0
  %v106 = vsel %vm102, 1, 0
  %v107 = vsel %vm103, 1, 0
  %v108 = vsel %vm104, 1, 0
  %v109 = vsel %vm105, 1, 0
  %v110 = vcvt.s32.f32 %v106
  %v111 = vcvt.s32.f32 %v107
  %v112 = vcvt.s32.f32 %v108
  %v113 = vcvt.s32.f32 %v109
  %v114 = vsub.f32 %v66, %v92
  %v115 = vsub.f32 %v67, %v95
  %v116 = vsub.f32 %v68, %v98
  %v117 = vsub.f32 %v69, %v101
  %v118 = vmul.f32 %v114, %v110
  %v119 = vmul.f32 %v115, %v111
  %v120 = vmul.f32 %v116, %v112
  %v121 = vmul.f32 %v117, %v113
  %v122 = vlaneseq
  %v123 = vshrl.u32 %v122, 7
  %v124 = vadd.s32 %v123, 8
  %v125 = vadd.s32 %v123, 16
  %v126 = vadd.s32 %v123, 24
  %v127 = vmul.u32 %v20, 8
  %vm128 = vcmp.ge.s32.totalorder %v123, %v127
  %vm129 = vcmp.ge.s32.totalorder %v124, %v127
  %vm130 = vcmp.ge.s32.totalorder %v125, %v127
  %vm131 = vcmp.ge.s32.totalorder %v126, %v127
  %v132 = vadd.s32 %v20, 1
  %v133 = vmul.u32 %v132, 8
  %vm134 = vcmp.lt.s32.totalorder %v123, %v133
  %vm135 = vcmp.lt.s32.totalorder %v124, %v133
  %vm136 = vcmp.lt.s32.totalorder %v125, %v133
  %vm137 = vcmp.lt.s32.totalorder %v126, %v133
  %vm138 = vmand %vm128, %vm134
  %vm139 = vmand %vm129, %vm135
  %vm140 = vmand %vm130, %vm136
  %vm141 = vmand %vm131, %vm137
  %v142 = vsel %vm138, 1, 0
  %v143 = vsel %vm139, 1, 0
  %v144 = vsel %vm140, 1, 0
  %v145 = vsel %vm141, 1, 0
  %v146 = vcvt.s32.f32 %v142
  %v147 = vcvt.s32.f32 %v143
  %v148 = vcvt.s32.f32 %v144
  %v149 = vcvt.s32.f32 %v145
  %151 = vset.pattern.permute.xlu0 0
  %152 = vperm.xlu0 %151, %v118
  %v153 = vpop.permute.xlu0 %152
  %156 = vset.pattern.permute.xlu0 0
  %157 = vperm.xlu0 %156, %v119
  %v158 = vpop.permute.xlu0 %157
  %161 = vset.pattern.permute.xlu0 0
  %162 = vperm.xlu0 %161, %v120
  %v163 = vpop.permute.xlu0 %162
  %166 = vset.pattern.permute.xlu0 0
  %167 = vperm.xlu0 %166, %v121
  %v168 = vpop.permute.xlu0 %167
  %v170 = vmul.f32 %v153, %v146
  %v171 = vmul.f32 %v158, %v147
  %v172 = vmul.f32 %v163, %v148
  %v173 = vmul.f32 %v168, %v149
  %vm174 = vcmask 31744
  %v175 = vsel %vm174, %v170, 0.0
  %v176 = vsel %vm174, %v171, 0.0
  %v177 = vadd.f32 %v175, %v176
  %v178 = vsel %vm174, %v172, 0.0
  %v179 = vadd.f32 %v177, %v178
  %v180 = vsel %vm174, %v173, 0.0
  %v181 = vadd.f32 %v179, %v180
  %v182 = vrot.slane %v181, 4
  %v183 = vadd.f32 %v181, %v182
  %v184 = vrot.slane %v183, 2
  %v185 = vadd.f32 %v183, %v184
  %v186 = vrot.slane %v185, 1
  %v187 = vadd.f32 %v185, %v186
  %189 = vset.pattern.permute.xlu0 0
  %190 = vperm.xlu0 %189, %v110
  %v191 = vpop.permute.xlu0 %190
  %194 = vset.pattern.permute.xlu0 0
  %195 = vperm.xlu0 %194, %v111
  %v196 = vpop.permute.xlu0 %195
  %199 = vset.pattern.permute.xlu0 0
  %200 = vperm.xlu0 %199, %v112
  %v201 = vpop.permute.xlu0 %200
  %204 = vset.pattern.permute.xlu0 0
  %205 = vperm.xlu0 %204, %v113
  %v206 = vpop.permute.xlu0 %205
  %v208 = vmul.f32 %v191, %v146
  %v209 = vmul.f32 %v196, %v147
  %v210 = vmul.f32 %v201, %v148
  %v211 = vmul.f32 %v206, %v149
  %v212 = vsel %vm174, %v208, 0.0
  %v213 = vsel %vm174, %v209, 0.0
  %v214 = vadd.f32 %v212, %v213
  %v215 = vsel %vm174, %v210, 0.0
  %v216 = vadd.f32 %v214, %v215
  %v217 = vsel %vm174, %v211, 0.0
  %v218 = vadd.f32 %v216, %v217
  %v219 = vrot.slane %v218, 4
  %v220 = vadd.f32 %v218, %v219
  %v221 = vrot.slane %v220, 2
  %v222 = vadd.f32 %v220, %v221
  %v223 = vrot.slane %v222, 1
  %v224 = vadd.f32 %v222, %v223
  %v225 = vrcp.pop %v224
  %v226 = vmul.f32 %v224, %v225
  %v227 = vsub.f32 1.0, %v226
  %v228 = vmul.f32 %v225, %v227
  %v229 = vadd.f32 %v225, %v228
  %vm230 = vweird.f32 %v224
  %vm231 = vweird.f32 %v225
  %vm232 = vmor %vm230, %vm231
  %v233 = vsel %vm232, %v225, %v229
  %v234 = vand.u32 2147483647, %v224
  %vm235 = vcmp.eq.f32.partialorder %v234, 8.507059e+37
  %v236 = vand.u32 %v224, 2147483648
  %v237 = vor.u32 1.1754944e-38, %v236
  %v238 = vsel %vm235, %v237, %v233
  %v239 = vmul.f32 %v187, %v238
  %vm240 = vcmask 24576
  %241 = vst.msk [vmem:[%s2] sm:$0x1] %vm240, %v239
  // Predicated region
  $region10: #{trippy_forward.5} parent=0 // pred_check
    _
  $region11: #{trippy_forward.5} parent=0 // pred_check_branch
    %243 = sbr.rel (0) target = $region13
  $region12: #{trippy_forward.5} parent=0 // pred_region
    _
  $region13: #{trippy_forward.5} parent=0 // pred_fallthru
    _
  // Predicated region
  $region14: #{trippy_forward.5} parent=0 // pred_check
    _
  $region15: #{trippy_forward.5} parent=0 // pred_check_branch
    %245 = sbr.rel (0) target = $region17
  $region16: #{trippy_forward.5} parent=0 // pred_region
    _
  $region17: #{trippy_forward.5} parent=0 // pred_fallthru
    _

// kernel: trippy_forward.3
$region0: #{trippy_forward.3}
  #allocation0 [shape = 'u32[]', space=smem, size = 0x4, offset = 0x4, fixed_abs, tag = 'smem constant byte address 0x4 - core index']
  #allocation1 [shape = 'u32[72,128]{1,0:T(1,128)}', space=vmem, size = 0x9000, scoped, tag = 'internal scratch']
  %s0 = inlined_call_operand.vmem [shape: f32[16,32], index: 0, kind: input, shape index: {}]
  %s1 = inlined_call_operand.vmem [shape: f32[2,1,8], index: 1, kind: input, shape index: {}]
  %s2 = inlined_call_operand.vmem [shape: f32[2,4,32,8], index: 2, kind: input, shape index: {}]
  %s3 = inlined_call_operand.vmem [shape: f32[2,4,32,8], index: 3, kind: input, shape index: {}]
  %s4 = inlined_call_operand.vmem [shape: f32[2,4,32,8], index: 4, kind: input, shape index: {}]
  %s5 = inlined_call_operand.vmem [shape: f32[2,4,1,8], index: 5, kind: input, shape index: {}]
  %s6 = inlined_call_operand.vmem [shape: f32[2,4,1,8], index: 6, kind: input, shape index: {}]
  %s7 = inlined_call_operand.vmem [shape: f32[2,4,1,8], index: 7, kind: input, shape index: {}]
  %s8 = inlined_call_operand.vmem [shape: f32[2,4,8,32], index: 8, kind: input, shape index: {}]
  %s9 = inlined_call_operand.vmem [shape: f32[2,1,32], index: 9, kind: input, shape index: {}]
  %s10 = inlined_call_operand.vmem [shape: f32[2,1,32], index: 10, kind: input, shape index: {}]
  %s11 = inlined_call_operand.vmem [shape: f32[2,1,32], index: 11, kind: input, shape index: {}]
  %s12 = inlined_call_operand.vmem [shape: f32[2,32,64], index: 12, kind: input, shape index: {}]
  %s13 = inlined_call_operand.vmem [shape: f32[2,1,64], index: 13, kind: input, shape index: {}]
  %s14 = inlined_call_operand.vmem [shape: f32[2,64,32], index: 14, kind: input, shape index: {}]
  %s15 = inlined_call_operand.vmem [shape: f32[2,1,32], index: 15, kind: input, shape index: {}]
  %s16 = inlined_call_operand.vmem [shape: f32[2,1,32], index: 16, kind: input, shape index: {}]
  %s17 = inlined_call_operand.vmem [shape: f32[2,1,32], index: 17, kind: input, shape index: {}]
  %s18 = inlined_call_operand.vmem [shape: f32[16,32], index: 18, kind: output, shape index: {}]
  %s19 = sld [smem:[#allocation0]]
  $region109: #{trippy_forward.3} parent=0
    _
  %s21 = ssub.s32 1, %s19
  %s22 = scalar_select 0, %s21, %s19
  loop: start=0, step=1, limit=4
  $region2: #{trippy_forward.3} parent=0 // loop_pre_header
    _
  $region3: #{trippy_forward.3} parent=0 // loop_header
    %s24 = sphi 0, %s28
    %p25 = scmp.ge.s32.totalorder %s24, 4
    %s32 = sphi 0, %s32
    %s34 = sphi 0, %s32
    %s35 = sphi 0, %s34
    %s49 = sphi 0, %s35
    %s53 = sphi 0, %s53
    %s55 = sphi 0, %s53
    %s56 = sphi 0, %s55
    %s70 = sphi 0, %s56
    %s76 = sphi 0, %s78
    %s79 = sphi 0, %s76
    %s80 = sphi 0, %s79
    %s96 = sphi 0, %s80
    %s102 = sphi 0, %s104
    %s105 = sphi 0, %s102
    %s106 = sphi 0, %s105
    %s122 = sphi 0, %s106
    %s128 = sphi 0, %s130
    %s131 = sphi 0, %s128
    %s132 = sphi 0, %s131
    %s148 = sphi 0, %s132
    %s154 = sphi 0, %s156
    %s157 = sphi 0, %s154
    %s158 = sphi 0, %s157
    %s174 = sphi 0, %s158
    %s180 = sphi 0, %s182
    %s183 = sphi 0, %s180
    %s184 = sphi 0, %s183
    %s200 = sphi 0, %s184
    %s206 = sphi 0, %s208
    %s209 = sphi 0, %s206
    %s210 = sphi 0, %s209
    %s226 = sphi 0, %s210
    %s232 = sphi 0, %s234
    %s235 = sphi 0, %s232
    %s236 = sphi 0, %s235
    %s252 = sphi 0, %s236
    %s258 = sphi 0, %s260
    %s261 = sphi 0, %s258
    %s262 = sphi 0, %s261
    %s278 = sphi 0, %s262
    %s284 = sphi 0, %s286
    %s287 = sphi 0, %s284
    %s288 = sphi 0, %s287
    %s304 = sphi 0, %s288
    %s310 = sphi 0, %s312
    %s313 = sphi 0, %s310
    %s314 = sphi 0, %s313
    %s330 = sphi 0, %s314
    %s336 = sphi 0, %s338
    %s339 = sphi 0, %s336
    %s340 = sphi 0, %s339
    %s356 = sphi 0, %s340
    %s362 = sphi 0, %s364
    %s365 = sphi 0, %s362
    %s366 = sphi 0, %s365
    %s382 = sphi 0, %s366
    %s388 = sphi 0, %s390
    %s391 = sphi 0, %s388
    %s392 = sphi 0, %s391
    %s408 = sphi 0, %s392
    %s414 = sphi 0, %s416
    %s417 = sphi 0, %s414
    %s418 = sphi 0, %s417
    %s434 = sphi 0, %s418
    %s440 = sphi 0, %s442
    %s443 = sphi 0, %s440
    %s444 = sphi 0, %s443
    %s460 = sphi 0, %s444
    %s466 = sphi 0, %s468
    %s469 = sphi 0, %s466
    %s470 = sphi 0, %s469
    %s486 = sphi 0, %s470
    %s490 = sphi 0, %s490
    %s492 = sphi 0, %s490
    %s493 = sphi 0, %s492
    %s507 = sphi 0, %s493
  $region4: #{trippy_forward.3} parent=0 // loop_header_branch
    %27 = sbr.rel (%p25) target = $region8
  $region5: #{trippy_forward.3} parent=0 // loop_body
    %s29 = ssub.s32 %s24, 1
    %s30 = ssub.s32 %s24, 2
    %s31 = sadd.s32 %s24, 1
    %s33 = sadd.s32 %s32, 1
    %p36 = scmp.eq.s32.totalorder %s24, 1
    %p37 = scmp.ne.s32.totalorder %s32, %s34
    %p38 = scmp.eq.s32.totalorder %s24, 0
    %p39 = por %p37, %p38
    %p40 = scmp.ne.s32.totalorder %s32, %s34
    %p41 = scmp.eq.s32.totalorder %s29, 1
    %p42 = por %p40, %p41
    %p43 = scmp.ne.s32.totalorder %s34, %s35
    %p44 = scmp.eq.s32.totalorder %s29, 0
    %p45 = por %p43, %p44
    %p46 = scmp.ne.s32.totalorder %s34, %s35
    %p47 = scmp.eq.s32.totalorder %s30, 1
    %p48 = por %p46, %p47
    %p50 = scmp.ne.s32.totalorder %s35, %s49
    %p51 = scmp.eq.s32.totalorder %s30, 0
    %p52 = por %p50, %p51
    %s54 = sadd.s32 %s53, 1
    %p57 = scmp.eq.s32.totalorder %s24, 1
    %p58 = scmp.ne.s32.totalorder %s53, %s55
    %p59 = scmp.eq.s32.totalorder %s24, 0
    %p60 = por %p58, %p59
    %p61 = scmp.ne.s32.totalorder %s53, %s55
    %p62 = scmp.eq.s32.totalorder %s29, 1
    %p63 = por %p61, %p62
    %p64 = scmp.ne.s32.totalorder %s55, %s56
    %p65 = scmp.eq.s32.totalorder %s29, 0
    %p66 = por %p64, %p65
    %p67 = scmp.ne.s32.totalorder %s55, %s56
    %p68 = scmp.eq.s32.totalorder %s30, 1
    %p69 = por %p67, %p68
    %p71 = scmp.ne.s32.totalorder %s56, %s70
    %p72 = scmp.eq.s32.totalorder %s30, 0
    %p73 = por %p71, %p72
    %s74 = ssub.s32 %s24, %s31
    %p75 = scmp.eq.s32.totalorder %s74, 0
    %s77 = sadd.s32 %s76, 1
    %s78 = scalar_select %p75, %s76, %s77
    %p81 = pneg %p75
    %p82 = scmp.eq.s32.totalorder %s24, 1
    %p83 = por %p81, %p82
    %p84 = scmp.ne.s32.totalorder %s76, %s79
    %p85 = scmp.eq.s32.totalorder %s24, 0
    %p86 = por %p84, %p85
    %p87 = scmp.ne.s32.totalorder %s76, %s79
    %p88 = scmp.eq.s32.totalorder %s29, 1
    %p89 = por %p87, %p88
    %p90 = scmp.ne.s32.totalorder %s79, %s80
    %p91 = scmp.eq.s32.totalorder %s29, 0
    %p92 = por %p90, %p91
    %p93 = scmp.ne.s32.totalorder %s79, %s80
    %p94 = scmp.eq.s32.totalorder %s30, 1
    %p95 = por %p93, %p94
    %p97 = scmp.ne.s32.totalorder %s80, %s96
    %p98 = scmp.eq.s32.totalorder %s30, 0
    %p99 = por %p97, %p98
    %s100 = ssub.s32 %s24, %s31
    %p101 = scmp.eq.s32.totalorder %s100, 0
    %s103 = sadd.s32 %s102, 1
    %s104 = scalar_select %p101, %s102, %s103
    %p107 = pneg %p101
    %p108 = scmp.eq.s32.totalorder %s24, 1
    %p109 = por %p107, %p108
    %p110 = scmp.ne.s32.totalorder %s102, %s105
    %p111 = scmp.eq.s32.totalorder %s24, 0
    %p112 = por %p110, %p111
    %p113 = scmp.ne.s32.totalorder %s102, %s105
    %p114 = scmp.eq.s32.totalorder %s29, 1
    %p115 = por %p113, %p114
    %p116 = scmp.ne.s32.totalorder %s105, %s106
    %p117 = scmp.eq.s32.totalorder %s29, 0
    %p118 = por %p116, %p117
    %p119 = scmp.ne.s32.totalorder %s105, %s106
    %p120 = scmp.eq.s32.totalorder %s30, 1
    %p121 = por %p119, %p120
    %p123 = scmp.ne.s32.totalorder %s106, %s122
    %p124 = scmp.eq.s32.totalorder %s30, 0
    %p125 = por %p123, %p124
    %s126 = ssub.s32 %s24, %s31
    %p127 = scmp.eq.s32.totalorder %s126, 0
    %s129 = sadd.s32 %s128, 1
    %s130 = scalar_select %p127, %s128, %s129
    %p133 = pneg %p127
    %p134 = scmp.eq.s32.totalorder %s24, 1
    %p135 = por %p133, %p134
    %p136 = scmp.ne.s32.totalorder %s128, %s131
    %p137 = scmp.eq.s32.totalorder %s24, 0
    %p138 = por %p136, %p137
    %p139 = scmp.ne.s32.totalorder %s128, %s131
    %p140 = scmp.eq.s32.totalorder %s29, 1
    %p141 = por %p139, %p140
    %p142 = scmp.ne.s32.totalorder %s131, %s132
    %p143 = scmp.eq.s32.totalorder %s29, 0
    %p144 = por %p142, %p143
    %p145 = scmp.ne.s32.totalorder %s131, %s132
    %p146 = scmp.eq.s32.totalorder %s30, 1
    %p147 = por %p145, %p146
    %p149 = scmp.ne.s32.totalorder %s132, %s148
    %p150 = scmp.eq.s32.totalorder %s30, 0
    %p151 = por %p149, %p150
    %s152 = ssub.s32 %s24, %s31
    %p153 = scmp.eq.s32.totalorder %s152, 0
    %s155 = sadd.s32 %s154, 1
    %s156 = scalar_select %p153, %s154, %s155
    %p159 = pneg %p153
    %p160 = scmp.eq.s32.totalorder %s24, 1
    %p161 = por %p159, %p160
    %p162 = scmp.ne.s32.totalorder %s154, %s157
    %p163 = scmp.eq.s32.totalorder %s24, 0
    %p164 = por %p162, %p163
    %p165 = scmp.ne.s32.totalorder %s154, %s157
    %p166 = scmp.eq.s32.totalorder %s29, 1
    %p167 = por %p165, %p166
    %p168 = scmp.ne.s32.totalorder %s157, %s158
    %p169 = scmp.eq.s32.totalorder %s29, 0
    %p170 = por %p168, %p169
    %p171 = scmp.ne.s32.totalorder %s157, %s158
    %p172 = scmp.eq.s32.totalorder %s30, 1
    %p173 = por %p171, %p172
    %p175 = scmp.ne.s32.totalorder %s158, %s174
    %p176 = scmp.eq.s32.totalorder %s30, 0
    %p177 = por %p175, %p176
    %s178 = ssub.s32 %s24, %s31
    %p179 = scmp.eq.s32.totalorder %s178, 0
    %s181 = sadd.s32 %s180, 1
    %s182 = scalar_select %p179, %s180, %s181
    %p185 = pneg %p179
    %p186 = scmp.eq.s32.totalorder %s24, 1
    %p187 = por %p185, %p186
    %p188 = scmp.ne.s32.totalorder %s180, %s183
    %p189 = scmp.eq.s32.totalorder %s24, 0
    %p190 = por %p188, %p189
    %p191 = scmp.ne.s32.totalorder %s180, %s183
    %p192 = scmp.eq.s32.totalorder %s29, 1
    %p193 = por %p191, %p192
    %p194 = scmp.ne.s32.totalorder %s183, %s184
    %p195 = scmp.eq.s32.totalorder %s29, 0
    %p196 = por %p194, %p195
    %p197 = scmp.ne.s32.totalorder %s183, %s184
    %p198 = scmp.eq.s32.totalorder %s30, 1
    %p199 = por %p197, %p198
    %p201 = scmp.ne.s32.totalorder %s184, %s200
    %p202 = scmp.eq.s32.totalorder %s30, 0
    %p203 = por %p201, %p202
    %s204 = ssub.s32 %s24, %s31
    %p205 = scmp.eq.s32.totalorder %s204, 0
    %s207 = sadd.s32 %s206, 1
    %s208 = scalar_select %p205, %s206, %s207
    %p211 = pneg %p205
    %p212 = scmp.eq.s32.totalorder %s24, 1
    %p213 = por %p211, %p212
    %p214 = scmp.ne.s32.totalorder %s206, %s209
    %p215 = scmp.eq.s32.totalorder %s24, 0
    %p216 = por %p214, %p215
    %p217 = scmp.ne.s32.totalorder %s206, %s209
    %p218 = scmp.eq.s32.totalorder %s29, 1
    %p219 = por %p217, %p218
    %p220 = scmp.ne.s32.totalorder %s209, %s210
    %p221 = scmp.eq.s32.totalorder %s29, 0
    %p222 = por %p220, %p221
    %p223 = scmp.ne.s32.totalorder %s209, %s210
    %p224 = scmp.eq.s32.totalorder %s30, 1
    %p225 = por %p223, %p224
    %p227 = scmp.ne.s32.totalorder %s210, %s226
    %p228 = scmp.eq.s32.totalorder %s30, 0
    %p229 = por %p227, %p228
    %s230 = ssub.s32 %s24, %s31
    %p231 = scmp.eq.s32.totalorder %s230, 0
    %s233 = sadd.s32 %s232, 1
    %s234 = scalar_select %p231, %s232, %s233
    %p237 = pneg %p231
    %p238 = scmp.eq.s32.totalorder %s24, 1
    %p239 = por %p237, %p238
    %p240 = scmp.ne.s32.totalorder %s232, %s235
    %p241 = scmp.eq.s32.totalorder %s24, 0
    %p242 = por %p240, %p241
    %p243 = scmp.ne.s32.totalorder %s232, %s235
    %p244 = scmp.eq.s32.totalorder %s29, 1
    %p245 = por %p243, %p244
    %p246 = scmp.ne.s32.totalorder %s235, %s236
    %p247 = scmp.eq.s32.totalorder %s29, 0
    %p248 = por %p246, %p247
    %p249 = scmp.ne.s32.totalorder %s235, %s236
    %p250 = scmp.eq.s32.totalorder %s30, 1
    %p251 = por %p249, %p250
    %p253 = scmp.ne.s32.totalorder %s236, %s252
    %p254 = scmp.eq.s32.totalorder %s30, 0
    %p255 = por %p253, %p254
    %s256 = ssub.s32 %s24, %s31
    %p257 = scmp.eq.s32.totalorder %s256, 0
    %s259 = sadd.s32 %s258, 1
    %s260 = scalar_select %p257, %s258, %s259
    %p263 = pneg %p257
    %p264 = scmp.eq.s32.totalorder %s24, 1
    %p265 = por %p263, %p264
    %p266 = scmp.ne.s32.totalorder %s258, %s261
    %p267 = scmp.eq.s32.totalorder %s24, 0
    %p268 = por %p266, %p267
    %p269 = scmp.ne.s32.totalorder %s258, %s261
    %p270 = scmp.eq.s32.totalorder %s29, 1
    %p271 = por %p269, %p270
    %p272 = scmp.ne.s32.totalorder %s261, %s262
    %p273 = scmp.eq.s32.totalorder %s29, 0
    %p274 = por %p272, %p273
    %p275 = scmp.ne.s32.totalorder %s261, %s262
    %p276 = scmp.eq.s32.totalorder %s30, 1
    %p277 = por %p275, %p276
    %p279 = scmp.ne.s32.totalorder %s262, %s278
    %p280 = scmp.eq.s32.totalorder %s30, 0
    %p281 = por %p279, %p280
    %s282 = ssub.s32 %s24, %s31
    %p283 = scmp.eq.s32.totalorder %s282, 0
    %s285 = sadd.s32 %s284, 1
    %s286 = scalar_select %p283, %s284, %s285
    %p289 = pneg %p283
    %p290 = scmp.eq.s32.totalorder %s24, 1
    %p291 = por %p289, %p290
    %p292 = scmp.ne.s32.totalorder %s284, %s287
    %p293 = scmp.eq.s32.totalorder %s24, 0
    %p294 = por %p292, %p293
    %p295 = scmp.ne.s32.totalorder %s284, %s287
    %p296 = scmp.eq.s32.totalorder %s29, 1
    %p297 = por %p295, %p296
    %p298 = scmp.ne.s32.totalorder %s287, %s288
    %p299 = scmp.eq.s32.totalorder %s29, 0
    %p300 = por %p298, %p299
    %p301 = scmp.ne.s32.totalorder %s287, %s288
    %p302 = scmp.eq.s32.totalorder %s30, 1
    %p303 = por %p301, %p302
    %p305 = scmp.ne.s32.totalorder %s288, %s304
    %p306 = scmp.eq.s32.totalorder %s30, 0
    %p307 = por %p305, %p306
    %s308 = ssub.s32 %s24, %s31
    %p309 = scmp.eq.s32.totalorder %s308, 0
    %s311 = sadd.s32 %s310, 1
    %s312 = scalar_select %p309, %s310, %s311
    %p315 = pneg %p309
    %p316 = scmp.eq.s32.totalorder %s24, 1
    %p317 = por %p315, %p316
    %p318 = scmp.ne.s32.totalorder %s310, %s313
    %p319 = scmp.eq.s32.totalorder %s24, 0
    %p320 = por %p318, %p319
    %p321 = scmp.ne.s32.totalorder %s310, %s313
    %p322 = scmp.eq.s32.totalorder %s29, 1
    %p323 = por %p321, %p322
    %p324 = scmp.ne.s32.totalorder %s313, %s314
    %p325 = scmp.eq.s32.totalorder %s29, 0
    %p326 = por %p324, %p325
    %p327 = scmp.ne.s32.totalorder %s313, %s314
    %p328 = scmp.eq.s32.totalorder %s30, 1
    %p329 = por %p327, %p328
    %p331 = scmp.ne.s32.totalorder %s314, %s330
    %p332 = scmp.eq.s32.totalorder %s30, 0
    %p333 = por %p331, %p332
    %s334 = ssub.s32 %s24, %s31
    %p335 = scmp.eq.s32.totalorder %s334, 0
    %s337 = sadd.s32 %s336, 1
    %s338 = scalar_select %p335, %s336, %s337
    %p341 = pneg %p335
    %p342 = scmp.eq.s32.totalorder %s24, 1
    %p343 = por %p341, %p342
    %p344 = scmp.ne.s32.totalorder %s336, %s339
    %p345 = scmp.eq.s32.totalorder %s24, 0
    %p346 = por %p344, %p345
    %p347 = scmp.ne.s32.totalorder %s336, %s339
    %p348 = scmp.eq.s32.totalorder %s29, 1
    %p349 = por %p347, %p348
    %p350 = scmp.ne.s32.totalorder %s339, %s340
    %p351 = scmp.eq.s32.totalorder %s29, 0
    %p352 = por %p350, %p351
    %p353 = scmp.ne.s32.totalorder %s339, %s340
    %p354 = scmp.eq.s32.totalorder %s30, 1
    %p355 = por %p353, %p354
    %p357 = scmp.ne.s32.totalorder %s340, %s356
    %p358 = scmp.eq.s32.totalorder %s30, 0
    %p359 = por %p357, %p358
    %s360 = ssub.s32 %s24, %s31
    %p361 = scmp.eq.s32.totalorder %s360, 0
    %s363 = sadd.s32 %s362, 1
    %s364 = scalar_select %p361, %s362, %s363
    %p367 = pneg %p361
    %p368 = scmp.eq.s32.totalorder %s24, 1
    %p369 = por %p367, %p368
    %p370 = scmp.ne.s32.totalorder %s362, %s365
    %p371 = scmp.eq.s32.totalorder %s24, 0
    %p372 = por %p370, %p371
    %p373 = scmp.ne.s32.totalorder %s362, %s365
    %p374 = scmp.eq.s32.totalorder %s29, 1
    %p375 = por %p373, %p374
    %p376 = scmp.ne.s32.totalorder %s365, %s366
    %p377 = scmp.eq.s32.totalorder %s29, 0
    %p378 = por %p376, %p377
    %p379 = scmp.ne.s32.totalorder %s365, %s366
    %p380 = scmp.eq.s32.totalorder %s30, 1
    %p381 = por %p379, %p380
    %p383 = scmp.ne.s32.totalorder %s366, %s382
    %p384 = scmp.eq.s32.totalorder %s30, 0
    %p385 = por %p383, %p384
    %s386 = ssub.s32 %s24, %s31
    %p387 = scmp.eq.s32.totalorder %s386, 0
    %s389 = sadd.s32 %s388, 1
    %s390 = scalar_select %p387, %s388, %s389
    %p393 = pneg %p387
    %p394 = scmp.eq.s32.totalorder %s24, 1
    %p395 = por %p393, %p394
    %p396 = scmp.ne.s32.totalorder %s388, %s391
    %p397 = scmp.eq.s32.totalorder %s24, 0
    %p398 = por %p396, %p397
    %p399 = scmp.ne.s32.totalorder %s388, %s391
    %p400 = scmp.eq.s32.totalorder %s29, 1
    %p401 = por %p399, %p400
    %p402 = scmp.ne.s32.totalorder %s391, %s392
    %p403 = scmp.eq.s32.totalorder %s29, 0
    %p404 = por %p402, %p403
    %p405 = scmp.ne.s32.totalorder %s391, %s392
    %p406 = scmp.eq.s32.totalorder %s30, 1
    %p407 = por %p405, %p406
    %p409 = scmp.ne.s32.totalorder %s392, %s408
    %p410 = scmp.eq.s32.totalorder %s30, 0
    %p411 = por %p409, %p410
    %s412 = ssub.s32 %s24, %s31
    %p413 = scmp.eq.s32.totalorder %s412, 0
    %s415 = sadd.s32 %s414, 1
    %s416 = scalar_select %p413, %s414, %s415
    %p419 = pneg %p413
    %p420 = scmp.eq.s32.totalorder %s24, 1
    %p421 = por %p419, %p420
    %p422 = scmp.ne.s32.totalorder %s414, %s417
    %p423 = scmp.eq.s32.totalorder %s24, 0
    %p424 = por %p422, %p423
    %p425 = scmp.ne.s32.totalorder %s414, %s417
    %p426 = scmp.eq.s32.totalorder %s29, 1
    %p427 = por %p425, %p426
    %p428 = scmp.ne.s32.totalorder %s417, %s418
    %p429 = scmp.eq.s32.totalorder %s29, 0
    %p430 = por %p428, %p429
    %p431 = scmp.ne.s32.totalorder %s417, %s418
    %p432 = scmp.eq.s32.totalorder %s30, 1
    %p433 = por %p431, %p432
    %p435 = scmp.ne.s32.totalorder %s418, %s434
    %p436 = scmp.eq.s32.totalorder %s30, 0
    %p437 = por %p435, %p436
    %s438 = ssub.s32 %s24, %s31
    %p439 = scmp.eq.s32.totalorder %s438, 0
    %s441 = sadd.s32 %s440, 1
    %s442 = scalar_select %p439, %s440, %s441
    %p445 = pneg %p439
    %p446 = scmp.eq.s32.totalorder %s24, 1
    %p447 = por %p445, %p446
    %p448 = scmp.ne.s32.totalorder %s440, %s443
    %p449 = scmp.eq.s32.totalorder %s24, 0
    %p450 = por %p448, %p449
    %p451 = scmp.ne.s32.totalorder %s440, %s443
    %p452 = scmp.eq.s32.totalorder %s29, 1
    %p453 = por %p451, %p452
    %p454 = scmp.ne.s32.totalorder %s443, %s444
    %p455 = scmp.eq.s32.totalorder %s29, 0
    %p456 = por %p454, %p455
    %p457 = scmp.ne.s32.totalorder %s443, %s444
    %p458 = scmp.eq.s32.totalorder %s30, 1
    %p459 = por %p457, %p458
    %p461 = scmp.ne.s32.totalorder %s444, %s460
    %p462 = scmp.eq.s32.totalorder %s30, 0
    %p463 = por %p461, %p462
    %s464 = ssub.s32 %s24, %s31
    %p465 = scmp.eq.s32.totalorder %s464, 0
    %s467 = sadd.s32 %s466, 1
    %s468 = scalar_select %p465, %s466, %s467
    %p471 = pneg %p465
    %p472 = scmp.eq.s32.totalorder %s24, 1
    %p473 = por %p471, %p472
    %p474 = scmp.ne.s32.totalorder %s466, %s469
    %p475 = scmp.eq.s32.totalorder %s24, 0
    %p476 = por %p474, %p475
    %p477 = scmp.ne.s32.totalorder %s466, %s469
    %p478 = scmp.eq.s32.totalorder %s29, 1
    %p479 = por %p477, %p478
    %p480 = scmp.ne.s32.totalorder %s469, %s470
    %p481 = scmp.eq.s32.totalorder %s29, 0
    %p482 = por %p480, %p481
    %p483 = scmp.ne.s32.totalorder %s469, %s470
    %p484 = scmp.eq.s32.totalorder %s30, 1
    %p485 = por %p483, %p484
    %p487 = scmp.ne.s32.totalorder %s470, %s486
    %p488 = scmp.eq.s32.totalorder %s30, 0
    %p489 = por %p487, %p488
    %s491 = sadd.s32 %s490, 1
    %p494 = scmp.eq.s32.totalorder %s24, 1
    %p495 = scmp.ne.s32.totalorder %s490, %s492
    %p496 = scmp.eq.s32.totalorder %s24, 0
    %p497 = por %p495, %p496
    %p498 = scmp.ne.s32.totalorder %s490, %s492
    %p499 = scmp.eq.s32.totalorder %s29, 1
    %p500 = por %p498, %p499
    %p501 = scmp.ne.s32.totalorder %s492, %s493
    %p502 = scmp.eq.s32.totalorder %s29, 0
    %p503 = por %p501, %p502
    %p504 = scmp.ne.s32.totalorder %s492, %s493
    %p505 = scmp.eq.s32.totalorder %s30, 1
    %p506 = por %p504, %p505
    %p508 = scmp.ne.s32.totalorder %s493, %s507
    %p509 = scmp.eq.s32.totalorder %s30, 0
    %p510 = por %p508, %p509
    %p511 = scmp.le.s32.totalorder 1, %s24
    %p512 = scmp.lt.s32.totalorder %s24, 3
    %p513 = pnand %p511, %p512
    %p514 = pneg %p513
    // Predicated region
    $region9: #{trippy_forward.3} parent=5 // pred_check
      _
    $region10: #{trippy_forward.3} parent=5 // pred_check_branch
      %516 = sbr.rel (%p513) target = $region12
    $region11: #{trippy_forward.3} parent=5 // pred_region
      %s517 = ssub.s32 %s24, 1
      // Predicated region
      $region13: #{trippy_forward.3} parent=11 // pred_check
        %p518 = pneg %p45
      $region14: #{trippy_forward.3} parent=11 // pred_check_branch
        %520 = sbr.rel (%p518) target = $region16
      $region15: #{trippy_forward.3} parent=11 // pred_region
        _
      $region16: #{trippy_forward.3} parent=11 // pred_fallthru
        _
      // Predicated region
      $region17: #{trippy_forward.3} parent=11 // pred_check
        %p521 = pneg %p66
      $region18: #{trippy_forward.3} parent=11 // pred_check_branch
        %523 = sbr.rel (%p521) target = $region20
      $region19: #{trippy_forward.3} parent=11 // pred_region
        _
      $region20: #{trippy_forward.3} parent=11 // pred_fallthru
        _
    $region12: #{trippy_forward.3} parent=5 // pred_fallthru
      _
    %p524 = scmp.lt.s32.totalorder %s24, 2
    // Predicated region
    $region21: #{trippy_forward.3} parent=5 // pred_check
      %p525 = pneg %p524
    $region22: #{trippy_forward.3} parent=5 // pred_check_branch
      %527 = sbr.rel (%p525) target = $region24
    $region23: #{trippy_forward.3} parent=5 // pred_region
      // Predicated region
      $region25: #{trippy_forward.3} parent=23 // pred_check
        %p528 = pneg %p86
      $region26: #{trippy_forward.3} parent=23 // pred_check_branch
        %530 = sbr.rel (%p528) target = $region28
      $region27: #{trippy_forward.3} parent=23 // pred_region
        %p531 = scmp.lt.s32.totalorder %s24, 1
        %s532 = scalar_select %p531, %s24, 1
        %s533 = smul.addr %s532, 16
        %s534 = smul.addr %s533, 8
        %s535 = scalar_lea.vmem %s2, %s534
      $region28: #{trippy_forward.3} parent=23 // pred_fallthru
        _
      // Predicated region
      $region29: #{trippy_forward.3} parent=23 // pred_check
        %p536 = pneg %p112
      $region30: #{trippy_forward.3} parent=23 // pred_check_branch
        %538 = sbr.rel (%p536) target = $region32
      $region31: #{trippy_forward.3} parent=23 // pred_region
        %p539 = scmp.lt.s32.totalorder %s24, 1
        %s540 = scalar_select %p539, %s24, 1
        %s541 = smul.addr %s540, 16
        %s542 = smul.addr %s541, 8
        %s543 = scalar_lea.vmem %s3, %s542
      $region32: #{trippy_forward.3} parent=23 // pred_fallthru
        _
      // Predicated region
      $region33: #{trippy_forward.3} parent=23 // pred_check
        %p544 = pneg %p138
      $region34: #{trippy_forward.3} parent=23 // pred_check_branch
        %546 = sbr.rel (%p544) target = $region36
      $region35: #{trippy_forward.3} parent=23 // pred_region
        %p547 = scmp.lt.s32.totalorder %s24, 1
        %s548 = scalar_select %p547, %s24, 1
        %s549 = smul.addr %s548, 16
        %s550 = smul.addr %s549, 8
        %s551 = scalar_lea.vmem %s4, %s550
      $region36: #{trippy_forward.3} parent=23 // pred_fallthru
        _
      // Predicated region
      $region37: #{trippy_forward.3} parent=23 // pred_check
        %p552 = pneg %p164
      $region38: #{trippy_forward.3} parent=23 // pred_check_branch
        %554 = sbr.rel (%p552) target = $region40
      $region39: #{trippy_forward.3} parent=23 // pred_region
        %p555 = scmp.lt.s32.totalorder %s24, 1
        %s556 = scalar_select %p555, %s24, 1
        %s557 = smul.addr %s556, 4
        %s558 = scalar_lea.vmem %s5, %s557
      $region40: #{trippy_forward.3} parent=23 // pred_fallthru
        _
      // Predicated region
      $region41: #{trippy_forward.3} parent=23 // pred_check
        %p559 = pneg %p190
      $region42: #{trippy_forward.3} parent=23 // pred_check_branch
        %561 = sbr.rel (%p559) target = $region44
      $region43: #{trippy_forward.3} parent=23 // pred_region
        %p562 = scmp.lt.s32.totalorder %s24, 1
        %s563 = scalar_select %p562, %s24, 1
        %s564 = smul.addr %s563, 4
        %s565 = scalar_lea.vmem %s6, %s564
      $region44: #{trippy_forward.3} parent=23 // pred_fallthru
        _
      // Predicated region
      $region45: #{trippy_forward.3} parent=23 // pred_check
        %p566 = pneg %p216
      $region46: #{trippy_forward.3} parent=23 // pred_check_branch
        %568 = sbr.rel (%p566) target = $region48
      $region47: #{trippy_forward.3} parent=23 // pred_region
        %p569 = scmp.lt.s32.totalorder %s24, 1
        %s570 = scalar_select %p569, %s24, 1
        %s571 = smul.addr %s570, 4
        %s572 = scalar_lea.vmem %s7, %s571
      $region48: #{trippy_forward.3} parent=23 // pred_fallthru
        _
      // Predicated region
      $region49: #{trippy_forward.3} parent=23 // pred_check
        %p573 = pneg %p242
      $region50: #{trippy_forward.3} parent=23 // pred_check_branch
        %575 = sbr.rel (%p573) target = $region52
      $region51: #{trippy_forward.3} parent=23 // pred_region
        %p576 = scmp.lt.s32.totalorder %s24, 1
        %s577 = scalar_select %p576, %s24, 1
        %s578 = smul.addr %s577, 4
        %s579 = smul.addr %s578, 8
        %s580 = scalar_lea.vmem %s8, %s579
      $region52: #{trippy_forward.3} parent=23 // pred_fallthru
        _
      // Predicated region
      $region53: #{trippy_forward.3} parent=23 // pred_check
        %p581 = pneg %p268
      $region54: #{trippy_forward.3} parent=23 // pred_check_branch
        %583 = sbr.rel (%p581) target = $region56
      $region55: #{trippy_forward.3} parent=23 // pred_region
        %p584 = scmp.lt.s32.totalorder %s24, 1
        %s585 = scalar_select %p584, %s24, 1
        %s586 = scalar_lea.vmem %s9, %s585
      $region56: #{trippy_forward.3} parent=23 // pred_fallthru
        _
      // Predicated region
      $region57: #{trippy_forward.3} parent=23 // pred_check
        %p587 = pneg %p294
      $region58: #{trippy_forward.3} parent=23 // pred_check_branch
        %589 = sbr.rel (%p587) target = $region60
      $region59: #{trippy_forward.3} parent=23 // pred_region
        %p590 = scmp.lt.s32.totalorder %s24, 1
        %s591 = scalar_select %p590, %s24, 1
        %s592 = scalar_lea.vmem %s10, %s591
      $region60: #{trippy_forward.3} parent=23 // pred_fallthru
        _
      // Predicated region
      $region61: #{trippy_forward.3} parent=23 // pred_check
        %p593 = pneg %p320
      $region62: #{trippy_forward.3} parent=23 // pred_check_branch
        %595 = sbr.rel (%p593) target = $region64
      $region63: #{trippy_forward.3} parent=23 // pred_region
        %p596 = scmp.lt.s32.totalorder %s24, 1
        %s597 = scalar_select %p596, %s24, 1
        %s598 = scalar_lea.vmem %s11, %s597
      $region64: #{trippy_forward.3} parent=23 // pred_fallthru
        _
      // Predicated region
      $region65: #{trippy_forward.3} parent=23 // pred_check
        %p599 = pneg %p346
      $region66: #{trippy_forward.3} parent=23 // pred_check_branch
        %601 = sbr.rel (%p599) target = $region68
      $region67: #{trippy_forward.3} parent=23 // pred_region
        %p602 = scmp.lt.s32.totalorder %s24, 1
        %s603 = scalar_select %p602, %s24, 1
        %s604 = smul.addr %s603, 4
        %s605 = smul.addr %s604, 8
        %s606 = scalar_lea.vmem %s12, %s605
      $region68: #{trippy_forward.3} parent=23 // pred_fallthru
        _
      // Predicated region
      $region69: #{trippy_forward.3} parent=23 // pred_check
        %p607 = pneg %p372
      $region70: #{trippy_forward.3} parent=23 // pred_check_branch
        %609 = sbr.rel (%p607) target = $region72
      $region71: #{trippy_forward.3} parent=23 // pred_region
        %p610 = scmp.lt.s32.totalorder %s24, 1
        %s611 = scalar_select %p610, %s24, 1
        %s612 = scalar_lea.vmem %s13, %s611
      $region72: #{trippy_forward.3} parent=23 // pred_fallthru
        _
      // Predicated region
      $region73: #{trippy_forward.3} parent=23 // pred_check
        %p613 = pneg %p398
      $region74: #{trippy_forward.3} parent=23 // pred_check_branch
        %615 = sbr.rel (%p613) target = $region76
      $region75: #{trippy_forward.3} parent=23 // pred_region
        %p616 = scmp.lt.s32.totalorder %s24, 1
        %s617 = scalar_select %p616, %s24, 1
        %s618 = smul.addr %s617, 8
        %s619 = smul.addr %s618, 8
        %s620 = scalar_lea.vmem %s14, %s619
      $region76: #{trippy_forward.3} parent=23 // pred_fallthru
        _
      // Predicated region
      $region77: #{trippy_forward.3} parent=23 // pred_check
        %p621 = pneg %p424
      $region78: #{trippy_forward.3} parent=23 // pred_check_branch
        %623 = sbr.rel (%p621) target = $region80
      $region79: #{trippy_forward.3} parent=23 // pred_region
        %p624 = scmp.lt.s32.totalorder %s24, 1
        %s625 = scalar_select %p624, %s24, 1
        %s626 = scalar_lea.vmem %s15, %s625
      $region80: #{trippy_forward.3} parent=23 // pred_fallthru
        _
      // Predicated region
      $region81: #{trippy_forward.3} parent=23 // pred_check
        %p627 = pneg %p450
      $region82: #{trippy_forward.3} parent=23 // pred_check_branch
        %629 = sbr.rel (%p627) target = $region84
      $region83: #{trippy_forward.3} parent=23 // pred_region
        %p630 = scmp.lt.s32.totalorder %s24, 1
        %s631 = scalar_select %p630, %s24, 1
        %s632 = scalar_lea.vmem %s16, %s631
      $region84: #{trippy_forward.3} parent=23 // pred_fallthru
        _
      // Predicated region
      $region85: #{trippy_forward.3} parent=23 // pred_check
        %p633 = pneg %p476
      $region86: #{trippy_forward.3} parent=23 // pred_check_branch
        %635 = sbr.rel (%p633) target = $region88
      $region87: #{trippy_forward.3} parent=23 // pred_region
        %p636 = scmp.lt.s32.totalorder %s24, 1
        %s637 = scalar_select %p636, %s24, 1
        %s638 = scalar_lea.vmem %s17, %s637
      $region88: #{trippy_forward.3} parent=23 // pred_fallthru
        _
    $region24: #{trippy_forward.3} parent=5 // pred_fallthru
      _
    %p639 = scmp.le.s32.totalorder 1, %s24
    %p640 = scmp.lt.s32.totalorder %s24, 3
    %p641 = pnand %p639, %p640
    %p642 = pneg %p641
    // Predicated region
    $region89: #{trippy_forward.3} parent=5 // pred_check
      _
    $region90: #{trippy_forward.3} parent=5 // pred_check_branch
      %644 = sbr.rel (%p641) target = $region92
    $region91: #{trippy_forward.3} parent=5 // pred_region
      %s645 = ssub.s32 %s24, 1
      %p646 = pneg %p45
      %p647 = pneg %p42
      %p648 = pneg %p66
      %p649 = pneg %p63
      %p650 = scmp.lt.s32.totalorder %s29, 1
      %s651 = scalar_select %p650, %s29, 1
      %s652 = smul.addr %s651, 16
      %s653 = smul.addr %s652, 8
      %s654 = scalar_lea.vmem %s2, %s653
      %p655 = pneg %p92
      %p656 = pneg %p89
      %p657 = scmp.lt.s32.totalorder %s29, 1
      %s658 = scalar_select %p657, %s29, 1
      %s659 = smul.addr %s658, 16
      %s660 = smul.addr %s659, 8
      %s661 = scalar_lea.vmem %s3, %s660
      %p662 = pneg %p118
      %p663 = pneg %p115
      %p664 = scmp.lt.s32.totalorder %s29, 1
      %s665 = scalar_select %p664, %s29, 1
      %s666 = smul.addr %s665, 16
      %s667 = smul.addr %s666, 8
      %s668 = scalar_lea.vmem %s4, %s667
      %p669 = pneg %p144
      %p670 = pneg %p141
      %p671 = scmp.lt.s32.totalorder %s29, 1
      %s672 = scalar_select %p671, %s29, 1
      %s673 = smul.addr %s672, 4
      %s674 = scalar_lea.vmem %s5, %s673
      %p675 = pneg %p170
      %p676 = pneg %p167
      %p677 = scmp.lt.s32.totalorder %s29, 1
      %s678 = scalar_select %p677, %s29, 1
      %s679 = smul.addr %s678, 4
      %s680 = scalar_lea.vmem %s6, %s679
      %p681 = pneg %p196
      %p682 = pneg %p193
      %p683 = scmp.lt.s32.totalorder %s29, 1
      %s684 = scalar_select %p683, %s29, 1
      %s685 = smul.addr %s684, 4
      %s686 = scalar_lea.vmem %s7, %s685
      %p687 = pneg %p222
      %p688 = pneg %p219
      %p689 = scmp.lt.s32.totalorder %s29, 1
      %s690 = scalar_select %p689, %s29, 1
      %s691 = smul.addr %s690, 4
      %s692 = smul.addr %s691, 8
      %s693 = scalar_lea.vmem %s8, %s692
      %p694 = pneg %p248
      %p695 = pneg %p245
      %p696 = scmp.lt.s32.totalorder %s29, 1
      %s697 = scalar_select %p696, %s29, 1
      %s698 = scalar_lea.vmem %s9, %s697
      %p699 = pneg %p274
      %p700 = pneg %p271
      %p701 = scmp.lt.s32.totalorder %s29, 1
      %s702 = scalar_select %p701, %s29, 1
      %s703 = scalar_lea.vmem %s10, %s702
      %p704 = pneg %p300
      %p705 = pneg %p297
      %p706 = scmp.lt.s32.totalorder %s29, 1
      %s707 = scalar_select %p706, %s29, 1
      %s708 = scalar_lea.vmem %s11, %s707
      %p709 = pneg %p326
      %p710 = pneg %p323
      %p711 = scmp.lt.s32.totalorder %s29, 1
      %s712 = scalar_select %p711, %s29, 1
      %s713 = smul.addr %s712, 4
      %s714 = smul.addr %s713, 8
      %s715 = scalar_lea.vmem %s12, %s714
      %p716 = pneg %p352
      %p717 = pneg %p349
      %p718 = scmp.lt.s32.totalorder %s29, 1
      %s719 = scalar_select %p718, %s29, 1
      %s720 = scalar_lea.vmem %s13, %s719
      %p721 = pneg %p378
      %p722 = pneg %p375
      %p723 = scmp.lt.s32.totalorder %s29, 1
      %s724 = scalar_select %p723, %s29, 1
      %s725 = smul.addr %s724, 8
      %s726 = smul.addr %s725, 8
      %s727 = scalar_lea.vmem %s14, %s726
      %p728 = pneg %p404
      %p729 = pneg %p401
      %p730 = scmp.lt.s32.totalorder %s29, 1
      %s731 = scalar_select %p730, %s29, 1
      %s732 = scalar_lea.vmem %s15, %s731
      %p733 = pneg %p430
      %p734 = pneg %p427
      %p735 = scmp.lt.s32.totalorder %s29, 1
      %s736 = scalar_select %p735, %s29, 1
      %s737 = scalar_lea.vmem %s16, %s736
      %p738 = pneg %p456
      %p739 = pneg %p453
      %p740 = scmp.lt.s32.totalorder %s29, 1
      %s741 = scalar_select %p740, %s29, 1
      %s742 = scalar_lea.vmem %s17, %s741
      %p743 = pneg %p482
      %p744 = pneg %p479
      %p745 = pneg %p503
      %p746 = pneg %p500
      %p747 = scmp.lt.s32.totalorder %s29, 1
      %s748 = scalar_select %p747, %s29, 1
      %s749 = smul.addr %s748, 16
      %s750 = smul.addr %s749, 8
      %s751 = scalar_lea.vmem %s2, %s750
      %p752 = scmp.lt.s32.totalorder %s29, 1
      %s753 = scalar_select %p752, %s29, 1
      %s754 = smul.addr %s753, 16
      %s755 = smul.addr %s754, 8
      %s756 = scalar_lea.vmem %s3, %s755
      %p757 = scmp.lt.s32.totalorder %s29, 1
      %s758 = scalar_select %p757, %s29, 1
      %s759 = smul.addr %s758, 16
      %s760 = smul.addr %s759, 8
      %s761 = scalar_lea.vmem %s4, %s760
      %p762 = scmp.lt.s32.totalorder %s29, 1
      %s763 = scalar_select %p762, %s29, 1
      %s764 = smul.addr %s763, 4
      %s765 = scalar_lea.vmem %s5, %s764
      %p766 = scmp.lt.s32.totalorder %s29, 1
      %s767 = scalar_select %p766, %s29, 1
      %s768 = smul.addr %s767, 4
      %s769 = scalar_lea.vmem %s6, %s768
      %p770 = scmp.lt.s32.totalorder %s29, 1
      %s771 = scalar_select %p770, %s29, 1
      %s772 = smul.addr %s771, 4
      %s773 = scalar_lea.vmem %s7, %s772
      %p774 = scmp.lt.s32.totalorder %s29, 1
      %s775 = scalar_select %p774, %s29, 1
      %s776 = smul.addr %s775, 4
      %s777 = smul.addr %s776, 8
      %s778 = scalar_lea.vmem %s8, %s777
      %p779 = scmp.lt.s32.totalorder %s29, 1
      %s780 = scalar_select %p779, %s29, 1
      %s781 = scalar_lea.vmem %s9, %s780
      %p782 = scmp.lt.s32.totalorder %s29, 1
      %s783 = scalar_select %p782, %s29, 1
      %s784 = scalar_lea.vmem %s10, %s783
      %p785 = scmp.lt.s32.totalorder %s29, 1
      %s786 = scalar_select %p785, %s29, 1
      %s787 = scalar_lea.vmem %s11, %s786
      %p788 = scmp.lt.s32.totalorder %s29, 1
      %s789 = scalar_select %p788, %s29, 1
      %s790 = smul.addr %s789, 4
      %s791 = smul.addr %s790, 8
      %s792 = scalar_lea.vmem %s12, %s791
      %p793 = scmp.lt.s32.totalorder %s29, 1
      %s794 = scalar_select %p793, %s29, 1
      %s795 = scalar_lea.vmem %s13, %s794
      %p796 = scmp.lt.s32.totalorder %s29, 1
      %s797 = scalar_select %p796, %s29, 1
      %s798 = smul.addr %s797, 8
      %s799 = smul.addr %s798, 8
      %s800 = scalar_lea.vmem %s14, %s799
      %p801 = scmp.lt.s32.totalorder %s29, 1
      %s802 = scalar_select %p801, %s29, 1
      %s803 = scalar_lea.vmem %s15, %s802
      %p804 = scmp.lt.s32.totalorder %s29, 1
      %s805 = scalar_select %p804, %s29, 1
      %s806 = scalar_lea.vmem %s16, %s805
      %p807 = scmp.lt.s32.totalorder %s29, 1
      %s808 = scalar_select %p807, %s29, 1
      %s809 = scalar_lea.vmem %s17, %s808
      %p810 = scmp.eq.s32.totalorder %s29, 0
      // Predicated region
      $region93: #{trippy_forward.3} parent=91 // pred_check
        %p811 = pneg %p810
      $region94: #{trippy_forward.3} parent=91 // pred_check_branch
        %813 = sbr.rel (%p811) target = $region96
      $region95: #{trippy_forward.3} parent=91 // pred_region
        %v814 = vld [vmem:[%s0] sm:$0xff]
        %v815 = vld [vmem:[%s0 + $0x8] sm:$0xff]
        %vm816 = vcmask 261120
        %817 = vst.msk [vmem:[%s18] sm:$0xff] %vm816, %v814
        %818 = vst.msk [vmem:[%s18 + $0x8] sm:$0xff] %vm816, %v815
      $region96: #{trippy_forward.3} parent=91 // pred_fallthru
        _
      %v819 = vld [vmem:[%s18] sm:$0xff]
      %v820 = vld [vmem:[%s18 + $0x8] sm:$0xff]
      %v821 = vld [vmem:[%s751] sm:$0xff]
      %v822 = vld [vmem:[%s751 + $0x8] sm:$0xff]
      %v823 = vld [vmem:[%s751 + $0x10] sm:$0xff]
      %v824 = vld [vmem:[%s751 + $0x18] sm:$0xff]
      %v825 = vld [vmem:[%s765] sm:$0x1]
      %v827 = vperm.slane %v825, 0
      %vm829 = vcmask 261120
      %v831 = vsel %vm829, %v819, 0
      %v834 = vsel %vm829, %v820, 0
      %836 = vmatpush.msra.mxu0 0.0
      %837 = vmatpush.msra.mxu0 0.0
      %838 = vmatpush.msra.mxu0 0.0
      %839 = vmatpush.msra.mxu0 0.0
      %840 = vmatpush.msra.mxu0 0.0
      %841 = vmatpush.msra.mxu0 0.0
      %842 = vmatpush.msra.mxu0 0.0
      %843 = vmatpush.msra.mxu0 0.0
      %844 = vmatpush.msra.mxu0 0.0
      %845 = vmatpush.msra.mxu0 0.0
      %846 = vmatpush.msra.mxu0 0.0
      %847 = vmatpush.msra.mxu0 0.0
      %848 = vmatpush.msra.mxu0 %v824
      %849 = vmatpush.msra.mxu0 %v823
      %850 = vmatpush.msra.mxu0 %v822
      %851 = vmatpush.msra.mxu0 %v821
      %852 = vmatmul.f32.gmra.mxu0 %v831
      %v853 = vpop.f32.mrf.mxu0
      %v854 = vadd.f32 %v827, %v853
      %855 = vmatmul.f32.gmra.mxu0 %v834
      %v856 = vpop.f32.mrf.mxu0
      %v857 = vadd.f32 %v827, %v856
      %858 = vdwg.mxu0
      %v859 = vld [vmem:[%s756] sm:$0xff]
      %v860 = vld [vmem:[%s756 + $0x8] sm:$0xff]
      %v861 = vld [vmem:[%s756 + $0x10] sm:$0xff]
      %v862 = vld [vmem:[%s756 + $0x18] sm:$0xff]
      %v863 = vld [vmem:[%s769] sm:$0x1]
      %v865 = vperm.slane %v863, 0
      %867 = vmatpush.msra.mxu0 0.0
      %868 = vmatpush.msra.mxu0 0.0
      %869 = vmatpush.msra.mxu0 0.0
      %870 = vmatpush.msra.mxu0 0.0
      %871 = vmatpush.msra.mxu0 0.0
      %872 = vmatpush.msra.mxu0 0.0
      %873 = vmatpush.msra.mxu0 0.0
      %874 = vmatpush.msra.mxu0 0.0
      %875 = vmatpush.msra.mxu0 0.0
      %876 = vmatpush.msra.mxu0 0.0
      %877 = vmatpush.msra.mxu0 0.0
      %878 = vmatpush.msra.mxu0 0.0
      %879 = vmatpush.msra.mxu0 %v862
      %880 = vmatpush.msra.mxu0 %v861
      %881 = vmatpush.msra.mxu0 %v860
      %882 = vmatpush.msra.mxu0 %v859
      %883 = vmatmul.f32.gmra.mxu0 %v831
      %v884 = vpop.f32.mrf.mxu0
      %v885 = vadd.f32 %v865, %v884
      %886 = vmatmul.f32.gmra.mxu0 %v834
      %v887 = vpop.f32.mrf.mxu0
      %v888 = vadd.f32 %v865, %v887
      %889 = vdwg.mxu0
      %v890 = vld [vmem:[%s761] sm:$0xff]
      %v891 = vld [vmem:[%s761 + $0x8] sm:$0xff]
      %v892 = vld [vmem:[%s761 + $0x10] sm:$0xff]
      %v893 = vld [vmem:[%s761 + $0x18] sm:$0xff]
      %v894 = vld [vmem:[%s773] sm:$0x1]
      %v896 = vperm.slane %v894, 0
      %898 = vmatpush.msra.mxu0 0.0
      %899 = vmatpush.msra.mxu0 0.0
      %900 = vmatpush.msra.mxu0 0.0
      %901 = vmatpush.msra.mxu0 0.0
      %902 = vmatpush.msra.mxu0 0.0
      %903 = vmatpush.msra.mxu0 0.0
      %904 = vmatpush.msra.mxu0 0.0
      %905 = vmatpush.msra.mxu0 0.0
      %906 = vmatpush.msra.mxu0 0.0
      %907 = vmatpush.msra.mxu0 0.0
      %908 = vmatpush.msra.mxu0 0.0
      %909 = vmatpush.msra.mxu0 0.0
      %910 = vmatpush.msra.mxu0 %v893
      %911 = vmatpush.msra.mxu0 %v892
      %912 = vmatpush.msra.mxu0 %v891
      %913 = vmatpush.msra.mxu0 %v890
      %914 = vmatmul.f32.gmra.mxu0 %v831
      %v915 = vpop.f32.mrf.mxu0
      %v916 = vadd.f32 %v896, %v915
      %917 = vmatmul.f32.gmra.mxu0 %v834
      %v918 = vpop.f32.mrf.mxu0
      %v919 = vadd.f32 %v896, %v918
      %920 = vdwg.mxu0
      %vm921 = vcmask 64512
      %v923 = vsel %vm921, %v854, 0
      %v926 = vsel %vm921, %v885, 0
      %928 = vmatpush.xpose.msra.mxu0 0.0
      %929 = vmatpush.xpose.msra.mxu0 0.0
      %930 = vmatpush.xpose.msra.mxu0 0.0
      %931 = vmatpush.xpose.msra.mxu0 0.0
      %932 = vmatpush.xpose.msra.mxu0 0.0
      %933 = vmatpush.xpose.msra.mxu0 0.0
      %934 = vmatpush.xpose.msra.mxu0 0.0
      %935 = vmatpush.xpose.msra.mxu0 0.0
      %936 = vmatpush.xpose.msra.mxu0 0.0
      %937 = vmatpush.xpose.msra.mxu0 0.0
      %938 = vmatpush.xpose.msra.mxu0 0.0
      %939 = vmatpush.xpose.msra.mxu0 0.0
      %940 = vmatpush.xpose.msra.mxu0 0.0
      %941 = vmatpush.xpose.msra.mxu0 0.0
      %942 = vmatpush.xpose.msra.mxu0 0.0
      %943 = vmatpush.xpose.msra.mxu0 %v926
      %944 = vmatmul.f32.gmra.mxu0 %v923
      %v945 = vpop.f32.mrf.mxu0
      %v946 = vadd.f32 0.0, %v945
      %947 = vdwg.mxu0
      %v948 = vmul.f32 %v946, 0.35355338
      %v949 = vld [vmem:[%s1] sm:$0x1]
      %v951 = vperm.slane %v949, 0
      %v953 = vadd.f32 %v948, %v951
      %v954 = vsel %vm921, %v953, -inf
      %955 = vmax.xlane.f32.xlu0 %v954
      %v956 = vpop.xlane.xlu0 %955
      %v957 = vsub.f32 %v953, %v956
      %v958 = vmul.f32 %v957, 1.442695
      %v959 = vpow.pop %v958
      %v960 = vsel %vm921, %v959, 0.0
      %961 = vadd.xlane.f32.xlu0 %v960
      %v962 = vpop.xlane.xlu0 %961
      %v963 = vrcp.pop %v962
      %v964 = vmul.f32 %v962, %v963
      %v965 = vsub.f32 1.0, %v964
      %v966 = vmul.f32 %v963, %v965
      %v967 = vadd.f32 %v963, %v966
      %vm968 = vweird.f32 %v962
      %vm969 = vweird.f32 %v963
      %vm970 = vmor %vm968, %vm969
      %v971 = vsel %vm970, %v963, %v967
      %v972 = vand.u32 2147483647, %v962
      %vm973 = vcmp.eq.f32.partialorder %v972, 8.507059e+37
      %v974 = vand.u32 %v962, 2147483648
      %v975 = vor.u32 1.1754944e-38, %v974
      %v976 = vsel %vm973, %v975, %v971
      %v977 = vmul.f32 %v959, %v976
      %v979 = vsel %vm921, %v977, 0
      %981 = vmatpush.msra.mxu0 0.0
      %982 = vmatpush.msra.mxu0 0.0
      %983 = vmatpush.msra.mxu0 0.0
      %984 = vmatpush.msra.mxu0 0.0
      %985 = vmatpush.msra.mxu0 0.0
      %986 = vmatpush.msra.mxu0 0.0
      %987 = vmatpush.msra.mxu0 0.0
      %988 = vmatpush.msra.mxu0 0.0
      %989 = vmatpush.msra.mxu0 0.0
      %990 = vmatpush.msra.mxu0 0.0
      %991 = vmatpush.msra.mxu0 0.0
      %992 = vmatpush.msra.mxu0 0.0
      %993 = vmatpush.msra.mxu0 0.0
      %994 = vmatpush.msra.mxu0 0.0
      %995 = vmatpush.msra.mxu0 0.0
      %996 = vmatpush.msra.mxu0 %v916
      %997 = vmatmul.f32.gmra.mxu0 %v979
      %v998 = vpop.f32.mrf.mxu0
      %v999 = vadd.f32 0.0, %v998
      %1000 = vdwg.mxu0
      %v1002 = vsel %vm921, %v857, 0
      %v1005 = vsel %vm921, %v888, 0
      %1007 = vmatpush.xpose.msra.mxu0 0.0
      %1008 = vmatpush.xpose.msra.mxu0 0.0
      %1009 = vmatpush.xpose.msra.mxu0 0.0
      %1010 = vmatpush.xpose.msra.mxu0 0.0
      %1011 = vmatpush.xpose.msra.mxu0 0.0
      %1012 = vmatpush.xpose.msra.mxu0 0.0
      %1013 = vmatpush.xpose.msra.mxu0 0.0
      %1014 = vmatpush.xpose.msra.mxu0 0.0
      %1015 = vmatpush.xpose.msra.mxu0 0.0
      %1016 = vmatpush.xpose.msra.mxu0 0.0
      %1017 = vmatpush.xpose.msra.mxu0 0.0
      %1018 = vmatpush.xpose.msra.mxu0 0.0
      %1019 = vmatpush.xpose.msra.mxu0 0.0
      %1020 = vmatpush.xpose.msra.mxu0 0.0
      %1021 = vmatpush.xpose.msra.mxu0 0.0
      %1022 = vmatpush.xpose.msra.mxu0 %v1005
      %1023 = vmatmul.f32.gmra.mxu0 %v1002
      %v1024 = vpop.f32.mrf.mxu0
      %v1025 = vadd.f32 0.0, %v1024
      %1026 = vdwg.mxu0
      %v1027 = vmul.f32 %v1025, 0.35355338
      %s1028 = scalar_lea.vmem %s1, 1
      %v1029 = vld [vmem:[%s1028] sm:$0x1]
      %v1031 = vperm.slane %v1029, 0
      %v1033 = vadd.f32 %v1027, %v1031
      %v1034 = vsel %vm921, %v1033, -inf
      %1035 = vmax.xlane.f32.xlu0 %v1034
      %v1036 = vpop.xlane.xlu0 %1035
      %v1037 = vsub.f32 %v1033, %v1036
      %v1038 = vmul.f32 %v1037, 1.442695
      %v1039 = vpow.pop %v1038
      %v1040 = vsel %vm921, %v1039, 0.0
      %1041 = vadd.xlane.f32.xlu0 %v1040
      %v1042 = vpop.xlane.xlu0 %1041
      %v1043 = vrcp.pop %v1042
      %v1044 = vmul.f32 %v1042, %v1043
      %v1045 = vsub.f32 1.0, %v1044
      %v1046 = vmul.f32 %v1043, %v1045
      %v1047 = vadd.f32 %v1043, %v1046
      %vm1048 = vweird.f32 %v1042
      %vm1049 = vweird.f32 %v1043
      %vm1050 = vmor %vm1048, %vm1049
      %v1051 = vsel %vm1050, %v1043, %v1047
      %v1052 = vand.u32 2147483647, %v1042
      %vm1053 = vcmp.eq.f32.partialorder %v1052, 8.507059e+37
      %v1054 = vand.u32 %v1042, 2147483648
      %v1055 = vor.u32 1.1754944e-38, %v1054
      %v1056 = vsel %vm1053, %v1055, %v1051
      %v1057 = vmul.f32 %v1039, %v1056
      %v1059 = vsel %vm921, %v1057, 0
      %1061 = vmatpush.msra.mxu0 0.0
      %1062 = vmatpush.msra.mxu0 0.0
      %1063 = vmatpush.msra.mxu0 0.0
      %1064 = vmatpush.msra.mxu0 0.0
      %1065 = vmatpush.msra.mxu0 0.0
      %1066 = vmatpush.msra.mxu0 0.0
      %1067 = vmatpush.msra.mxu0 0.0
      %1068 = vmatpush.msra.mxu0 0.0
      %1069 = vmatpush.msra.mxu0 0.0
      %1070 = vmatpush.msra.mxu0 0.0
      %1071 = vmatpush.msra.mxu0 0.0
      %1072 = vmatpush.msra.mxu0 0.0
      %1073 = vmatpush.msra.mxu0 0.0
      %1074 = vmatpush.msra.mxu0 0.0
      %1075 = vmatpush.msra.mxu0 0.0
      %1076 = vmatpush.msra.mxu0 %v919
      %1077 = vmatmul.f32.gmra.mxu0 %v1059
      %v1078 = vpop.f32.mrf.mxu0
      %v1079 = vadd.f32 0.0, %v1078
      %1080 = vdwg.mxu0
      %v1081 = vld [vmem:[%s778] sm:$0xff]
      %s1082 = scalar_lea.vmem %s751, 32
      %v1083 = vld [vmem:[%s1082] sm:$0xff]
      %v1084 = vld [vmem:[%s1082 + $0x8] sm:$0xff]
      %v1085 = vld [vmem:[%s1082 + $0x10] sm:$0xff]
      %v1086 = vld [vmem:[%s1082 + $0x18] sm:$0xff]
      %s1087 = scalar_lea.vmem %s765, 1
      %v1088 = vld [vmem:[%s1087] sm:$0x1]
      %v1090 = vperm.slane %v1088, 0
      %1092 = vmatpush.msra.mxu0 0.0
      %1093 = vmatpush.msra.mxu0 0.0
      %1094 = vmatpush.msra.mxu0 0.0
      %1095 = vmatpush.msra.mxu0 0.0
      %1096 = vmatpush.msra.mxu0 0.0
      %1097 = vmatpush.msra.mxu0 0.0
      %1098 = vmatpush.msra.mxu0 0.0
      %1099 = vmatpush.msra.mxu0 0.0
      %1100 = vmatpush.msra.mxu0 0.0
      %1101 = vmatpush.msra.mxu0 0.0
      %1102 = vmatpush.msra.mxu0 0.0
      %1103 = vmatpush.msra.mxu0 0.0
      %1104 = vmatpush.msra.mxu0 %v1086
      %1105 = vmatpush.msra.mxu0 %v1085
      %1106 = vmatpush.msra.mxu0 %v1084
      %1107 = vmatpush.msra.mxu0 %v1083
      %1108 = vmatmul.f32.gmra.mxu0 %v831
      %v1109 = vpop.f32.mrf.mxu0
      %v1110 = vadd.f32 %v1090, %v1109
      %1111 = vmatmul.f32.gmra.mxu0 %v834
      %v1112 = vpop.f32.mrf.mxu0
      %v1113 = vadd.f32 %v1090, %v1112
      %1114 = vdwg.mxu0
      %s1115 = scalar_lea.vmem %s756, 32
      %v1116 = vld [vmem:[%s1115] sm:$0xff]
      %v1117 = vld [vmem:[%s1115 + $0x8] sm:$0xff]
      %v1118 = vld [vmem:[%s1115 + $0x10] sm:$0xff]
      %v1119 = vld [vmem:[%s1115 + $0x18] sm:$0xff]
      %s1120 = scalar_lea.vmem %s769, 1
      %v1121 = vld [vmem:[%s1120] sm:$0x1]
      %v1123 = vperm.slane %v1121, 0
      %1125 = vmatpush.msra.mxu0 0.0
      %1126 = vmatpush.msra.mxu0 0.0
      %1127 = vmatpush.msra.mxu0 0.0
      %1128 = vmatpush.msra.mxu0 0.0
      %1129 = vmatpush.msra.mxu0 0.0
      %1130 = vmatpush.msra.mxu0 0.0
      %1131 = vmatpush.msra.mxu0 0.0
      %1132 = vmatpush.msra.mxu0 0.0
      %1133 = vmatpush.msra.mxu0 0.0
      %1134 = vmatpush.msra.mxu0 0.0
      %1135 = vmatpush.msra.mxu0 0.0
      %1136 = vmatpush.msra.mxu0 0.0
      %1137 = vmatpush.msra.mxu0 %v1119
      %1138 = vmatpush.msra.mxu0 %v1118
      %1139 = vmatpush.msra.mxu0 %v1117
      %1140 = vmatpush.msra.mxu0 %v1116
      %1141 = vmatmul.f32.gmra.mxu0 %v831
      %v1142 = vpop.f32.mrf.mxu0
      %v1143 = vadd.f32 %v1123, %v1142
      %1144 = vmatmul.f32.gmra.mxu0 %v834
      %v1145 = vpop.f32.mrf.mxu0
      %v1146 = vadd.f32 %v1123, %v1145
      %1147 = vdwg.mxu0
      %s1148 = scalar_lea.vmem %s761, 32
      %v1149 = vld [vmem:[%s1148] sm:$0xff]
      %v1150 = vld [vmem:[%s1148 + $0x8] sm:$0xff]
      %v1151 = vld [vmem:[%s1148 + $0x10] sm:$0xff]
      %v1152 = vld [vmem:[%s1148 + $0x18] sm:$0xff]
      %s1153 = scalar_lea.vmem %s773, 1
      %v1154 = vld [vmem:[%s1153] sm:$0x1]
      %v1156 = vperm.slane %v1154, 0
      %1158 = vmatpush.msra.mxu0 0.0
      %1159 = vmatpush.msra.mxu0 0.0
      %1160 = vmatpush.msra.mxu0 0.0
      %1161 = vmatpush.msra.mxu0 0.0
      %1162 = vmatpush.msra.mxu0 0.0
      %1163 = vmatpush.msra.mxu0 0.0
      %1164 = vmatpush.msra.mxu0 0.0
      %1165 = vmatpush.msra.mxu0 0.0
      %1166 = vmatpush.msra.mxu0 0.0
      %1167 = vmatpush.msra.mxu0 0.0
      %1168 = vmatpush.msra.mxu0 0.0
      %1169 = vmatpush.msra.mxu0 0.0
      %1170 = vmatpush.msra.mxu0 %v1152
      %1171 = vmatpush.msra.mxu0 %v1151
      %1172 = vmatpush.msra.mxu0 %v1150
      %1173 = vmatpush.msra.mxu0 %v1149
      %1174 = vmatmul.f32.gmra.mxu0 %v831
      %v1175 = vpop.f32.mrf.mxu0
      %v1176 = vadd.f32 %v1156, %v1175
      %1177 = vmatmul.f32.gmra.mxu0 %v834
      %v1178 = vpop.f32.mrf.mxu0
      %v1179 = vadd.f32 %v1156, %v1178
      %1180 = vdwg.mxu0
      %v1182 = vsel %vm921, %v1110, 0
      %v1185 = vsel %vm921, %v1143, 0
      %1187 = vmatpush.xpose.msra.mxu0 0.0
      %1188 = vmatpush.xpose.msra.mxu0 0.0
      %1189 = vmatpush.xpose.msra.mxu0 0.0
      %1190 = vmatpush.xpose.msra.mxu0 0.0
      %1191 = vmatpush.xpose.msra.mxu0 0.0
      %1192 = vmatpush.xpose.msra.mxu0 0.0
      %1193 = vmatpush.xpose.msra.mxu0 0.0
      %1194 = vmatpush.xpose.msra.mxu0 0.0
      %1195 = vmatpush.xpose.msra.mxu0 0.0
      %1196 = vmatpush.xpose.msra.mxu0 0.0
      %1197 = vmatpush.xpose.msra.mxu0 0.0
      %1198 = vmatpush.xpose.msra.mxu0 0.0
      %1199 = vmatpush.xpose.msra.mxu0 0.0
      %1200 = vmatpush.xpose.msra.mxu0 0.0
      %1201 = vmatpush.xpose.msra.mxu0 0.0
      %1202 = vmatpush.xpose.msra.mxu0 %v1185
      %1203 = vmatmul.f32.gmra.mxu0 %v1182
      %v1204 = vpop.f32.mrf.mxu0
      %v1205 = vadd.f32 0.0, %v1204
      %1206 = vdwg.mxu0
      %v1207 = vmul.f32 %v1205, 0.35355338
      %v1208 = vadd.f32 %v1207, %v951
      %v1209 = vsel %vm921, %v1208, -inf
      %1210 = vmax.xlane.f32.xlu0 %v1209
      %v1211 = vpop.xlane.xlu0 %1210
      %v1212 = vsub.f32 %v1208, %v1211
      %v1213 = vmul.f32 %v1212, 1.442695
      %v1214 = vpow.pop %v1213
      %v1215 = vsel %vm921, %v1214, 0.0
      %1216 = vadd.xlane.f32.xlu0 %v1215
      %v1217 = vpop.xlane.xlu0 %1216
      %v1218 = vrcp.pop %v1217
      %v1219 = vmul.f32 %v1217, %v1218
      %v1220 = vsub.f32 1.0, %v1219
      %v1221 = vmul.f32 %v1218, %v1220
      %v1222 = vadd.f32 %v1218, %v1221
      %vm1223 = vweird.f32 %v1217
      %vm1224 = vweird.f32 %v1218
      %vm1225 = vmor %vm1223, %vm1224
      %v1226 = vsel %vm1225, %v1218, %v1222
      %v1227 = vand.u32 2147483647, %v1217
      %vm1228 = vcmp.eq.f32.partialorder %v1227, 8.507059e+37
      %v1229 = vand.u32 %v1217, 2147483648
      %v1230 = vor.u32 1.1754944e-38, %v1229
      %v1231 = vsel %vm1228, %v1230, %v1226
      %v1232 = vmul.f32 %v1214, %v1231
      %v1234 = vsel %vm921, %v1232, 0
      %1236 = vmatpush.msra.mxu0 0.0
      %1237 = vmatpush.msra.mxu0 0.0
      %1238 = vmatpush.msra.mxu0 0.0
      %1239 = vmatpush.msra.mxu0 0.0
      %1240 = vmatpush.msra.mxu0 0.0
      %1241 = vmatpush.msra.mxu0 0.0
      %1242 = vmatpush.msra.mxu0 0.0
      %1243 = vmatpush.msra.mxu0 0.0
      %1244 = vmatpush.msra.mxu0 0.0
      %1245 = vmatpush.msra.mxu0 0.0
      %1246 = vmatpush.msra.mxu0 0.0
      %1247 = vmatpush.msra.mxu0 0.0
      %1248 = vmatpush.msra.mxu0 0.0
      %1249 = vmatpush.msra.mxu0 0.0
      %1250 = vmatpush.msra.mxu0 0.0
      %1251 = vmatpush.msra.mxu0 %v1176
      %1252 = vmatmul.f32.gmra.mxu0 %v1234
      %v1253 = vpop.f32.mrf.mxu0
      %v1254 = vadd.f32 0.0, %v1253
      %1255 = vdwg.mxu0
      %v1257 = vsel %vm921, %v1113, 0
      %v1260 = vsel %vm921, %v1146, 0
      %1262 = vmatpush.xpose.msra.mxu0 0.0
      %1263 = vmatpush.xpose.msra.mxu0 0.0
      %1264 = vmatpush.xpose.msra.mxu0 0.0
      %1265 = vmatpush.xpose.msra.mxu0 0.0
      %1266 = vmatpush.xpose.msra.mxu0 0.0
      %1267 = vmatpush.xpose.msra.mxu0 0.0
      %1268 = vmatpush.xpose.msra.mxu0 0.0
      %1269 = vmatpush.xpose.msra.mxu0 0.0
      %1270 = vmatpush.xpose.msra.mxu0 0.0
      %1271 = vmatpush.xpose.msra.mxu0 0.0
      %1272 = vmatpush.xpose.msra.mxu0 0.0
      %1273 = vmatpush.xpose.msra.mxu0 0.0
      %1274 = vmatpush.xpose.msra.mxu0 0.0
      %1275 = vmatpush.xpose.msra.mxu0 0.0
      %1276 = vmatpush.xpose.msra.mxu0 0.0
      %1277 = vmatpush.xpose.msra.mxu0 %v1260
      %1278 = vmatmul.f32.gmra.mxu0 %v1257
      %v1279 = vpop.f32.mrf.mxu0
      %v1280 = vadd.f32 0.0, %v1279
      %1281 = vdwg.mxu0
      %v1282 = vmul.f32 %v1280, 0.35355338
      %v1283 = vadd.f32 %v1282, %v1031
      %v1284 = vsel %vm921, %v1283, -inf
      %1285 = vmax.xlane.f32.xlu0 %v1284
      %v1286 = vpop.xlane.xlu0 %1285
      %v1287 = vsub.f32 %v1283, %v1286
      %v1288 = vmul.f32 %v1287, 1.442695
      %v1289 = vpow.pop %v1288
      %v1290 = vsel %vm921, %v1289, 0.0
      %1291 = vadd.xlane.f32.xlu0 %v1290
      %v1292 = vpop.xlane.xlu0 %1291
      %v1293 = vrcp.pop %v1292
      %v1294 = vmul.f32 %v1292, %v1293
      %v1295 = vsub.f32 1.0, %v1294
      %v1296 = vmul.f32 %v1293, %v1295
      %v1297 = vadd.f32 %v1293, %v1296
      %vm1298 = vweird.f32 %v1292
      %vm1299 = vweird.f32 %v1293
      %vm1300 = vmor %vm1298, %vm1299
      %v1301 = vsel %vm1300, %v1293, %v1297
      %v1302 = vand.u32 2147483647, %v1292
      %vm1303 = vcmp.eq.f32.partialorder %v1302, 8.507059e+37
      %v1304 = vand.u32 %v1292, 2147483648
      %v1305 = vor.u32 1.1754944e-38, %v1304
      %v1306 = vsel %vm1303, %v1305, %v1301
      %v1307 = vmul.f32 %v1289, %v1306
      %v1309 = vsel %vm921, %v1307, 0
      %1311 = vmatpush.msra.mxu0 0.0
      %1312 = vmatpush.msra.mxu0 0.0
      %1313 = vmatpush.msra.mxu0 0.0
      %1314 = vmatpush.msra.mxu0 0.0
      %1315 = vmatpush.msra.mxu0 0.0
      %1316 = vmatpush.msra.mxu0 0.0
      %1317 = vmatpush.msra.mxu0 0.0
      %1318 = vmatpush.msra.mxu0 0.0
      %1319 = vmatpush.msra.mxu0 0.0
      %1320 = vmatpush.msra.mxu0 0.0
      %1321 = vmatpush.msra.mxu0 0.0
      %1322 = vmatpush.msra.mxu0 0.0
      %1323 = vmatpush.msra.mxu0 0.0
      %1324 = vmatpush.msra.mxu0 0.0
      %1325 = vmatpush.msra.mxu0 0.0
      %1326 = vmatpush.msra.mxu0 %v1179
      %1327 = vmatmul.f32.gmra.mxu0 %v1309
      %v1328 = vpop.f32.mrf.mxu0
      %v1329 = vadd.f32 0.0, %v1328
      %1330 = vdwg.mxu0
      %s1331 = scalar_lea.vmem %s778, 8
      %v1332 = vld [vmem:[%s1331] sm:$0xff]
      %v1334 = vsel %vm921, %v1254, 0
      %v1337 = vsel %vm921, %v1329, 0
      %1339 = vmatpush.msra.mxu0 0.0
      %1340 = vmatpush.msra.mxu0 0.0
      %1341 = vmatpush.msra.mxu0 0.0
      %1342 = vmatpush.msra.mxu0 0.0
      %1343 = vmatpush.msra.mxu0 0.0
      %1344 = vmatpush.msra.mxu0 0.0
      %1345 = vmatpush.msra.mxu0 0.0
      %1346 = vmatpush.msra.mxu0 0.0
      %1347 = vmatpush.msra.mxu0 0.0
      %1348 = vmatpush.msra.mxu0 0.0
      %1349 = vmatpush.msra.mxu0 0.0
      %1350 = vmatpush.msra.mxu0 0.0
      %1351 = vmatpush.msra.mxu0 0.0
      %1352 = vmatpush.msra.mxu0 0.0
      %1353 = vmatpush.msra.mxu0 0.0
      %1354 = vmatpush.msra.mxu0 %v1332
      %1355 = vmatmul.f32.gmra.mxu0 %v1334
      %v1356 = vpop.f32.mrf.mxu0
      %v1357 = vadd.f32 0.0, %v1356
      %1358 = vmatmul.f32.gmra.mxu0 %v1337
      %v1359 = vpop.f32.mrf.mxu0
      %v1360 = vadd.f32 0.0, %v1359
      %1361 = vdwg.mxu0
      %v1363 = vsel %vm921, %v999, 0
      %v1366 = vsel %vm921, %v1079, 0
      %1368 = vmatpush.msra.mxu0 0.0
      %1369 = vmatpush.msra.mxu0 0.0
      %1370 = vmatpush.msra.mxu0 0.0
      %1371 = vmatpush.msra.mxu0 0.0
      %1372 = vmatpush.msra.mxu0 0.0
      %1373 = vmatpush.msra.mxu0 0.0
      %1374 = vmatpush.msra.mxu0 0.0
      %1375 = vmatpush.msra.mxu0 0.0
      %1376 = vmatpush.msra.mxu0 0.0
      %1377 = vmatpush.msra.mxu0 0.0
      %1378 = vmatpush.msra.mxu0 0.0
      %1379 = vmatpush.msra.mxu0 0.0
      %1380 = vmatpush.msra.mxu0 0.0
      %1381 = vmatpush.msra.mxu0 0.0
      %1382 = vmatpush.msra.mxu0 0.0
      %1383 = vmatpush.msra.mxu0 %v1081
      %1384 = vmatmul.f32.gmra.mxu0 %v1363
      %v1385 = vpop.f32.mrf.mxu0
      %v1386 = vadd.f32 %v1357, %v1385
      %1387 = vmatmul.f32.gmra.mxu0 %v1366
      %v1388 = vpop.f32.mrf.mxu0
      %v1389 = vadd.f32 %v1360, %v1388
      %1390 = vdwg.mxu0
      %s1391 = scalar_lea.vmem %s751, 64
      %v1392 = vld [vmem:[%s1391] sm:$0xff]
      %v1393 = vld [vmem:[%s1391 + $0x8] sm:$0xff]
      %v1394 = vld [vmem:[%s1391 + $0x10] sm:$0xff]
      %v1395 = vld [vmem:[%s1391 + $0x18] sm:$0xff]
      %s1396 = scalar_lea.vmem %s765, 2
      %v1397 = vld [vmem:[%s1396] sm:$0x1]
      %v1399 = vperm.slane %v1397, 0
      %1401 = vmatpush.msra.mxu0 0.0
      %1402 = vmatpush.msra.mxu0 0.0
      %1403 = vmatpush.msra.mxu0 0.0
      %1404 = vmatpush.msra.mxu0 0.0
      %1405 = vmatpush.msra.mxu0 0.0
      %1406 = vmatpush.msra.mxu0 0.0
      %1407 = vmatpush.msra.mxu0 0.0
      %1408 = vmatpush.msra.mxu0 0.0
      %1409 = vmatpush.msra.mxu0 0.0
      %1410 = vmatpush.msra.mxu0 0.0
      %1411 = vmatpush.msra.mxu0 0.0
      %1412 = vmatpush.msra.mxu0 0.0
      %1413 = vmatpush.msra.mxu0 %v1395
      %1414 = vmatpush.msra.mxu0 %v1394
      %1415 = vmatpush.msra.mxu0 %v1393
      %1416 = vmatpush.msra.mxu0 %v1392
      %1417 = vmatmul.f32.gmra.mxu0 %v831
      %v1418 = vpop.f32.mrf.mxu0
      %v1419 = vadd.f32 %v1399, %v1418
      %1420 = vmatmul.f32.gmra.mxu0 %v834
      %v1421 = vpop.f32.mrf.mxu0
      %v1422 = vadd.f32 %v1399, %v1421
      %1423 = vdwg.mxu0
      %s1424 = scalar_lea.vmem %s756, 64
      %v1425 = vld [vmem:[%s1424] sm:$0xff]
      %v1426 = vld [vmem:[%s1424 + $0x8] sm:$0xff]
      %v1427 = vld [vmem:[%s1424 + $0x10] sm:$0xff]
      %v1428 = vld [vmem:[%s1424 + $0x18] sm:$0xff]
      %s1429 = scalar_lea.vmem %s769, 2
      %v1430 = vld [vmem:[%s1429] sm:$0x1]
      %v1432 = vperm.slane %v1430, 0
      %1434 = vmatpush.msra.mxu0 0.0
      %1435 = vmatpush.msra.mxu0 0.0
      %1436 = vmatpush.msra.mxu0 0.0
      %1437 = vmatpush.msra.mxu0 0.0
      %1438 = vmatpush.msra.mxu0 0.0
      %1439 = vmatpush.msra.mxu0 0.0
      %1440 = vmatpush.msra.mxu0 0.0
      %1441 = vmatpush.msra.mxu0 0.0
      %1442 = vmatpush.msra.mxu0 0.0
      %1443 = vmatpush.msra.mxu0 0.0
      %1444 = vmatpush.msra.mxu0 0.0
      %1445 = vmatpush.msra.mxu0 0.0
      %1446 = vmatpush.msra.mxu0 %v1428
      %1447 = vmatpush.msra.mxu0 %v1427
      %1448 = vmatpush.msra.mxu0 %v1426
      %1449 = vmatpush.msra.mxu0 %v1425
      %1450 = vmatmul.f32.gmra.mxu0 %v831
      %v1451 = vpop.f32.mrf.mxu0
      %v1452 = vadd.f32 %v1432, %v1451
      %1453 = vmatmul.f32.gmra.mxu0 %v834
      %v1454 = vpop.f32.mrf.mxu0
      %v1455 = vadd.f32 %v1432, %v1454
      %1456 = vdwg.mxu0
      %s1457 = scalar_lea.vmem %s761, 64
      %v1458 = vld [vmem:[%s1457] sm:$0xff]
      %v1459 = vld [vmem:[%s1457 + $0x8] sm:$0xff]
      %v1460 = vld [vmem:[%s1457 + $0x10] sm:$0xff]
      %v1461 = vld [vmem:[%s1457 + $0x18] sm:$0xff]
      %s1462 = scalar_lea.vmem %s773, 2
      %v1463 = vld [vmem:[%s1462] sm:$0x1]
      %v1465 = vperm.slane %v1463, 0
      %1467 = vmatpush.msra.mxu0 0.0
      %1468 = vmatpush.msra.mxu0 0.0
      %1469 = vmatpush.msra.mxu0 0.0
      %1470 = vmatpush.msra.mxu0 0.0
      %1471 = vmatpush.msra.mxu0 0.0
      %1472 = vmatpush.msra.mxu0 0.0
      %1473 = vmatpush.msra.mxu0 0.0
      %1474 = vmatpush.msra.mxu0 0.0
      %1475 = vmatpush.msra.mxu0 0.0
      %1476 = vmatpush.msra.mxu0 0.0
      %1477 = vmatpush.msra.mxu0 0.0
      %1478 = vmatpush.msra.mxu0 0.0
      %1479 = vmatpush.msra.mxu0 %v1461
      %1480 = vmatpush.msra.mxu0 %v1460
      %1481 = vmatpush.msra.mxu0 %v1459
      %1482 = vmatpush.msra.mxu0 %v1458
      %1483 = vmatmul.f32.gmra.mxu0 %v831
      %v1484 = vpop.f32.mrf.mxu0
      %v1485 = vadd.f32 %v1465, %v1484
      %1486 = vmatmul.f32.gmra.mxu0 %v834
      %v1487 = vpop.f32.mrf.mxu0
      %v1488 = vadd.f32 %v1465, %v1487
      %1489 = vdwg.mxu0
      %v1491 = vsel %vm921, %v1419, 0
      %v1494 = vsel %vm921, %v1452, 0
      %1496 = vmatpush.xpose.msra.mxu0 0.0
      %1497 = vmatpush.xpose.msra.mxu0 0.0
      %1498 = vmatpush.xpose.msra.mxu0 0.0
      %1499 = vmatpush.xpose.msra.mxu0 0.0
      %1500 = vmatpush.xpose.msra.mxu0 0.0
      %1501 = vmatpush.xpose.msra.mxu0 0.0
      %1502 = vmatpush.xpose.msra.mxu0 0.0
      %1503 = vmatpush.xpose.msra.mxu0 0.0
      %1504 = vmatpush.xpose.msra.mxu0 0.0
      %1505 = vmatpush.xpose.msra.mxu0 0.0
      %1506 = vmatpush.xpose.msra.mxu0 0.0
      %1507 = vmatpush.xpose.msra.mxu0 0.0
      %1508 = vmatpush.xpose.msra.mxu0 0.0
      %1509 = vmatpush.xpose.msra.mxu0 0.0
      %1510 = vmatpush.xpose.msra.mxu0 0.0
      %1511 = vmatpush.xpose.msra.mxu0 %v1494
      %1512 = vmatmul.f32.gmra.mxu0 %v1491
      %v1513 = vpop.f32.mrf.mxu0
      %v1514 = vadd.f32 0.0, %v1513
      %1515 = vdwg.mxu0
      %v1516 = vmul.f32 %v1514, 0.35355338
      %v1517 = vadd.f32 %v1516, %v951
      %v1518 = vsel %vm921, %v1517, -inf
      %1519 = vmax.xlane.f32.xlu0 %v1518
      %v1520 = vpop.xlane.xlu0 %1519
      %v1521 = vsub.f32 %v1517, %v1520
      %v1522 = vmul.f32 %v1521, 1.442695
      %v1523 = vpow.pop %v1522
      %v1524 = vsel %vm921, %v1523, 0.0
      %1525 = vadd.xlane.f32.xlu0 %v1524
      %v1526 = vpop.xlane.xlu0 %1525
      %v1527 = vrcp.pop %v1526
      %v1528 = vmul.f32 %v1526, %v1527
      %v1529 = vsub.f32 1.0, %v1528
      %v1530 = vmul.f32 %v1527, %v1529
      %v1531 = vadd.f32 %v1527, %v1530
      %vm1532 = vweird.f32 %v1526
      %vm1533 = vweird.f32 %v1527
      %vm1534 = vmor %vm1532, %vm1533
      %v1535 = vsel %vm1534, %v1527, %v1531
      %v1536 = vand.u32 2147483647, %v1526
      %vm1537 = vcmp.eq.f32.partialorder %v1536, 8.507059e+37
      %v1538 = vand.u32 %v1526, 2147483648
      %v1539 = vor.u32 1.1754944e-38, %v1538
      %v1540 = vsel %vm1537, %v1539, %v1535
      %v1541 = vmul.f32 %v1523, %v1540
      %v1543 = vsel %vm921, %v1541, 0
      %1545 = vmatpush.msra.mxu0 0.0
      %1546 = vmatpush.msra.mxu0 0.0
      %1547 = vmatpush.msra.mxu0 0.0
      %1548 = vmatpush.msra.mxu0 0.0
      %1549 = vmatpush.msra.mxu0 0.0
      %1550 = vmatpush.msra.mxu0 0.0
      %1551 = vmatpush.msra.mxu0 0.0
      %1552 = vmatpush.msra.mxu0 0.0
      %1553 = vmatpush.msra.mxu0 0.0
      %1554 = vmatpush.msra.mxu0 0.0
      %1555 = vmatpush.msra.mxu0 0.0
      %1556 = vmatpush.msra.mxu0 0.0
      %1557 = vmatpush.msra.mxu0 0.0
      %1558 = vmatpush.msra.mxu0 0.0
      %1559 = vmatpush.msra.mxu0 0.0
      %1560 = vmatpush.msra.mxu0 %v1485
      %1561 = vmatmul.f32.gmra.mxu0 %v1543
      %v1562 = vpop.f32.mrf.mxu0
      %v1563 = vadd.f32 0.0, %v1562
      %1564 = vdwg.mxu0
      %v1566 = vsel %vm921, %v1422, 0
      %v1569 = vsel %vm921, %v1455, 0
      %1571 = vmatpush.xpose.msra.mxu0 0.0
      %1572 = vmatpush.xpose.msra.mxu0 0.0
      %1573 = vmatpush.xpose.msra.mxu0 0.0
      %1574 = vmatpush.xpose.msra.mxu0 0.0
      %1575 = vmatpush.xpose.msra.mxu0 0.0
      %1576 = vmatpush.xpose.msra.mxu0 0.0
      %1577 = vmatpush.xpose.msra.mxu0 0.0
      %1578 = vmatpush.xpose.msra.mxu0 0.0
      %1579 = vmatpush.xpose.msra.mxu0 0.0
      %1580 = vmatpush.xpose.msra.mxu0 0.0
      %1581 = vmatpush.xpose.msra.mxu0 0.0
      %1582 = vmatpush.xpose.msra.mxu0 0.0
      %1583 = vmatpush.xpose.msra.mxu0 0.0
      %1584 = vmatpush.xpose.msra.mxu0 0.0
      %1585 = vmatpush.xpose.msra.mxu0 0.0
      %1586 = vmatpush.xpose.msra.mxu0 %v1569
      %1587 = vmatmul.f32.gmra.mxu0 %v1566
      %v1588 = vpop.f32.mrf.mxu0
      %v1589 = vadd.f32 0.0, %v1588
      %1590 = vdwg.mxu0
      %v1591 = vmul.f32 %v1589, 0.35355338
      %v1592 = vadd.f32 %v1591, %v1031
      %v1593 = vsel %vm921, %v1592, -inf
      %1594 = vmax.xlane.f32.xlu0 %v1593
      %v1595 = vpop.xlane.xlu0 %1594
      %v1596 = vsub.f32 %v1592, %v1595
      %v1597 = vmul.f32 %v1596, 1.442695
      %v1598 = vpow.pop %v1597
      %v1599 = vsel %vm921, %v1598, 0.0
      %1600 = vadd.xlane.f32.xlu0 %v1599
      %v1601 = vpop.xlane.xlu0 %1600
      %v1602 = vrcp.pop %v1601
      %v1603 = vmul.f32 %v1601, %v1602
      %v1604 = vsub.f32 1.0, %v1603
      %v1605 = vmul.f32 %v1602, %v1604
      %v1606 = vadd.f32 %v1602, %v1605
      %vm1607 = vweird.f32 %v1601
      %vm1608 = vweird.f32 %v1602
      %vm1609 = vmor %vm1607, %vm1608
      %v1610 = vsel %vm1609, %v1602, %v1606
      %v1611 = vand.u32 2147483647, %v1601
      %vm1612 = vcmp.eq.f32.partialorder %v1611, 8.507059e+37
      %v1613 = vand.u32 %v1601, 2147483648
      %v1614 = vor.u32 1.1754944e-38, %v1613
      %v1615 = vsel %vm1612, %v1614, %v1610
      %v1616 = vmul.f32 %v1598, %v1615
      %v1618 = vsel %vm921, %v1616, 0
      %1620 = vmatpush.msra.mxu0 0.0
      %1621 = vmatpush.msra.mxu0 0.0
      %1622 = vmatpush.msra.mxu0 0.0
      %1623 = vmatpush.msra.mxu0 0.0
      %1624 = vmatpush.msra.mxu0 0.0
      %1625 = vmatpush.msra.mxu0 0.0
      %1626 = vmatpush.msra.mxu0 0.0
      %1627 = vmatpush.msra.mxu0 0.0
      %1628 = vmatpush.msra.mxu0 0.0
      %1629 = vmatpush.msra.mxu0 0.0
      %1630 = vmatpush.msra.mxu0 0.0
      %1631 = vmatpush.msra.mxu0 0.0
      %1632 = vmatpush.msra.mxu0 0.0
      %1633 = vmatpush.msra.mxu0 0.0
      %1634 = vmatpush.msra.mxu0 0.0
      %1635 = vmatpush.msra.mxu0 %v1488
      %1636 = vmatmul.f32.gmra.mxu0 %v1618
      %v1637 = vpop.f32.mrf.mxu0
      %v1638 = vadd.f32 0.0, %v1637
      %1639 = vdwg.mxu0
      %s1640 = scalar_lea.vmem %s778, 16
      %v1641 = vld [vmem:[%s1640] sm:$0xff]
      %v1643 = vsel %vm921, %v1563, 0
      %v1646 = vsel %vm921, %v1638, 0
      %1648 = vmatpush.msra.mxu0 0.0
      %1649 = vmatpush.msra.mxu0 0.0
      %1650 = vmatpush.msra.mxu0 0.0
      %1651 = vmatpush.msra.mxu0 0.0
      %1652 = vmatpush.msra.mxu0 0.0
      %1653 = vmatpush.msra.mxu0 0.0
      %1654 = vmatpush.msra.mxu0 0.0
      %1655 = vmatpush.msra.mxu0 0.0
      %1656 = vmatpush.msra.mxu0 0.0
      %1657 = vmatpush.msra.mxu0 0.0
      %1658 = vmatpush.msra.mxu0 0.0
      %1659 = vmatpush.msra.mxu0 0.0
      %1660 = vmatpush.msra.mxu0 0.0
      %1661 = vmatpush.msra.mxu0 0.0
      %1662 = vmatpush.msra.mxu0 0.0
      %1663 = vmatpush.msra.mxu0 %v1641
      %1664 = vmatmul.f32.gmra.mxu0 %v1643
      %v1665 = vpop.f32.mrf.mxu0
      %v1666 = vadd.f32 0.0, %v1665
      %1667 = vmatmul.f32.gmra.mxu0 %v1646
      %v1668 = vpop.f32.mrf.mxu0
      %v1669 = vadd.f32 0.0, %v1668
      %1670 = vdwg.mxu0
      %v1671 = vadd.f32 %v1386, %v1666
      %v1672 = vadd.f32 %v1389, %v1669
      %s1673 = scalar_lea.vmem %s751, 96
      %v1674 = vld [vmem:[%s1673] sm:$0xff]
      %v1675 = vld [vmem:[%s1673 + $0x8] sm:$0xff]
      %v1676 = vld [vmem:[%s1673 + $0x10] sm:$0xff]
      %v1677 = vld [vmem:[%s1673 + $0x18] sm:$0xff]
      %s1678 = scalar_lea.vmem %s765, 3
      %v1679 = vld [vmem:[%s1678] sm:$0x1]
      %v1681 = vperm.slane %v1679, 0
      %1683 = vmatpush.msra.mxu0 0.0
      %1684 = vmatpush.msra.mxu0 0.0
      %1685 = vmatpush.msra.mxu0 0.0
      %1686 = vmatpush.msra.mxu0 0.0
      %1687 = vmatpush.msra.mxu0 0.0
      %1688 = vmatpush.msra.mxu0 0.0
      %1689 = vmatpush.msra.mxu0 0.0
      %1690 = vmatpush.msra.mxu0 0.0
      %1691 = vmatpush.msra.mxu0 0.0
      %1692 = vmatpush.msra.mxu0 0.0
      %1693 = vmatpush.msra.mxu0 0.0
      %1694 = vmatpush.msra.mxu0 0.0
      %1695 = vmatpush.msra.mxu0 %v1677
      %1696 = vmatpush.msra.mxu0 %v1676
      %1697 = vmatpush.msra.mxu0 %v1675
      %1698 = vmatpush.msra.mxu0 %v1674
      %1699 = vmatmul.f32.gmra.mxu0 %v831
      %v1700 = vpop.f32.mrf.mxu0
      %v1701 = vadd.f32 %v1681, %v1700
      %1702 = vmatmul.f32.gmra.mxu0 %v834
      %v1703 = vpop.f32.mrf.mxu0
      %v1704 = vadd.f32 %v1681, %v1703
      %1705 = vdwg.mxu0
      %s1706 = scalar_lea.vmem %s756, 96
      %v1707 = vld [vmem:[%s1706] sm:$0xff]
      %v1708 = vld [vmem:[%s1706 + $0x8] sm:$0xff]
      %v1709 = vld [vmem:[%s1706 + $0x10] sm:$0xff]
      %v1710 = vld [vmem:[%s1706 + $0x18] sm:$0xff]
      %s1711 = scalar_lea.vmem %s769, 3
      %v1712 = vld [vmem:[%s1711] sm:$0x1]
      %v1714 = vperm.slane %v1712, 0
      %1716 = vmatpush.msra.mxu0 0.0
      %1717 = vmatpush.msra.mxu0 0.0
      %1718 = vmatpush.msra.mxu0 0.0
      %1719 = vmatpush.msra.mxu0 0.0
      %1720 = vmatpush.msra.mxu0 0.0
      %1721 = vmatpush.msra.mxu0 0.0
      %1722 = vmatpush.msra.mxu0 0.0
      %1723 = vmatpush.msra.mxu0 0.0
      %1724 = vmatpush.msra.mxu0 0.0
      %1725 = vmatpush.msra.mxu0 0.0
      %1726 = vmatpush.msra.mxu0 0.0
      %1727 = vmatpush.msra.mxu0 0.0
      %1728 = vmatpush.msra.mxu0 %v1710
      %1729 = vmatpush.msra.mxu0 %v1709
      %1730 = vmatpush.msra.mxu0 %v1708
      %1731 = vmatpush.msra.mxu0 %v1707
      %1732 = vmatmul.f32.gmra.mxu0 %v831
      %v1733 = vpop.f32.mrf.mxu0
      %v1734 = vadd.f32 %v1714, %v1733
      %1735 = vmatmul.f32.gmra.mxu0 %v834
      %v1736 = vpop.f32.mrf.mxu0
      %v1737 = vadd.f32 %v1714, %v1736
      %1738 = vdwg.mxu0
      %s1739 = scalar_lea.vmem %s761, 96
      %v1740 = vld [vmem:[%s1739] sm:$0xff]
      %v1741 = vld [vmem:[%s1739 + $0x8] sm:$0xff]
      %v1742 = vld [vmem:[%s1739 + $0x10] sm:$0xff]
      %v1743 = vld [vmem:[%s1739 + $0x18] sm:$0xff]
      %s1744 = scalar_lea.vmem %s773, 3
      %v1745 = vld [vmem:[%s1744] sm:$0x1]
      %v1747 = vperm.slane %v1745, 0
      %1749 = vmatpush.msra.mxu0 0.0
      %1750 = vmatpush.msra.mxu0 0.0
      %1751 = vmatpush.msra.mxu0 0.0
      %1752 = vmatpush.msra.mxu0 0.0
      %1753 = vmatpush.msra.mxu0 0.0
      %1754 = vmatpush.msra.mxu0 0.0
      %1755 = vmatpush.msra.mxu0 0.0
      %1756 = vmatpush.msra.mxu0 0.0
      %1757 = vmatpush.msra.mxu0 0.0
      %1758 = vmatpush.msra.mxu0 0.0
      %1759 = vmatpush.msra.mxu0 0.0
      %1760 = vmatpush.msra.mxu0 0.0
      %1761 = vmatpush.msra.mxu0 %v1743
      %1762 = vmatpush.msra.mxu0 %v1742
      %1763 = vmatpush.msra.mxu0 %v1741
      %1764 = vmatpush.msra.mxu0 %v1740
      %1765 = vmatmul.f32.gmra.mxu0 %v831
      %v1766 = vpop.f32.mrf.mxu0
      %v1767 = vadd.f32 %v1747, %v1766
      %1768 = vmatmul.f32.gmra.mxu0 %v834
      %v1769 = vpop.f32.mrf.mxu0
      %v1770 = vadd.f32 %v1747, %v1769
      %1771 = vdwg.mxu0
      %v1773 = vsel %vm921, %v1701, 0
      %v1776 = vsel %vm921, %v1734, 0
      %1778 = vmatpush.xpose.msra.mxu0 0.0
      %1779 = vmatpush.xpose.msra.mxu0 0.0
      %1780 = vmatpush.xpose.msra.mxu0 0.0
      %1781 = vmatpush.xpose.msra.mxu0 0.0
      %1782 = vmatpush.xpose.msra.mxu0 0.0
      %1783 = vmatpush.xpose.msra.mxu0 0.0
      %1784 = vmatpush.xpose.msra.mxu0 0.0
      %1785 = vmatpush.xpose.msra.mxu0 0.0
      %1786 = vmatpush.xpose.msra.mxu0 0.0
      %1787 = vmatpush.xpose.msra.mxu0 0.0
      %1788 = vmatpush.xpose.msra.mxu0 0.0
      %1789 = vmatpush.xpose.msra.mxu0 0.0
      %1790 = vmatpush.xpose.msra.mxu0 0.0
      %1791 = vmatpush.xpose.msra.mxu0 0.0
      %1792 = vmatpush.xpose.msra.mxu0 0.0
      %1793 = vmatpush.xpose.msra.mxu0 %v1776
      %1794 = vmatmul.f32.gmra.mxu0 %v1773
      %v1795 = vpop.f32.mrf.mxu0
      %v1796 = vadd.f32 0.0, %v1795
      %1797 = vdwg.mxu0
      %v1798 = vmul.f32 %v1796, 0.35355338
      %v1799 = vadd.f32 %v1798, %v951
      %v1800 = vsel %vm921, %v1799, -inf
      %1801 = vmax.xlane.f32.xlu0 %v1800
      %v1802 = vpop.xlane.xlu0 %1801
      %v1803 = vsub.f32 %v1799, %v1802
      %v1804 = vmul.f32 %v1803, 1.442695
      %v1805 = vpow.pop %v1804
      %v1806 = vsel %vm921, %v1805, 0.0
      %1807 = vadd.xlane.f32.xlu0 %v1806
      %v1808 = vpop.xlane.xlu0 %1807
      %v1809 = vrcp.pop %v1808
      %v1810 = vmul.f32 %v1808, %v1809
      %v1811 = vsub.f32 1.0, %v1810
      %v1812 = vmul.f32 %v1809, %v1811
      %v1813 = vadd.f32 %v1809, %v1812
      %vm1814 = vweird.f32 %v1808
      %vm1815 = vweird.f32 %v1809
      %vm1816 = vmor %vm1814, %vm1815
      %v1817 = vsel %vm1816, %v1809, %v1813
      %v1818 = vand.u32 2147483647, %v1808
      %vm1819 = vcmp.eq.f32.partialorder %v1818, 8.507059e+37
      %v1820 = vand.u32 %v1808, 2147483648
      %v1821 = vor.u32 1.1754944e-38, %v1820
      %v1822 = vsel %vm1819, %v1821, %v1817
      %v1823 = vmul.f32 %v1805, %v1822
      %v1825 = vsel %vm921, %v1823, 0
      %1827 = vmatpush.msra.mxu0 0.0
      %1828 = vmatpush.msra.mxu0 0.0
      %1829 = vmatpush.msra.mxu0 0.0
      %1830 = vmatpush.msra.mxu0 0.0
      %1831 = vmatpush.msra.mxu0 0.0
      %1832 = vmatpush.msra.mxu0 0.0
      %1833 = vmatpush.msra.mxu0 0.0
      %1834 = vmatpush.msra.mxu0 0.0
      %1835 = vmatpush.msra.mxu0 0.0
      %1836 = vmatpush.msra.mxu0 0.0
      %1837 = vmatpush.msra.mxu0 0.0
      %1838 = vmatpush.msra.mxu0 0.0
      %1839 = vmatpush.msra.mxu0 0.0
      %1840 = vmatpush.msra.mxu0 0.0
      %1841 = vmatpush.msra.mxu0 0.0
      %1842 = vmatpush.msra.mxu0 %v1767
      %1843 = vmatmul.f32.gmra.mxu0 %v1825
      %v1844 = vpop.f32.mrf.mxu0
      %v1845 = vadd.f32 0.0, %v1844
      %1846 = vdwg.mxu0
      %v1848 = vsel %vm921, %v1704, 0
      %v1851 = vsel %vm921, %v1737, 0
      %1853 = vmatpush.xpose.msra.mxu0 0.0
      %1854 = vmatpush.xpose.msra.mxu0 0.0
      %1855 = vmatpush.xpose.msra.mxu0 0.0
      %1856 = vmatpush.xpose.msra.mxu0 0.0
      %1857 = vmatpush.xpose.msra.mxu0 0.0
      %1858 = vmatpush.xpose.msra.mxu0 0.0
      %1859 = vmatpush.xpose.msra.mxu0 0.0
      %1860 = vmatpush.xpose.msra.mxu0 0.0
      %1861 = vmatpush.xpose.msra.mxu0 0.0
      %1862 = vmatpush.xpose.msra.mxu0 0.0
      %1863 = vmatpush.xpose.msra.mxu0 0.0
      %1864 = vmatpush.xpose.msra.mxu0 0.0
      %1865 = vmatpush.xpose.msra.mxu0 0.0
      %1866 = vmatpush.xpose.msra.mxu0 0.0
      %1867 = vmatpush.xpose.msra.mxu0 0.0
      %1868 = vmatpush.xpose.msra.mxu0 %v1851
      %1869 = vmatmul.f32.gmra.mxu0 %v1848
      %v1870 = vpop.f32.mrf.mxu0
      %v1871 = vadd.f32 0.0, %v1870
      %1872 = vdwg.mxu0
      %v1873 = vmul.f32 %v1871, 0.35355338
      %v1874 = vadd.f32 %v1873, %v1031
      %v1875 = vsel %vm921, %v1874, -inf
      %1876 = vmax.xlane.f32.xlu0 %v1875
      %v1877 = vpop.xlane.xlu0 %1876
      %v1878 = vsub.f32 %v1874, %v1877
      %v1879 = vmul.f32 %v1878, 1.442695
      %v1880 = vpow.pop %v1879
      %v1881 = vsel %vm921, %v1880, 0.0
      %1882 = vadd.xlane.f32.xlu0 %v1881
      %v1883 = vpop.xlane.xlu0 %1882
      %v1884 = vrcp.pop %v1883
      %v1885 = vmul.f32 %v1883, %v1884
      %v1886 = vsub.f32 1.0, %v1885
      %v1887 = vmul.f32 %v1884, %v1886
      %v1888 = vadd.f32 %v1884, %v1887
      %vm1889 = vweird.f32 %v1883
      %vm1890 = vweird.f32 %v1884
      %vm1891 = vmor %vm1889, %vm1890
      %v1892 = vsel %vm1891, %v1884, %v1888
      %v1893 = vand.u32 2147483647, %v1883
      %vm1894 = vcmp.eq.f32.partialorder %v1893, 8.507059e+37
      %v1895 = vand.u32 %v1883, 2147483648
      %v1896 = vor.u32 1.1754944e-38, %v1895
      %v1897 = vsel %vm1894, %v1896, %v1892
      %v1898 = vmul.f32 %v1880, %v1897
      %v1900 = vsel %vm921, %v1898, 0
      %1902 = vmatpush.msra.mxu0 0.0
      %1903 = vmatpush.msra.mxu0 0.0
      %1904 = vmatpush.msra.mxu0 0.0
      %1905 = vmatpush.msra.mxu0 0.0
      %1906 = vmatpush.msra.mxu0 0.0
      %1907 = vmatpush.msra.mxu0 0.0
      %1908 = vmatpush.msra.mxu0 0.0
      %1909 = vmatpush.msra.mxu0 0.0
      %1910 = vmatpush.msra.mxu0 0.0
      %1911 = vmatpush.msra.mxu0 0.0
      %1912 = vmatpush.msra.mxu0 0.0
      %1913 = vmatpush.msra.mxu0 0.0
      %1914 = vmatpush.msra.mxu0 0.0
      %1915 = vmatpush.msra.mxu0 0.0
      %1916 = vmatpush.msra.mxu0 0.0
      %1917 = vmatpush.msra.mxu0 %v1770
      %1918 = vmatmul.f32.gmra.mxu0 %v1900
      %v1919 = vpop.f32.mrf.mxu0
      %v1920 = vadd.f32 0.0, %v1919
      %1921 = vdwg.mxu0
      %s1922 = scalar_lea.vmem %s778, 24
      %v1923 = vld [vmem:[%s1922] sm:$0xff]
      %v1925 = vsel %vm921, %v1845, 0
      %v1928 = vsel %vm921, %v1920, 0
      %1930 = vmatpush.msra.mxu0 0.0
      %1931 = vmatpush.msra.mxu0 0.0
      %1932 = vmatpush.msra.mxu0 0.0
      %1933 = vmatpush.msra.mxu0 0.0
      %1934 = vmatpush.msra.mxu0 0.0
      %1935 = vmatpush.msra.mxu0 0.0
      %1936 = vmatpush.msra.mxu0 0.0
      %1937 = vmatpush.msra.mxu0 0.0
      %1938 = vmatpush.msra.mxu0 0.0
      %1939 = vmatpush.msra.mxu0 0.0
      %1940 = vmatpush.msra.mxu0 0.0
      %1941 = vmatpush.msra.mxu0 0.0
      %1942 = vmatpush.msra.mxu0 0.0
      %1943 = vmatpush.msra.mxu0 0.0
      %1944 = vmatpush.msra.mxu0 0.0
      %1945 = vmatpush.msra.mxu0 %v1923
      %1946 = vmatmul.f32.gmra.mxu0 %v1925
      %v1947 = vpop.f32.mrf.mxu0
      %v1948 = vadd.f32 0.0, %v1947
      %1949 = vmatmul.f32.gmra.mxu0 %v1928
      %v1950 = vpop.f32.mrf.mxu0
      %v1951 = vadd.f32 0.0, %v1950
      %1952 = vdwg.mxu0
      %v1953 = vadd.f32 %v1671, %v1948
      %v1954 = vadd.f32 %v1672, %v1951
      %v1955 = vld [vmem:[%s781] sm:$0x1]
      %v1957 = vperm.slane %v1955, 0
      %v1959 = vadd.f32 %v1953, %v1957
      %v1960 = vadd.f32 %v1954, %v1957
      %v1961 = vadd.f32 %v819, %v1959
      %v1962 = vadd.f32 %v820, %v1960
      %v1963 = vld [vmem:[%s784] sm:$0x1]
      %v1964 = vld [vmem:[%s787] sm:$0x1]
      %v1965 = vsel %vm829, %v1961, 0.0
      %1966 = vadd.xlane.f32.xlu0 %v1965
      %v1967 = vpop.xlane.xlu0 %1966
      %v1968 = vsel %vm829, %v1962, 0.0
      %1969 = vadd.xlane.f32.xlu0 %v1968
      %v1970 = vpop.xlane.xlu0 %1969
      %v1971 = vrcp.pop 32.0
      %v1972 = vmul.f32 32.0, %v1971
      %v1973 = vsub.f32 1.0, %v1972
      %v1974 = vmul.f32 %v1971, %v1973
      %v1975 = vadd.f32 %v1971, %v1974
      %vm1976 = vweird.f32 %v1971
      %v1977 = vsel %vm1976, %v1971, %v1975
      %v1978 = vmul.f32 %v1967, %v1977
      %v1979 = vmul.f32 %v1970, %v1977
      %v1980 = vsub.f32 %v1961, %v1978
      %v1981 = vsub.f32 %v1962, %v1979
      %v1982 = vmul.f32 %v1980, %v1980
      %v1983 = vmul.f32 %v1981, %v1981
      %v1984 = vsel %vm829, %v1982, 0.0
      %1985 = vadd.xlane.f32.xlu0 %v1984
      %v1986 = vpop.xlane.xlu0 %1985
      %v1987 = vsel %vm829, %v1983, 0.0
      %1988 = vadd.xlane.f32.xlu0 %v1987
      %v1989 = vpop.xlane.xlu0 %1988
      %v1990 = vmul.f32 %v1986, %v1977
      %v1991 = vmul.f32 %v1989, %v1977
      %v1992 = vadd.f32 %v1990, 1e-12
      %v1993 = vadd.f32 %v1991, 1e-12
      %v1994 = vrsqrt.pop %v1992
      %v1995 = vmul.f32 %v1994, %v1992
      %v1996 = vmul.f32 %v1995, %v1994
      %v1997 = vmul.f32 0.5, %v1996
      %v1998 = vsub.f32 1.5, %v1997
      %v1999 = vmul.f32 %v1994, %v1998
      %vm2000 = vweird.f32 %v1992
      %vm2001 = vweird.f32 %v1994
      %vm2002 = vmor %vm2000, %vm2001
      %v2003 = vsel %vm2002, %v1994, %v1999
      %v2004 = vrsqrt.pop %v1993
      %v2005 = vmul.f32 %v2004, %v1993
      %v2006 = vmul.f32 %v2005, %v2004
      %v2007 = vmul.f32 0.5, %v2006
      %v2008 = vsub.f32 1.5, %v2007
      %v2009 = vmul.f32 %v2004, %v2008
      %vm2010 = vweird.f32 %v1993
      %vm2011 = vweird.f32 %v2004
      %vm2012 = vmor %vm2010, %vm2011
      %v2013 = vsel %vm2012, %v2004, %v2009
      %v2014 = vmul.f32 %v1980, %v2003
      %v2015 = vmul.f32 %v1981, %v2013
      %v2017 = vperm.slane %v1963, 0
      %v2019 = vmul.f32 %v2014, %v2017
      %v2020 = vmul.f32 %v2015, %v2017
      %v2022 = vperm.slane %v1964, 0
      %v2024 = vadd.f32 %v2019, %v2022
      %v2025 = vadd.f32 %v2020, %v2022
      %v2026 = vld [vmem:[%s792] sm:$0xff]
      %v2027 = vld [vmem:[%s792 + $0x8] sm:$0xff]
      %v2028 = vld [vmem:[%s792 + $0x10] sm:$0xff]
      %v2029 = vld [vmem:[%s792 + $0x18] sm:$0xff]
      %v2030 = vld [vmem:[%s795] sm:$0x1]
      %v2032 = vperm.slane %v2030, 0
      %v2035 = vsel %vm829, %v2024, 0
      %v2038 = vsel %vm829, %v2025, 0
      %2040 = vmatpush.msra.mxu0 0.0
      %2041 = vmatpush.msra.mxu0 0.0
      %2042 = vmatpush.msra.mxu0 0.0
      %2043 = vmatpush.msra.mxu0 0.0
      %2044 = vmatpush.msra.mxu0 0.0
      %2045 = vmatpush.msra.mxu0 0.0
      %2046 = vmatpush.msra.mxu0 0.0
      %2047 = vmatpush.msra.mxu0 0.0
      %2048 = vmatpush.msra.mxu0 0.0
      %2049 = vmatpush.msra.mxu0 0.0
      %2050 = vmatpush.msra.mxu0 0.0
      %2051 = vmatpush.msra.mxu0 0.0
      %2052 = vmatpush.msra.mxu0 %v2029
      %2053 = vmatpush.msra.mxu0 %v2028
      %2054 = vmatpush.msra.mxu0 %v2027
      %2055 = vmatpush.msra.mxu0 %v2026
      %2056 = vmatmul.f32.gmra.mxu0 %v2035
      %v2057 = vpop.f32.mrf.mxu0
      %v2058 = vadd.f32 %v2032, %v2057
      %2059 = vmatmul.f32.gmra.mxu0 %v2038
      %v2060 = vpop.f32.mrf.mxu0
      %v2061 = vadd.f32 %v2032, %v2060
      %2062 = vdwg.mxu0
      %v2063 = vmul.f32 %v2058, %v2058
      %v2064 = vmul.f32 %v2061, %v2061
      %v2065 = vmul.f32 %v2058, %v2063
      %v2066 = vmul.f32 %v2061, %v2064
      %v2067 = vmul.f32 %v2065, 0.044715
      %v2068 = vmul.f32 %v2066, 0.044715
      %v2069 = vadd.f32 %v2058, %v2067
      %v2070 = vadd.f32 %v2061, %v2068
      %v2071 = vmul.f32 %v2069, 0.7978846
      %v2072 = vmul.f32 %v2070, 0.7978846
      %v2073 = vtanh.pop %v2071
      %v2074 = vtanh.pop %v2072
      %v2075 = vadd.f32 %v2073, 1.0
      %v2076 = vadd.f32 %v2074, 1.0
      %v2077 = vmul.f32 %v2075, 0.5
      %v2078 = vmul.f32 %v2076, 0.5
      %v2079 = vmul.f32 %v2058, %v2077
      %v2080 = vmul.f32 %v2061, %v2078
      %v2081 = vld [vmem:[%s800] sm:$0xff]
      %v2082 = vld [vmem:[%s800 + $0x8] sm:$0xff]
      %v2083 = vld [vmem:[%s800 + $0x10] sm:$0xff]
      %v2084 = vld [vmem:[%s800 + $0x18] sm:$0xff]
      %v2085 = vld [vmem:[%s800 + $0x20] sm:$0xff]
      %v2086 = vld [vmem:[%s800 + $0x28] sm:$0xff]
      %v2087 = vld [vmem:[%s800 + $0x30] sm:$0xff]
      %v2088 = vld [vmem:[%s800 + $0x38] sm:$0xff]
      %v2089 = vld [vmem:[%s803] sm:$0x1]
      %v2091 = vperm.slane %v2089, 0
      %vm2093 = vcmask 523264
      %v2095 = vsel %vm2093, %v2079, 0
      %v2098 = vsel %vm2093, %v2080, 0
      %2100 = vmatpush.msra.mxu0 0.0
      %2101 = vmatpush.msra.mxu0 0.0
      %2102 = vmatpush.msra.mxu0 0.0
      %2103 = vmatpush.msra.mxu0 0.0
      %2104 = vmatpush.msra.mxu0 0.0
      %2105 = vmatpush.msra.mxu0 0.0
      %2106 = vmatpush.msra.mxu0 0.0
      %2107 = vmatpush.msra.mxu0 0.0
      %2108 = vmatpush.msra.mxu0 %v2088
      %2109 = vmatpush.msra.mxu0 %v2087
      %2110 = vmatpush.msra.mxu0 %v2086
      %2111 = vmatpush.msra.mxu0 %v2085
      %2112 = vmatpush.msra.mxu0 %v2084
      %2113 = vmatpush.msra.mxu0 %v2083
      %2114 = vmatpush.msra.mxu0 %v2082
      %2115 = vmatpush.msra.mxu0 %v2081
      %2116 = vmatmul.f32.gmra.mxu0 %v2095
      %v2117 = vpop.f32.mrf.mxu0
      %v2118 = vadd.f32 %v2091, %v2117
      %2119 = vmatmul.f32.gmra.mxu0 %v2098
      %v2120 = vpop.f32.mrf.mxu0
      %v2121 = vadd.f32 %v2091, %v2120
      %2122 = vdwg.mxu0
      %v2123 = vadd.f32 %v2024, %v2118
      %v2124 = vadd.f32 %v2025, %v2121
      %v2125 = vld [vmem:[%s806] sm:$0x1]
      %v2126 = vld [vmem:[%s809] sm:$0x1]
      %v2127 = vsel %vm829, %v2123, 0.0
      %2128 = vadd.xlane.f32.xlu0 %v2127
      %v2129 = vpop.xlane.xlu0 %2128
      %v2130 = vsel %vm829, %v2124, 0.0
      %2131 = vadd.xlane.f32.xlu0 %v2130
      %v2132 = vpop.xlane.xlu0 %2131
      %v2133 = vmul.f32 %v2129, %v1977
      %v2134 = vmul.f32 %v2132, %v1977
      %v2135 = vsub.f32 %v2123, %v2133
      %v2136 = vsub.f32 %v2124, %v2134
      %v2137 = vmul.f32 %v2135, %v2135
      %v2138 = vmul.f32 %v2136, %v2136
      %v2139 = vsel %vm829, %v2137, 0.0
      %2140 = vadd.xlane.f32.xlu0 %v2139
      %v2141 = vpop.xlane.xlu0 %2140
      %v2142 = vsel %vm829, %v2138, 0.0
      %2143 = vadd.xlane.f32.xlu0 %v2142
      %v2144 = vpop.xlane.xlu0 %2143
      %v2145 = vmul.f32 %v2141, %v1977
      %v2146 = vmul.f32 %v2144, %v1977
      %v2147 = vadd.f32 %v2145, 1e-12
      %v2148 = vadd.f32 %v2146, 1e-12
      %v2149 = vrsqrt.pop %v2147
      %v2150 = vmul.f32 %v2149, %v2147
      %v2151 = vmul.f32 %v2150, %v2149
      %v2152 = vmul.f32 0.5, %v2151
      %v2153 = vsub.f32 1.5, %v2152
      %v2154 = vmul.f32 %v2149, %v2153
      %vm2155 = vweird.f32 %v2147
      %vm2156 = vweird.f32 %v2149
      %vm2157 = vmor %vm2155, %vm2156
      %v2158 = vsel %vm2157, %v2149, %v2154
      %v2159 = vrsqrt.pop %v2148
      %v2160 = vmul.f32 %v2159, %v2148
      %v2161 = vmul.f32 %v2160, %v2159
      %v2162 = vmul.f32 0.5, %v2161
      %v2163 = vsub.f32 1.5, %v2162
      %v2164 = vmul.f32 %v2159, %v2163
      %vm2165 = vweird.f32 %v2148
      %vm2166 = vweird.f32 %v2159
      %vm2167 = vmor %vm2165, %vm2166
      %v2168 = vsel %vm2167, %v2159, %v2164
      %v2169 = vmul.f32 %v2135, %v2158
      %v2170 = vmul.f32 %v2136, %v2168
      %v2172 = vperm.slane %v2125, 0
      %v2174 = vmul.f32 %v2169, %v2172
      %v2175 = vmul.f32 %v2170, %v2172
      %v2177 = vperm.slane %v2126, 0
      %v2179 = vadd.f32 %v2174, %v2177
      %v2180 = vadd.f32 %v2175, %v2177
      %2181 = vst.msk [vmem:[%s18] sm:$0xff] %vm829, %v2179
      %2182 = vst.msk [vmem:[%s18 + $0x8] sm:$0xff] %vm829, %v2180
      // Predicated region
      $region97: #{trippy_forward.3} parent=91 // pred_check
        %p2183 = pneg %p500
      $region98: #{trippy_forward.3} parent=91 // pred_check_branch
        %2185 = sbr.rel (%p2183) target = $region100
      $region99: #{trippy_forward.3} parent=91 // pred_region
        _
      $region100: #{trippy_forward.3} parent=91 // pred_fallthru
        _
      // Predicated region
      $region101: #{trippy_forward.3} parent=91 // pred_check
        %p2186 = pneg %p500
      $region102: #{trippy_forward.3} parent=91 // pred_check_branch
        %2188 = sbr.rel (%p2186) target = $region104
      $region103: #{trippy_forward.3} parent=91 // pred_region
        _
      $region104: #{trippy_forward.3} parent=91 // pred_fallthru
        _
    $region92: #{trippy_forward.3} parent=5 // pred_fallthru
      _
    %p2189 = scmp.le.s32.totalorder 2, %s24
    // Predicated region
    $region105: #{trippy_forward.3} parent=5 // pred_check
      %p2190 = pneg %p2189
    $region106: #{trippy_forward.3} parent=5 // pred_check_branch
      %2192 = sbr.rel (%p2190) target = $region108
    $region107: #{trippy_forward.3} parent=5 // pred_region
      %s2193 = ssub.s32 %s24, 2
    $region108: #{trippy_forward.3} parent=5 // pred_fallthru
      _
  $region6: #{trippy_forward.3} parent=0 // loop_footer
    %s28 = sadd.s32 1, %s24
  $region7: #{trippy_forward.3} parent=0 // loop_footer_branch
    %23 = sbr.rel target = $region3
  $region8: #{trippy_forward.3} parent=0 // loop_exit
    _

</llo_original>
